<compile_context>
chip_gen: v7x
topology: tpu7x:2x2x1
jax: 0.10.0
libtpu: 0.0.40
codegen_flags: <defaults>
</compile_context>

<pallas_src>
import math

import jax
import jax.numpy as jnp
from jax.experimental import pallas as pl
from jax.experimental.pallas import tpu as pltpu

_MM_DTYPE = jnp.bfloat16   # MXU operand dtype (accumulation stays f32)


# ---------------------------------------------------------------------------
# Fused kernel factory.
#
# Packed weight layout (built in init_lstm_params):
#   wx1 : (Din, 8H)  cols [0:4H] fwd gates (i|f|g|o), [4H:8H] bwd gates
#   wh1 : (H,   8H)  same column layout (recurrent weights)
#   wx2 : (2H,  8H)  rows [0:H] multiply layer-1 fwd output, [H:2H] bwd output
#   wh2 : (H,   8H)
#   b1, b2 : (1, 8H)  (b_ih + b_hh) per direction (zeros at init)
#   w_out : (2H, P), b_out : (1, P)
# g-gate columns ([2H:3H] of each 4H block) are pre-scaled by 2 so the kernel
# evaluates tanh(g) as 2*sigmoid(2g)-1 with a single lane-dense sigmoid.
# ---------------------------------------------------------------------------
def _make_fused_lstm_kernel(T, B, H):
    H2, H4 = 2 * H, 4 * H
    B2 = 2 * B

    def mm(a, b):
        return jnp.dot(a.astype(_MM_DTYPE), b.astype(_MM_DTYPE),
                       preferred_element_type=jnp.float32)

    def kernel(x_ref, wx1_ref, wh1_ref, b1_ref, wx2_ref, wh2_ref, b2_ref,
               wo_ref, bo_ref, o_ref, xg_scr, h1f_scr, h1b_scr):
        # g-gate lane mask, hoisted once and shared by both layers.
        lane = jax.lax.broadcasted_iota(jnp.int32, (B2, H4), 1)
        g_mask = (lane >= H2) & (lane < 3 * H)

        def recurrence(wh_packed, consume):
            """Serial time loop of one bidirectional layer (static unroll).

            Reads hoisted gate pre-activations from xg_scr ((T*B, 8H); cols
            [0:4H] fwd, [4H:8H] bwd) and carries the (2B, H) hidden/cell state
            (rows [0:B] fwd, [B:2B] bwd).  consume(t, tb, h) sees each new h.
            """
            whf = wh_packed[:, :H4]            # vreg-aligned lane slices
            whb = wh_packed[:, H4:]
            h = jnp.zeros((B2, H), jnp.float32)
            c = jnp.zeros((B2, H), jnp.float32)
            for t in range(T):
                tb = T - 1 - t
                gf = xg_scr[t * B:(t + 1) * B, :H4] + mm(h[:B], whf)
                gb = xg_scr[tb * B:(tb + 1) * B, H4:] + mm(h[B:], whb)
                gates = jnp.concatenate([gf, gb], axis=0)          # (2B, 4H)
                # Single lane-dense sigmoid; tanh for the g gate recovered as
                # 2*sigmoid(2g)-1 (g columns pre-scaled by 2 at pack time).
                s = jax.nn.sigmoid(gates)
                act = jnp.where(g_mask, 2.0 * s - 1.0, s)
                i_g = act[:, 0 * H:1 * H]
                f_g = act[:, 1 * H:2 * H]
                g_g = act[:, 2 * H:3 * H]
                o_g = act[:, 3 * H:4 * H]
                c = f_g * c + i_g * g_g
                h = o_g * jnp.tanh(c)
                consume(t, tb, h)

        # ---- layer 1: hoisted input projection (one matmul for all T steps,
        #      both directions, bias folded in), then the serial recurrence ----
        xg_scr[...] = mm(x_ref[...], wx1_ref[...]) + b1_ref[...]

        def keep_l1(t, tb, h):
            h1f_scr[t * B:(t + 1) * B, :] = h[:B]      # fwd output at time t
            h1b_scr[tb * B:(tb + 1) * B, :] = h[B:]    # bwd output at time tb

        recurrence(wh1_ref[...], keep_l1)

        # ---- layer 2: hoisted input projection from the stacked layer-1
        #      outputs (no per-step concatenation); xg_scr is reused ----
        # TODO(synk): inter-layer dropout (p=0.1) is identity in eval mode.
        wx2 = wx2_ref[...]
        xg_scr[...] = (mm(h1f_scr[...], wx2[:H, :]) +
                       mm(h1b_scr[...], wx2[H:, :]) + b2_ref[...])

        # ---- layer-2 recurrence with the head sum fused into the loop:
        #      sum_t (y_t @ W + b) = (sum_t y_t) @ W + T*b, then / 60 ----
        acc = [jnp.zeros((B2, H), jnp.float32)]

        def keep_l2(t, tb, h):
            acc[0] = acc[0] + h

        recurrence(wh2_ref[...], keep_l2)

        wo = wo_ref[...]
        proj = mm(acc[0][:B], wo[:H, :]) + mm(acc[0][B:], wo[H:, :])
        # /60 is the reference module's fixed constant (independent of T).
        o_ref[...] = ((proj + T * bo_ref[...]) / 60.0).astype(o_ref.dtype)

    return kernel


# ---------------------------------------------------------------------------
# Full forward pass: x (N, L, input_size) batch_first -> (N, 1, pre_len)
# ---------------------------------------------------------------------------
def lstm_model_forward(params, x, *, hidden_size):
    H = hidden_size
    N, L, Din = x.shape
    P = params["b_out"].shape[1]
    B = ((N + 7) // 8) * 8          # pad batch to a sublane multiple
    TB = L * B

    # Time-major, batch-padded, flattened to (T*B, Din).  Padded batch rows
    # never mix with real rows (the batch is a pure data-parallel axis) and
    # are sliced off at the end, so their contents are irrelevant.
    x_tm = jnp.transpose(x, (1, 0, 2)).astype(jnp.float32)       # (L, N, Din)
    x_tm = jnp.pad(x_tm, ((0, 0), (0, B - N), (0, 0)))           # (L, B, Din)
    x_flat = x_tm.reshape(TB, Din)

    kernel = _make_fused_lstm_kernel(L, B, H)
    vmem = pl.BlockSpec(memory_space=pltpu.MemorySpace.VMEM)
    # Everything is tiny -> single no-grid invocation, all operands VMEM
    # resident.  (If T/B/Din grow, move to a T-chunked grid with carried state
    # and set pltpu.CompilerParams(vmem_limit_bytes=...); v7x has half the
    # VMEM of v5e/v6e.)
    out_pad = pl.pallas_call(
        kernel,
        out_shape=jax.ShapeDtypeStruct((B, P), jnp.float32),
        in_specs=[vmem] * 9,
        out_specs=vmem,
        scratch_shapes=[
            pltpu.VMEM((TB, 8 * H), jnp.float32),   # hoisted gate pre-activations
            pltpu.VMEM((TB, H), jnp.float32),       # layer-1 fwd outputs
            pltpu.VMEM((TB, H), jnp.float32),       # layer-1 bwd outputs
        ],
    )(x_flat, params["wx1"], params["wh1"], params["b1"],
      params["wx2"], params["wh2"], params["b2"],
      params["w_out"], params["b_out"])

    return out_pad[:N, None, :]                                   # (N, 1, P)


# ---------------------------------------------------------------------------
# Parameter init (xavier_uniform weights, zero biases, mirroring the module's
# init_weights) + packing into the fused-kernel layout.
# ---------------------------------------------------------------------------
def _xavier_uniform(key, out_dim, in_dim):
    a = math.sqrt(6.0 / (in_dim + out_dim))
    return jax.random.uniform(key, (out_dim, in_dim), jnp.float32, -a, a)


def _scale_g_cols(w_t, H):
    # Scale the g-gate columns ([2H:3H] of a transposed (in, 4H) block) by 2
    # so tanh(g) = 2*sigmoid(2g)-1 needs only one in-kernel sigmoid pass.
    scale = jnp.ones((4 * H,), jnp.float32).at[2 * H:3 * H].set(2.0)
    return w_t * scale


def init_lstm_params(key, input_size, hidden_size, num_layers, pre_len):
    assert num_layers == 2, "fused kernel is specialized to 2 layers"
    H = hidden_size
    keys = iter(jax.random.split(key, 4 * num_layers + 1))
    raw, packed = {}, {}
    for layer in range(num_layers):
        din = input_size if layer == 0 else 2 * H
        wx_dirs, wh_dirs = [], []
        for suffix in ("", "_rev"):                 # forward, backward
            w_ih = _xavier_uniform(next(keys), 4 * H, din)      # (4H, din)
            w_hh = _xavier_uniform(next(keys), 4 * H, H)        # (4H, H)
            raw[f"w_ih_l{layer}{suffix}"] = w_ih
            raw[f"w_hh_l{layer}{suffix}"] = w_hh
            wx_dirs.append(_scale_g_cols(jnp.transpose(w_ih), H))
            wh_dirs.append(_scale_g_cols(jnp.transpose(w_hh), H))
        packed[f"wx{layer + 1}"] = jnp.concatenate(wx_dirs, 1).astype(_MM_DTYPE)
        packed[f"wh{layer + 1}"] = jnp.concatenate(wh_dirs, 1).astype(_MM_DTYPE)
        # b_ih + b_hh = 0 at init; a loaded non-zero bias would also need the
        # x2 scaling on its g-gate columns.
        packed[f"b{layer + 1}"] = jnp.zeros((1, 8 * H), jnp.float32)
    w_out = _xavier_uniform(next(keys), pre_len, 2 * H)         # (P, 2H)
    raw["w_out"] = w_out
    raw["b_out"] = jnp.zeros((pre_len,), jnp.float32)
    packed["w_out"] = jnp.transpose(w_out).astype(_MM_DTYPE)    # (2H, P)
    packed["b_out"] = jnp.zeros((1, pre_len), jnp.float32)
    return raw, packed


# ---------------------------------------------------------------------------
# Pure-JAX f32 reference of the PyTorch module's forward (eval mode).
# ---------------------------------------------------------------------------
def lstm_reference(raw, x, *, hidden_size):
    H = hidden_size

    def run_dir(xs, w_ih, w_hh, reverse):
        T_, N_ = xs.shape[0], xs.shape[1]
        h = jnp.zeros((N_, H), jnp.float32)
        c = jnp.zeros((N_, H), jnp.float32)
        out = [None] * T_
        order = range(T_ - 1, -1, -1) if reverse else range(T_)
        for t in order:
            z = xs[t] @ w_ih.T + h @ w_hh.T
            i = jax.nn.sigmoid(z[:, 0 * H:1 * H])
            f = jax.nn.sigmoid(z[:, 1 * H:2 * H])
            g = jnp.tanh(z[:, 2 * H:3 * H])
            o = jax.nn.sigmoid(z[:, 3 * H:4 * H])
            c = f * c + i * g
            h = o * jnp.tanh(c)
            out[t] = h
        return jnp.stack(out, axis=0)

    y = jnp.transpose(x, (1, 0, 2)).astype(jnp.float32)          # (L, N, Din)
    for layer in range(2):
        fwd = run_dir(y, raw[f"w_ih_l{layer}"], raw[f"w_hh_l{layer}"], False)
        bwd = run_dir(y, raw[f"w_ih_l{layer}_rev"], raw[f"w_hh_l{layer}_rev"], True)
        y = jnp.concatenate([fwd, bwd], axis=-1)                 # (L, N, 2H)
    proj = y @ raw["w_out"].T + raw["b_out"]                     # (L, N, P)
    out = jnp.sum(proj, axis=0, keepdims=True) / 60.0            # (1, N, P)
    return jnp.transpose(out, (1, 0, 2))                         # (N, 1, P)


if __name__ == "__main__":
    # Small deterministic example consistent with the module:
    #   nn.LSTM(input_size=seq_len, hidden_size, num_layers=2, bidirectional).
    batch = 2
    time_steps = 6          # L (batch_first sequence axis)
    seq_len = 8             # input_size of the LSTM
    hidden_size = 64
    num_layers = 2
    pre_len = 4

    key = jax.random.PRNGKey(0)
    k_param, k_x = jax.random.split(key)

    raw, params = init_lstm_params(k_param, seq_len, hidden_size, num_layers,
                                   pre_len)
    x = jax.random.normal(k_x, (batch, time_steps, seq_len), jnp.float32)

    out = jax.block_until_ready(lstm_model_forward(params, x,
                                                   hidden_size=hidden_size))
    assert out.shape == (batch, 1, pre_len), out.shape

    # Correctness check vs the f32 reference (kernel uses bf16 MXU operands,
    # so tolerance is loose).
    ref = jax.block_until_ready(lstm_reference(raw, x, hidden_size=hidden_size))
    max_err = float(jnp.max(jnp.abs(out - ref)))
    assert jnp.allclose(out, ref, rtol=5e-2, atol=5e-3), max_err
    print("KERNEL_OK")
</pallas_src>

<mosaic_0001>
module attributes {stable_mosaic.version = 11 : i64} {
  func.func @kernel(%arg0: memref<48x8xf32, #tpu.memory_space<vmem>>, %arg1: memref<8x512xbf16, #tpu.memory_space<vmem>>, %arg2: memref<64x512xbf16, #tpu.memory_space<vmem>>, %arg3: memref<1x512xf32, #tpu.memory_space<vmem>>, %arg4: memref<128x512xbf16, #tpu.memory_space<vmem>>, %arg5: memref<64x512xbf16, #tpu.memory_space<vmem>>, %arg6: memref<1x512xf32, #tpu.memory_space<vmem>>, %arg7: memref<128x4xbf16, #tpu.memory_space<vmem>>, %arg8: memref<1x4xf32, #tpu.memory_space<vmem>>, %arg9: memref<8x4xf32, #tpu.memory_space<vmem>>, %arg10: memref<48x512xf32, #tpu.memory_space<vmem>>, %arg11: memref<48x64xf32, #tpu.memory_space<vmem>>, %arg12: memref<48x64xf32, #tpu.memory_space<vmem>>) attributes {dimension_semantics = [], scalar_prefetch = 0 : i64, scratch_operands = 3 : i64, tpu.core_type = #tpu.core_type<tc>} {
    %0 = tpu.iota {dimensions = array<i32: 1>} : vector<16x256xi32>
    %c128_i32 = arith.constant 128 : i32
    %1 = vector.broadcast %c128_i32 : i32 to vector<16x256xi32>
    %2 = arith.cmpi sge, %0, %1 : vector<16x256xi32>
    %c192_i32 = arith.constant 192 : i32
    %3 = vector.broadcast %c192_i32 : i32 to vector<16x256xi32>
    %4 = arith.cmpi slt, %0, %3 : vector<16x256xi32>
    %5 = arith.andi %2, %4 : vector<16x256xi1>
    %c0 = arith.constant 0 : index
    %c0_0 = arith.constant 0 : index
    %6 = vector.load %arg0[%c0, %c0_0] : memref<48x8xf32, #tpu.memory_space<vmem>>, vector<48x8xf32>
    %c0_1 = arith.constant 0 : index
    %c0_2 = arith.constant 0 : index
    %7 = vector.load %arg1[%c0_1, %c0_2] : memref<8x512xbf16, #tpu.memory_space<vmem>>, vector<8x512xbf16>
    %8 = arith.truncf %6 : vector<48x8xf32> to vector<48x8xbf16>
    %cst = arith.constant dense<0.000000e+00> : vector<48x512xf32>
    %9 = tpu.matmul %8, %7, %cst {dimension_numbers = #tpu.dot_dimension_numbers<[1], [0], [0], [1], [0, 0, 1, 1], [], []>} : vector<48x8xbf16>, vector<8x512xbf16>, vector<48x512xf32> -> vector<48x512xf32>
    %c0_3 = arith.constant 0 : index
    %c0_4 = arith.constant 0 : index
    %10 = vector.load %arg3[%c0_3, %c0_4] : memref<1x512xf32, #tpu.memory_space<vmem>>, vector<1x512xf32>
    %11 = vector.broadcast %10 : vector<1x512xf32> to vector<48x512xf32>
    %12 = arith.addf %9, %11 : vector<48x512xf32>
    %c0_5 = arith.constant 0 : index
    %c0_6 = arith.constant 0 : index
    %13 = vector.load %arg10[%c0_5, %c0_6] : memref<48x512xf32, #tpu.memory_space<vmem>>, vector<48x512xf32>
    tpu.vector_store %arg10[%c0_5, %c0_6], %12 {strides = array<i32>} : memref<48x512xf32, #tpu.memory_space<vmem>>, vector<48x512xf32>,
    %c0_7 = arith.constant 0 : index
    %c0_8 = arith.constant 0 : index
    %14 = vector.load %arg2[%c0_7, %c0_8] : memref<64x512xbf16, #tpu.memory_space<vmem>>, vector<64x512xbf16>
    %15 = vector.extract_strided_slice %14 {offsets = [0, 0], sizes = [64, 256], strides = [1, 1]} : vector<64x512xbf16> to vector<64x256xbf16>
    %16 = vector.extract_strided_slice %14 {offsets = [0, 256], sizes = [64, 256], strides = [1, 1]} : vector<64x512xbf16> to vector<64x256xbf16>
    %cst_9 = arith.constant 0.000000e+00 : f32
    %17 = vector.broadcast %cst_9 : f32 to vector<16x64xf32>
    %cst_10 = arith.constant 0.000000e+00 : f32
    %18 = vector.broadcast %cst_10 : f32 to vector<16x64xf32>
    %c0_11 = arith.constant 0 : index
    %c0_12 = arith.constant 0 : index
    %19 = vector.load %arg10[%c0_11, %c0_12] : memref<48x512xf32, #tpu.memory_space<vmem>>, vector<8x256xf32>
    %20 = vector.extract_strided_slice %17 {offsets = [0, 0], sizes = [8, 64], strides = [1, 1]} : vector<16x64xf32> to vector<8x64xf32>
    %21 = arith.truncf %20 : vector<8x64xf32> to vector<8x64xbf16>
    %cst_13 = arith.constant dense<0.000000e+00> : vector<8x256xf32>
    %22 = tpu.matmul %21, %15, %cst_13 {dimension_numbers = #tpu.dot_dimension_numbers<[1], [0], [0], [1], [0, 0, 1, 1], [], []>} : vector<8x64xbf16>, vector<64x256xbf16>, vector<8x256xf32> -> vector<8x256xf32>
    %23 = arith.addf %19, %22 : vector<8x256xf32>
    %c40 = arith.constant 40 : index
    %c256 = arith.constant 256 : index
    %24 = vector.load %arg10[%c40, %c256] : memref<48x512xf32, #tpu.memory_space<vmem>>, vector<8x256xf32>
    %25 = vector.extract_strided_slice %17 {offsets = [8, 0], sizes = [8, 64], strides = [1, 1]} : vector<16x64xf32> to vector<8x64xf32>
    %26 = arith.truncf %25 : vector<8x64xf32> to vector<8x64xbf16>
    %cst_14 = arith.constant dense<0.000000e+00> : vector<8x256xf32>
    %27 = tpu.matmul %26, %16, %cst_14 {dimension_numbers = #tpu.dot_dimension_numbers<[1], [0], [0], [1], [0, 0, 1, 1], [], []>} : vector<8x64xbf16>, vector<64x256xbf16>, vector<8x256xf32> -> vector<8x256xf32>
    %28 = arith.addf %24, %27 : vector<8x256xf32>
    %29 = tpu.concatenate %23, %28 in 0 : vector<8x256xf32>, vector<8x256xf32> -> vector<16x256xf32>
    %30 = arith.negf %29 : vector<16x256xf32>
    %31 = math.exp %30 : vector<16x256xf32>
    %cst_15 = arith.constant 1.000000e+00 : f32
    %32 = vector.broadcast %cst_15 : f32 to vector<16x256xf32>
    %33 = arith.addf %32, %31 : vector<16x256xf32>
    %34 = arith.divf %32, %33 : vector<16x256xf32>
    %cst_16 = arith.constant 2.000000e+00 : f32
    %35 = vector.broadcast %cst_16 : f32 to vector<16x256xf32>
    %36 = arith.mulf %35, %34 : vector<16x256xf32>
    %cst_17 = arith.constant 1.000000e+00 : f32
    %37 = vector.broadcast %cst_17 : f32 to vector<16x256xf32>
    %38 = arith.subf %36, %37 : vector<16x256xf32>
    %39 = arith.select %5, %38, %34 : vector<16x256xi1>, vector<16x256xf32>
    %40 = vector.extract_strided_slice %39 {offsets = [0, 0], sizes = [16, 64], strides = [1, 1]} : vector<16x256xf32> to vector<16x64xf32>
    %41 = vector.extract_strided_slice %39 {offsets = [0, 64], sizes = [16, 64], strides = [1, 1]} : vector<16x256xf32> to vector<16x64xf32>
    %42 = vector.extract_strided_slice %39 {offsets = [0, 128], sizes = [16, 64], strides = [1, 1]} : vector<16x256xf32> to vector<16x64xf32>
    %43 = vector.extract_strided_slice %39 {offsets = [0, 192], sizes = [16, 64], strides = [1, 1]} : vector<16x256xf32> to vector<16x64xf32>
    %44 = arith.mulf %41, %18 : vector<16x64xf32>
    %45 = arith.mulf %40, %42 : vector<16x64xf32>
    %46 = arith.addf %44, %45 : vector<16x64xf32>
    %47 = math.tanh %46 : vector<16x64xf32>
    %48 = arith.mulf %43, %47 : vector<16x64xf32>
    %49 = vector.extract_strided_slice %48 {offsets = [0, 0], sizes = [8, 64], strides = [1, 1]} : vector<16x64xf32> to vector<8x64xf32>
    %c0_18 = arith.constant 0 : index
    %c0_19 = arith.constant 0 : index
    %50 = vector.load %arg11[%c0_18, %c0_19] : memref<48x64xf32, #tpu.memory_space<vmem>>, vector<8x64xf32>
    tpu.vector_store %arg11[%c0_18, %c0_19], %49 {strides = array<i32>} : memref<48x64xf32, #tpu.memory_space<vmem>>, vector<8x64xf32>,
    %51 = vector.extract_strided_slice %48 {offsets = [8, 0], sizes = [8, 64], strides = [1, 1]} : vector<16x64xf32> to vector<8x64xf32>
    %c40_20 = arith.constant 40 : index
    %c0_21 = arith.constant 0 : index
    %52 = vector.load %arg12[%c40_20, %c0_21] : memref<48x64xf32, #tpu.memory_space<vmem>>, vector<8x64xf32>
    tpu.vector_store %arg12[%c40_20, %c0_21], %51 {strides = array<i32>} : memref<48x64xf32, #tpu.memory_space<vmem>>, vector<8x64xf32>,
    %c8 = arith.constant 8 : index
    %c0_22 = arith.constant 0 : index
    %53 = vector.load %arg10[%c8, %c0_22] : memref<48x512xf32, #tpu.memory_space<vmem>>, vector<8x256xf32>
    %54 = vector.extract_strided_slice %48 {offsets = [0, 0], sizes = [8, 64], strides = [1, 1]} : vector<16x64xf32> to vector<8x64xf32>
    %55 = arith.truncf %54 : vector<8x64xf32> to vector<8x64xbf16>
    %cst_23 = arith.constant dense<0.000000e+00> : vector<8x256xf32>
    %56 = tpu.matmul %55, %15, %cst_23 {dimension_numbers = #tpu.dot_dimension_numbers<[1], [0], [0], [1], [0, 0, 1, 1], [], []>} : vector<8x64xbf16>, vector<64x256xbf16>, vector<8x256xf32> -> vector<8x256xf32>
    %57 = arith.addf %53, %56 : vector<8x256xf32>
    %c32 = arith.constant 32 : index
    %c256_24 = arith.constant 256 : index
    %58 = vector.load %arg10[%c32, %c256_24] : memref<48x512xf32, #tpu.memory_space<vmem>>, vector<8x256xf32>
    %59 = vector.extract_strided_slice %48 {offsets = [8, 0], sizes = [8, 64], strides = [1, 1]} : vector<16x64xf32> to vector<8x64xf32>
    %60 = arith.truncf %59 : vector<8x64xf32> to vector<8x64xbf16>
    %cst_25 = arith.constant dense<0.000000e+00> : vector<8x256xf32>
    %61 = tpu.matmul %60, %16, %cst_25 {dimension_numbers = #tpu.dot_dimension_numbers<[1], [0], [0], [1], [0, 0, 1, 1], [], []>} : vector<8x64xbf16>, vector<64x256xbf16>, vector<8x256xf32> -> vector<8x256xf32>
    %62 = arith.addf %58, %61 : vector<8x256xf32>
    %63 = tpu.concatenate %57, %62 in 0 : vector<8x256xf32>, vector<8x256xf32> -> vector<16x256xf32>
    %64 = arith.negf %63 : vector<16x256xf32>
    %65 = math.exp %64 : vector<16x256xf32>
    %cst_26 = arith.constant 1.000000e+00 : f32
    %66 = vector.broadcast %cst_26 : f32 to vector<16x256xf32>
    %67 = arith.addf %66, %65 : vector<16x256xf32>
    %68 = arith.divf %66, %67 : vector<16x256xf32>
    %cst_27 = arith.constant 2.000000e+00 : f32
    %69 = vector.broadcast %cst_27 : f32 to vector<16x256xf32>
    %70 = arith.mulf %69, %68 : vector<16x256xf32>
    %cst_28 = arith.constant 1.000000e+00 : f32
    %71 = vector.broadcast %cst_28 : f32 to vector<16x256xf32>
    %72 = arith.subf %70, %71 : vector<16x256xf32>
    %73 = arith.select %5, %72, %68 : vector<16x256xi1>, vector<16x256xf32>
    %74 = vector.extract_strided_slice %73 {offsets = [0, 0], sizes = [16, 64], strides = [1, 1]} : vector<16x256xf32> to vector<16x64xf32>
    %75 = vector.extract_strided_slice %73 {offsets = [0, 64], sizes = [16, 64], strides = [1, 1]} : vector<16x256xf32> to vector<16x64xf32>
    %76 = vector.extract_strided_slice %73 {offsets = [0, 128], sizes = [16, 64], strides = [1, 1]} : vector<16x256xf32> to vector<16x64xf32>
    %77 = vector.extract_strided_slice %73 {offsets = [0, 192], sizes = [16, 64], strides = [1, 1]} : vector<16x256xf32> to vector<16x64xf32>
    %78 = arith.mulf %75, %46 : vector<16x64xf32>
    %79 = arith.mulf %74, %76 : vector<16x64xf32>
    %80 = arith.addf %78, %79 : vector<16x64xf32>
    %81 = math.tanh %80 : vector<16x64xf32>
    %82 = arith.mulf %77, %81 : vector<16x64xf32>
    %83 = vector.extract_strided_slice %82 {offsets = [0, 0], sizes = [8, 64], strides = [1, 1]} : vector<16x64xf32> to vector<8x64xf32>
    %c8_29 = arith.constant 8 : index
    %c0_30 = arith.constant 0 : index
    %84 = vector.load %arg11[%c8_29, %c0_30] : memref<48x64xf32, #tpu.memory_space<vmem>>, vector<8x64xf32>
    tpu.vector_store %arg11[%c8_29, %c0_30], %83 {strides = array<i32>} : memref<48x64xf32, #tpu.memory_space<vmem>>, vector<8x64xf32>,
    %85 = vector.extract_strided_slice %82 {offsets = [8, 0], sizes = [8, 64], strides = [1, 1]} : vector<16x64xf32> to vector<8x64xf32>
    %c32_31 = arith.constant 32 : index
    %c0_32 = arith.constant 0 : index
    %86 = vector.load %arg12[%c32_31, %c0_32] : memref<48x64xf32, #tpu.memory_space<vmem>>, vector<8x64xf32>
    tpu.vector_store %arg12[%c32_31, %c0_32], %85 {strides = array<i32>} : memref<48x64xf32, #tpu.memory_space<vmem>>, vector<8x64xf32>,
    %c16 = arith.constant 16 : index
    %c0_33 = arith.constant 0 : index
    %87 = vector.load %arg10[%c16, %c0_33] : memref<48x512xf32, #tpu.memory_space<vmem>>, vector<8x256xf32>
    %88 = vector.extract_strided_slice %82 {offsets = [0, 0], sizes = [8, 64], strides = [1, 1]} : vector<16x64xf32> to vector<8x64xf32>
    %89 = arith.truncf %88 : vector<8x64xf32> to vector<8x64xbf16>
    %cst_34 = arith.constant dense<0.000000e+00> : vector<8x256xf32>
    %90 = tpu.matmul %89, %15, %cst_34 {dimension_numbers = #tpu.dot_dimension_numbers<[1], [0], [0], [1], [0, 0, 1, 1], [], []>} : vector<8x64xbf16>, vector<64x256xbf16>, vector<8x256xf32> -> vector<8x256xf32>
    %91 = arith.addf %87, %90 : vector<8x256xf32>
    %c24 = arith.constant 24 : index
    %c256_35 = arith.constant 256 : index
    %92 = vector.load %arg10[%c24, %c256_35] : memref<48x512xf32, #tpu.memory_space<vmem>>, vector<8x256xf32>
    %93 = vector.extract_strided_slice %82 {offsets = [8, 0], sizes = [8, 64], strides = [1, 1]} : vector<16x64xf32> to vector<8x64xf32>
    %94 = arith.truncf %93 : vector<8x64xf32> to vector<8x64xbf16>
    %cst_36 = arith.constant dense<0.000000e+00> : vector<8x256xf32>
    %95 = tpu.matmul %94, %16, %cst_36 {dimension_numbers = #tpu.dot_dimension_numbers<[1], [0], [0], [1], [0, 0, 1, 1], [], []>} : vector<8x64xbf16>, vector<64x256xbf16>, vector<8x256xf32> -> vector<8x256xf32>
    %96 = arith.addf %92, %95 : vector<8x256xf32>
    %97 = tpu.concatenate %91, %96 in 0 : vector<8x256xf32>, vector<8x256xf32> -> vector<16x256xf32>
    %98 = arith.negf %97 : vector<16x256xf32>
    %99 = math.exp %98 : vector<16x256xf32>
    %cst_37 = arith.constant 1.000000e+00 : f32
    %100 = vector.broadcast %cst_37 : f32 to vector<16x256xf32>
    %101 = arith.addf %100, %99 : vector<16x256xf32>
    %102 = arith.divf %100, %101 : vector<16x256xf32>
    %cst_38 = arith.constant 2.000000e+00 : f32
    %103 = vector.broadcast %cst_38 : f32 to vector<16x256xf32>
    %104 = arith.mulf %103, %102 : vector<16x256xf32>
    %cst_39 = arith.constant 1.000000e+00 : f32
    %105 = vector.broadcast %cst_39 : f32 to vector<16x256xf32>
    %106 = arith.subf %104, %105 : vector<16x256xf32>
    %107 = arith.select %5, %106, %102 : vector<16x256xi1>, vector<16x256xf32>
    %108 = vector.extract_strided_slice %107 {offsets = [0, 0], sizes = [16, 64], strides = [1, 1]} : vector<16x256xf32> to vector<16x64xf32>
    %109 = vector.extract_strided_slice %107 {offsets = [0, 64], sizes = [16, 64], strides = [1, 1]} : vector<16x256xf32> to vector<16x64xf32>
    %110 = vector.extract_strided_slice %107 {offsets = [0, 128], sizes = [16, 64], strides = [1, 1]} : vector<16x256xf32> to vector<16x64xf32>
    %111 = vector.extract_strided_slice %107 {offsets = [0, 192], sizes = [16, 64], strides = [1, 1]} : vector<16x256xf32> to vector<16x64xf32>
    %112 = arith.mulf %109, %80 : vector<16x64xf32>
    %113 = arith.mulf %108, %110 : vector<16x64xf32>
    %114 = arith.addf %112, %113 : vector<16x64xf32>
    %115 = math.tanh %114 : vector<16x64xf32>
    %116 = arith.mulf %111, %115 : vector<16x64xf32>
    %117 = vector.extract_strided_slice %116 {offsets = [0, 0], sizes = [8, 64], strides = [1, 1]} : vector<16x64xf32> to vector<8x64xf32>
    %c16_40 = arith.constant 16 : index
    %c0_41 = arith.constant 0 : index
    %118 = vector.load %arg11[%c16_40, %c0_41] : memref<48x64xf32, #tpu.memory_space<vmem>>, vector<8x64xf32>
    tpu.vector_store %arg11[%c16_40, %c0_41], %117 {strides = array<i32>} : memref<48x64xf32, #tpu.memory_space<vmem>>, vector<8x64xf32>,
    %119 = vector.extract_strided_slice %116 {offsets = [8, 0], sizes = [8, 64], strides = [1, 1]} : vector<16x64xf32> to vector<8x64xf32>
    %c24_42 = arith.constant 24 : index
    %c0_43 = arith.constant 0 : index
    %120 = vector.load %arg12[%c24_42, %c0_43] : memref<48x64xf32, #tpu.memory_space<vmem>>, vector<8x64xf32>
    tpu.vector_store %arg12[%c24_42, %c0_43], %119 {strides = array<i32>} : memref<48x64xf32, #tpu.memory_space<vmem>>, vector<8x64xf32>,
    %c24_44 = arith.constant 24 : index
    %c0_45 = arith.constant 0 : index
    %121 = vector.load %arg10[%c24_44, %c0_45] : memref<48x512xf32, #tpu.memory_space<vmem>>, vector<8x256xf32>
    %122 = vector.extract_strided_slice %116 {offsets = [0, 0], sizes = [8, 64], strides = [1, 1]} : vector<16x64xf32> to vector<8x64xf32>
    %123 = arith.truncf %122 : vector<8x64xf32> to vector<8x64xbf16>
    %cst_46 = arith.constant dense<0.000000e+00> : vector<8x256xf32>
    %124 = tpu.matmul %123, %15, %cst_46 {dimension_numbers = #tpu.dot_dimension_numbers<[1], [0], [0], [1], [0, 0, 1, 1], [], []>} : vector<8x64xbf16>, vector<64x256xbf16>, vector<8x256xf32> -> vector<8x256xf32>
    %125 = arith.addf %121, %124 : vector<8x256xf32>
    %c16_47 = arith.constant 16 : index
    %c256_48 = arith.constant 256 : index
    %126 = vector.load %arg10[%c16_47, %c256_48] : memref<48x512xf32, #tpu.memory_space<vmem>>, vector<8x256xf32>
    %127 = vector.extract_strided_slice %116 {offsets = [8, 0], sizes = [8, 64], strides = [1, 1]} : vector<16x64xf32> to vector<8x64xf32>
    %128 = arith.truncf %127 : vector<8x64xf32> to vector<8x64xbf16>
    %cst_49 = arith.constant dense<0.000000e+00> : vector<8x256xf32>
    %129 = tpu.matmul %128, %16, %cst_49 {dimension_numbers = #tpu.dot_dimension_numbers<[1], [0], [0], [1], [0, 0, 1, 1], [], []>} : vector<8x64xbf16>, vector<64x256xbf16>, vector<8x256xf32> -> vector<8x256xf32>
    %130 = arith.addf %126, %129 : vector<8x256xf32>
    %131 = tpu.concatenate %125, %130 in 0 : vector<8x256xf32>, vector<8x256xf32> -> vector<16x256xf32>
    %132 = arith.negf %131 : vector<16x256xf32>
    %133 = math.exp %132 : vector<16x256xf32>
    %cst_50 = arith.constant 1.000000e+00 : f32
    %134 = vector.broadcast %cst_50 : f32 to vector<16x256xf32>
    %135 = arith.addf %134, %133 : vector<16x256xf32>
    %136 = arith.divf %134, %135 : vector<16x256xf32>
    %cst_51 = arith.constant 2.000000e+00 : f32
    %137 = vector.broadcast %cst_51 : f32 to vector<16x256xf32>
    %138 = arith.mulf %137, %136 : vector<16x256xf32>
    %cst_52 = arith.constant 1.000000e+00 : f32
    %139 = vector.broadcast %cst_52 : f32 to vector<16x256xf32>
    %140 = arith.subf %138, %139 : vector<16x256xf32>
    %141 = arith.select %5, %140, %136 : vector<16x256xi1>, vector<16x256xf32>
    %142 = vector.extract_strided_slice %141 {offsets = [0, 0], sizes = [16, 64], strides = [1, 1]} : vector<16x256xf32> to vector<16x64xf32>
    %143 = vector.extract_strided_slice %141 {offsets = [0, 64], sizes = [16, 64], strides = [1, 1]} : vector<16x256xf32> to vector<16x64xf32>
    %144 = vector.extract_strided_slice %141 {offsets = [0, 128], sizes = [16, 64], strides = [1, 1]} : vector<16x256xf32> to vector<16x64xf32>
    %145 = vector.extract_strided_slice %141 {offsets = [0, 192], sizes = [16, 64], strides = [1, 1]} : vector<16x256xf32> to vector<16x64xf32>
    %146 = arith.mulf %143, %114 : vector<16x64xf32>
    %147 = arith.mulf %142, %144 : vector<16x64xf32>
    %148 = arith.addf %146, %147 : vector<16x64xf32>
    %149 = math.tanh %148 : vector<16x64xf32>
    %150 = arith.mulf %145, %149 : vector<16x64xf32>
    %151 = vector.extract_strided_slice %150 {offsets = [0, 0], sizes = [8, 64], strides = [1, 1]} : vector<16x64xf32> to vector<8x64xf32>
    %c24_53 = arith.constant 24 : index
    %c0_54 = arith.constant 0 : index
    %152 = vector.load %arg11[%c24_53, %c0_54] : memref<48x64xf32, #tpu.memory_space<vmem>>, vector<8x64xf32>
    tpu.vector_store %arg11[%c24_53, %c0_54], %151 {strides = array<i32>} : memref<48x64xf32, #tpu.memory_space<vmem>>, vector<8x64xf32>,
    %153 = vector.extract_strided_slice %150 {offsets = [8, 0], sizes = [8, 64], strides = [1, 1]} : vector<16x64xf32> to vector<8x64xf32>
    %c16_55 = arith.constant 16 : index
    %c0_56 = arith.constant 0 : index
    %154 = vector.load %arg12[%c16_55, %c0_56] : memref<48x64xf32, #tpu.memory_space<vmem>>, vector<8x64xf32>
    tpu.vector_store %arg12[%c16_55, %c0_56], %153 {strides = array<i32>} : memref<48x64xf32, #tpu.memory_space<vmem>>, vector<8x64xf32>,
    %c32_57 = arith.constant 32 : index
    %c0_58 = arith.constant 0 : index
    %155 = vector.load %arg10[%c32_57, %c0_58] : memref<48x512xf32, #tpu.memory_space<vmem>>, vector<8x256xf32>
    %156 = vector.extract_strided_slice %150 {offsets = [0, 0], sizes = [8, 64], strides = [1, 1]} : vector<16x64xf32> to vector<8x64xf32>
    %157 = arith.truncf %156 : vector<8x64xf32> to vector<8x64xbf16>
    %cst_59 = arith.constant dense<0.000000e+00> : vector<8x256xf32>
    %158 = tpu.matmul %157, %15, %cst_59 {dimension_numbers = #tpu.dot_dimension_numbers<[1], [0], [0], [1], [0, 0, 1, 1], [], []>} : vector<8x64xbf16>, vector<64x256xbf16>, vector<8x256xf32> -> vector<8x256xf32>
    %159 = arith.addf %155, %158 : vector<8x256xf32>
    %c8_60 = arith.constant 8 : index
    %c256_61 = arith.constant 256 : index
    %160 = vector.load %arg10[%c8_60, %c256_61] : memref<48x512xf32, #tpu.memory_space<vmem>>, vector<8x256xf32>
    %161 = vector.extract_strided_slice %150 {offsets = [8, 0], sizes = [8, 64], strides = [1, 1]} : vector<16x64xf32> to vector<8x64xf32>
    %162 = arith.truncf %161 : vector<8x64xf32> to vector<8x64xbf16>
    %cst_62 = arith.constant dense<0.000000e+00> : vector<8x256xf32>
    %163 = tpu.matmul %162, %16, %cst_62 {dimension_numbers = #tpu.dot_dimension_numbers<[1], [0], [0], [1], [0, 0, 1, 1], [], []>} : vector<8x64xbf16>, vector<64x256xbf16>, vector<8x256xf32> -> vector<8x256xf32>
    %164 = arith.addf %160, %163 : vector<8x256xf32>
    %165 = tpu.concatenate %159, %164 in 0 : vector<8x256xf32>, vector<8x256xf32> -> vector<16x256xf32>
    %166 = arith.negf %165 : vector<16x256xf32>
    %167 = math.exp %166 : vector<16x256xf32>
    %cst_63 = arith.constant 1.000000e+00 : f32
    %168 = vector.broadcast %cst_63 : f32 to vector<16x256xf32>
    %169 = arith.addf %168, %167 : vector<16x256xf32>
    %170 = arith.divf %168, %169 : vector<16x256xf32>
    %cst_64 = arith.constant 2.000000e+00 : f32
    %171 = vector.broadcast %cst_64 : f32 to vector<16x256xf32>
    %172 = arith.mulf %171, %170 : vector<16x256xf32>
    %cst_65 = arith.constant 1.000000e+00 : f32
    %173 = vector.broadcast %cst_65 : f32 to vector<16x256xf32>
    %174 = arith.subf %172, %173 : vector<16x256xf32>
    %175 = arith.select %5, %174, %170 : vector<16x256xi1>, vector<16x256xf32>
    %176 = vector.extract_strided_slice %175 {offsets = [0, 0], sizes = [16, 64], strides = [1, 1]} : vector<16x256xf32> to vector<16x64xf32>
    %177 = vector.extract_strided_slice %175 {offsets = [0, 64], sizes = [16, 64], strides = [1, 1]} : vector<16x256xf32> to vector<16x64xf32>
    %178 = vector.extract_strided_slice %175 {offsets = [0, 128], sizes = [16, 64], strides = [1, 1]} : vector<16x256xf32> to vector<16x64xf32>
    %179 = vector.extract_strided_slice %175 {offsets = [0, 192], sizes = [16, 64], strides = [1, 1]} : vector<16x256xf32> to vector<16x64xf32>
    %180 = arith.mulf %177, %148 : vector<16x64xf32>
    %181 = arith.mulf %176, %178 : vector<16x64xf32>
    %182 = arith.addf %180, %181 : vector<16x64xf32>
    %183 = math.tanh %182 : vector<16x64xf32>
    %184 = arith.mulf %179, %183 : vector<16x64xf32>
    %185 = vector.extract_strided_slice %184 {offsets = [0, 0], sizes = [8, 64], strides = [1, 1]} : vector<16x64xf32> to vector<8x64xf32>
    %c32_66 = arith.constant 32 : index
    %c0_67 = arith.constant 0 : index
    %186 = vector.load %arg11[%c32_66, %c0_67] : memref<48x64xf32, #tpu.memory_space<vmem>>, vector<8x64xf32>
    tpu.vector_store %arg11[%c32_66, %c0_67], %185 {strides = array<i32>} : memref<48x64xf32, #tpu.memory_space<vmem>>, vector<8x64xf32>,
    %187 = vector.extract_strided_slice %184 {offsets = [8, 0], sizes = [8, 64], strides = [1, 1]} : vector<16x64xf32> to vector<8x64xf32>
    %c8_68 = arith.constant 8 : index
    %c0_69 = arith.constant 0 : index
    %188 = vector.load %arg12[%c8_68, %c0_69] : memref<48x64xf32, #tpu.memory_space<vmem>>, vector<8x64xf32>
    tpu.vector_store %arg12[%c8_68, %c0_69], %187 {strides = array<i32>} : memref<48x64xf32, #tpu.memory_space<vmem>>, vector<8x64xf32>,
    %c40_70 = arith.constant 40 : index
    %c0_71 = arith.constant 0 : index
    %189 = vector.load %arg10[%c40_70, %c0_71] : memref<48x512xf32, #tpu.memory_space<vmem>>, vector<8x256xf32>
    %190 = vector.extract_strided_slice %184 {offsets = [0, 0], sizes = [8, 64], strides = [1, 1]} : vector<16x64xf32> to vector<8x64xf32>
    %191 = arith.truncf %190 : vector<8x64xf32> to vector<8x64xbf16>
    %cst_72 = arith.constant dense<0.000000e+00> : vector<8x256xf32>
    %192 = tpu.matmul %191, %15, %cst_72 {dimension_numbers = #tpu.dot_dimension_numbers<[1], [0], [0], [1], [0, 0, 1, 1], [], []>} : vector<8x64xbf16>, vector<64x256xbf16>, vector<8x256xf32> -> vector<8x256xf32>
    %193 = arith.addf %189, %192 : vector<8x256xf32>
    %c0_73 = arith.constant 0 : index
    %c256_74 = arith.constant 256 : index
    %194 = vector.load %arg10[%c0_73, %c256_74] : memref<48x512xf32, #tpu.memory_space<vmem>>, vector<8x256xf32>
    %195 = vector.extract_strided_slice %184 {offsets = [8, 0], sizes = [8, 64], strides = [1, 1]} : vector<16x64xf32> to vector<8x64xf32>
    %196 = arith.truncf %195 : vector<8x64xf32> to vector<8x64xbf16>
    %cst_75 = arith.constant dense<0.000000e+00> : vector<8x256xf32>
    %197 = tpu.matmul %196, %16, %cst_75 {dimension_numbers = #tpu.dot_dimension_numbers<[1], [0], [0], [1], [0, 0, 1, 1], [], []>} : vector<8x64xbf16>, vector<64x256xbf16>, vector<8x256xf32> -> vector<8x256xf32>
    %198 = arith.addf %194, %197 : vector<8x256xf32>
    %199 = tpu.concatenate %193, %198 in 0 : vector<8x256xf32>, vector<8x256xf32> -> vector<16x256xf32>
    %200 = arith.negf %199 : vector<16x256xf32>
    %201 = math.exp %200 : vector<16x256xf32>
    %cst_76 = arith.constant 1.000000e+00 : f32
    %202 = vector.broadcast %cst_76 : f32 to vector<16x256xf32>
    %203 = arith.addf %202, %201 : vector<16x256xf32>
    %204 = arith.divf %202, %203 : vector<16x256xf32>
    %cst_77 = arith.constant 2.000000e+00 : f32
    %205 = vector.broadcast %cst_77 : f32 to vector<16x256xf32>
    %206 = arith.mulf %205, %204 : vector<16x256xf32>
    %cst_78 = arith.constant 1.000000e+00 : f32
    %207 = vector.broadcast %cst_78 : f32 to vector<16x256xf32>
    %208 = arith.subf %206, %207 : vector<16x256xf32>
    %209 = arith.select %5, %208, %204 : vector<16x256xi1>, vector<16x256xf32>
    %210 = vector.extract_strided_slice %209 {offsets = [0, 0], sizes = [16, 64], strides = [1, 1]} : vector<16x256xf32> to vector<16x64xf32>
    %211 = vector.extract_strided_slice %209 {offsets = [0, 64], sizes = [16, 64], strides = [1, 1]} : vector<16x256xf32> to vector<16x64xf32>
    %212 = vector.extract_strided_slice %209 {offsets = [0, 128], sizes = [16, 64], strides = [1, 1]} : vector<16x256xf32> to vector<16x64xf32>
    %213 = vector.extract_strided_slice %209 {offsets = [0, 192], sizes = [16, 64], strides = [1, 1]} : vector<16x256xf32> to vector<16x64xf32>
    %214 = arith.mulf %211, %182 : vector<16x64xf32>
    %215 = arith.mulf %210, %212 : vector<16x64xf32>
    %216 = arith.addf %214, %215 : vector<16x64xf32>
    %217 = math.tanh %216 : vector<16x64xf32>
    %218 = arith.mulf %213, %217 : vector<16x64xf32>
    %219 = vector.extract_strided_slice %218 {offsets = [0, 0], sizes = [8, 64], strides = [1, 1]} : vector<16x64xf32> to vector<8x64xf32>
    %c40_79 = arith.constant 40 : index
    %c0_80 = arith.constant 0 : index
    %220 = vector.load %arg11[%c40_79, %c0_80] : memref<48x64xf32, #tpu.memory_space<vmem>>, vector<8x64xf32>
    tpu.vector_store %arg11[%c40_79, %c0_80], %219 {strides = array<i32>} : memref<48x64xf32, #tpu.memory_space<vmem>>, vector<8x64xf32>,
    %221 = vector.extract_strided_slice %218 {offsets = [8, 0], sizes = [8, 64], strides = [1, 1]} : vector<16x64xf32> to vector<8x64xf32>
    %c0_81 = arith.constant 0 : index
    %c0_82 = arith.constant 0 : index
    %222 = vector.load %arg12[%c0_81, %c0_82] : memref<48x64xf32, #tpu.memory_space<vmem>>, vector<8x64xf32>
    tpu.vector_store %arg12[%c0_81, %c0_82], %221 {strides = array<i32>} : memref<48x64xf32, #tpu.memory_space<vmem>>, vector<8x64xf32>,
    %c0_83 = arith.constant 0 : index
    %c0_84 = arith.constant 0 : index
    %223 = vector.load %arg4[%c0_83, %c0_84] : memref<128x512xbf16, #tpu.memory_space<vmem>>, vector<128x512xbf16>
    %c0_85 = arith.constant 0 : index
    %c0_86 = arith.constant 0 : index
    %224 = vector.load %arg11[%c0_85, %c0_86] : memref<48x64xf32, #tpu.memory_space<vmem>>, vector<48x64xf32>
    %225 = vector.extract_strided_slice %223 {offsets = [0, 0], sizes = [64, 512], strides = [1, 1]} : vector<128x512xbf16> to vector<64x512xbf16>
    %226 = arith.truncf %224 : vector<48x64xf32> to vector<48x64xbf16>
    %cst_87 = arith.constant dense<0.000000e+00> : vector<48x512xf32>
    %227 = tpu.matmul %226, %225, %cst_87 {dimension_numbers = #tpu.dot_dimension_numbers<[1], [0], [0], [1], [0, 0, 1, 1], [], []>} : vector<48x64xbf16>, vector<64x512xbf16>, vector<48x512xf32> -> vector<48x512xf32>
    %c0_88 = arith.constant 0 : index
    %c0_89 = arith.constant 0 : index
    %228 = vector.load %arg12[%c0_88, %c0_89] : memref<48x64xf32, #tpu.memory_space<vmem>>, vector<48x64xf32>
    %229 = vector.extract_strided_slice %223 {offsets = [64, 0], sizes = [64, 512], strides = [1, 1]} : vector<128x512xbf16> to vector<64x512xbf16>
    %230 = arith.truncf %228 : vector<48x64xf32> to vector<48x64xbf16>
    %cst_90 = arith.constant dense<0.000000e+00> : vector<48x512xf32>
    %231 = tpu.matmul %230, %229, %cst_90 {dimension_numbers = #tpu.dot_dimension_numbers<[1], [0], [0], [1], [0, 0, 1, 1], [], []>} : vector<48x64xbf16>, vector<64x512xbf16>, vector<48x512xf32> -> vector<48x512xf32>
    %232 = arith.addf %227, %231 : vector<48x512xf32>
    %c0_91 = arith.constant 0 : index
    %c0_92 = arith.constant 0 : index
    %233 = vector.load %arg6[%c0_91, %c0_92] : memref<1x512xf32, #tpu.memory_space<vmem>>, vector<1x512xf32>
    %234 = vector.broadcast %233 : vector<1x512xf32> to vector<48x512xf32>
    %235 = arith.addf %232, %234 : vector<48x512xf32>
    %c0_93 = arith.constant 0 : index
    %c0_94 = arith.constant 0 : index
    %236 = vector.load %arg10[%c0_93, %c0_94] : memref<48x512xf32, #tpu.memory_space<vmem>>, vector<48x512xf32>
    tpu.vector_store %arg10[%c0_93, %c0_94], %235 {strides = array<i32>} : memref<48x512xf32, #tpu.memory_space<vmem>>, vector<48x512xf32>,
    %cst_95 = arith.constant 0.000000e+00 : f32
    %237 = vector.broadcast %cst_95 : f32 to vector<16x64xf32>
    %c0_96 = arith.constant 0 : index
    %c0_97 = arith.constant 0 : index
    %238 = vector.load %arg5[%c0_96, %c0_97] : memref<64x512xbf16, #tpu.memory_space<vmem>>, vector<64x512xbf16>
    %239 = vector.extract_strided_slice %238 {offsets = [0, 0], sizes = [64, 256], strides = [1, 1]} : vector<64x512xbf16> to vector<64x256xbf16>
    %240 = vector.extract_strided_slice %238 {offsets = [0, 256], sizes = [64, 256], strides = [1, 1]} : vector<64x512xbf16> to vector<64x256xbf16>
    %cst_98 = arith.constant 0.000000e+00 : f32
    %241 = vector.broadcast %cst_98 : f32 to vector<16x64xf32>
    %cst_99 = arith.constant 0.000000e+00 : f32
    %242 = vector.broadcast %cst_99 : f32 to vector<16x64xf32>
    %c0_100 = arith.constant 0 : index
    %c0_101 = arith.constant 0 : index
    %243 = vector.load %arg10[%c0_100, %c0_101] : memref<48x512xf32, #tpu.memory_space<vmem>>, vector<8x256xf32>
    %244 = vector.extract_strided_slice %241 {offsets = [0, 0], sizes = [8, 64], strides = [1, 1]} : vector<16x64xf32> to vector<8x64xf32>
    %245 = arith.truncf %244 : vector<8x64xf32> to vector<8x64xbf16>
    %cst_102 = arith.constant dense<0.000000e+00> : vector<8x256xf32>
    %246 = tpu.matmul %245, %239, %cst_102 {dimension_numbers = #tpu.dot_dimension_numbers<[1], [0], [0], [1], [0, 0, 1, 1], [], []>} : vector<8x64xbf16>, vector<64x256xbf16>, vector<8x256xf32> -> vector<8x256xf32>
    %247 = arith.addf %243, %246 : vector<8x256xf32>
    %c40_103 = arith.constant 40 : index
    %c256_104 = arith.constant 256 : index
    %248 = vector.load %arg10[%c40_103, %c256_104] : memref<48x512xf32, #tpu.memory_space<vmem>>, vector<8x256xf32>
    %249 = vector.extract_strided_slice %241 {offsets = [8, 0], sizes = [8, 64], strides = [1, 1]} : vector<16x64xf32> to vector<8x64xf32>
    %250 = arith.truncf %249 : vector<8x64xf32> to vector<8x64xbf16>
    %cst_105 = arith.constant dense<0.000000e+00> : vector<8x256xf32>
    %251 = tpu.matmul %250, %240, %cst_105 {dimension_numbers = #tpu.dot_dimension_numbers<[1], [0], [0], [1], [0, 0, 1, 1], [], []>} : vector<8x64xbf16>, vector<64x256xbf16>, vector<8x256xf32> -> vector<8x256xf32>
    %252 = arith.addf %248, %251 : vector<8x256xf32>
    %253 = tpu.concatenate %247, %252 in 0 : vector<8x256xf32>, vector<8x256xf32> -> vector<16x256xf32>
    %254 = arith.negf %253 : vector<16x256xf32>
    %255 = math.exp %254 : vector<16x256xf32>
    %cst_106 = arith.constant 1.000000e+00 : f32
    %256 = vector.broadcast %cst_106 : f32 to vector<16x256xf32>
    %257 = arith.addf %256, %255 : vector<16x256xf32>
    %258 = arith.divf %256, %257 : vector<16x256xf32>
    %cst_107 = arith.constant 2.000000e+00 : f32
    %259 = vector.broadcast %cst_107 : f32 to vector<16x256xf32>
    %260 = arith.mulf %259, %258 : vector<16x256xf32>
    %cst_108 = arith.constant 1.000000e+00 : f32
    %261 = vector.broadcast %cst_108 : f32 to vector<16x256xf32>
    %262 = arith.subf %260, %261 : vector<16x256xf32>
    %263 = arith.select %5, %262, %258 : vector<16x256xi1>, vector<16x256xf32>
    %264 = vector.extract_strided_slice %263 {offsets = [0, 0], sizes = [16, 64], strides = [1, 1]} : vector<16x256xf32> to vector<16x64xf32>
    %265 = vector.extract_strided_slice %263 {offsets = [0, 64], sizes = [16, 64], strides = [1, 1]} : vector<16x256xf32> to vector<16x64xf32>
    %266 = vector.extract_strided_slice %263 {offsets = [0, 128], sizes = [16, 64], strides = [1, 1]} : vector<16x256xf32> to vector<16x64xf32>
    %267 = vector.extract_strided_slice %263 {offsets = [0, 192], sizes = [16, 64], strides = [1, 1]} : vector<16x256xf32> to vector<16x64xf32>
    %268 = arith.mulf %265, %242 : vector<16x64xf32>
    %269 = arith.mulf %264, %266 : vector<16x64xf32>
    %270 = arith.addf %268, %269 : vector<16x64xf32>
    %271 = math.tanh %270 : vector<16x64xf32>
    %272 = arith.mulf %267, %271 : vector<16x64xf32>
    %273 = arith.addf %237, %272 : vector<16x64xf32>
    %c8_109 = arith.constant 8 : index
    %c0_110 = arith.constant 0 : index
    %274 = vector.load %arg10[%c8_109, %c0_110] : memref<48x512xf32, #tpu.memory_space<vmem>>, vector<8x256xf32>
    %275 = vector.extract_strided_slice %272 {offsets = [0, 0], sizes = [8, 64], strides = [1, 1]} : vector<16x64xf32> to vector<8x64xf32>
    %276 = arith.truncf %275 : vector<8x64xf32> to vector<8x64xbf16>
    %cst_111 = arith.constant dense<0.000000e+00> : vector<8x256xf32>
    %277 = tpu.matmul %276, %239, %cst_111 {dimension_numbers = #tpu.dot_dimension_numbers<[1], [0], [0], [1], [0, 0, 1, 1], [], []>} : vector<8x64xbf16>, vector<64x256xbf16>, vector<8x256xf32> -> vector<8x256xf32>
    %278 = arith.addf %274, %277 : vector<8x256xf32>
    %c32_112 = arith.constant 32 : index
    %c256_113 = arith.constant 256 : index
    %279 = vector.load %arg10[%c32_112, %c256_113] : memref<48x512xf32, #tpu.memory_space<vmem>>, vector<8x256xf32>
    %280 = vector.extract_strided_slice %272 {offsets = [8, 0], sizes = [8, 64], strides = [1, 1]} : vector<16x64xf32> to vector<8x64xf32>
    %281 = arith.truncf %280 : vector<8x64xf32> to vector<8x64xbf16>
    %cst_114 = arith.constant dense<0.000000e+00> : vector<8x256xf32>
    %282 = tpu.matmul %281, %240, %cst_114 {dimension_numbers = #tpu.dot_dimension_numbers<[1], [0], [0], [1], [0, 0, 1, 1], [], []>} : vector<8x64xbf16>, vector<64x256xbf16>, vector<8x256xf32> -> vector<8x256xf32>
    %283 = arith.addf %279, %282 : vector<8x256xf32>
    %284 = tpu.concatenate %278, %283 in 0 : vector<8x256xf32>, vector<8x256xf32> -> vector<16x256xf32>
    %285 = arith.negf %284 : vector<16x256xf32>
    %286 = math.exp %285 : vector<16x256xf32>
    %cst_115 = arith.constant 1.000000e+00 : f32
    %287 = vector.broadcast %cst_115 : f32 to vector<16x256xf32>
    %288 = arith.addf %287, %286 : vector<16x256xf32>
    %289 = arith.divf %287, %288 : vector<16x256xf32>
    %cst_116 = arith.constant 2.000000e+00 : f32
    %290 = vector.broadcast %cst_116 : f32 to vector<16x256xf32>
    %291 = arith.mulf %290, %289 : vector<16x256xf32>
    %cst_117 = arith.constant 1.000000e+00 : f32
    %292 = vector.broadcast %cst_117 : f32 to vector<16x256xf32>
    %293 = arith.subf %291, %292 : vector<16x256xf32>
    %294 = arith.select %5, %293, %289 : vector<16x256xi1>, vector<16x256xf32>
    %295 = vector.extract_strided_slice %294 {offsets = [0, 0], sizes = [16, 64], strides = [1, 1]} : vector<16x256xf32> to vector<16x64xf32>
    %296 = vector.extract_strided_slice %294 {offsets = [0, 64], sizes = [16, 64], strides = [1, 1]} : vector<16x256xf32> to vector<16x64xf32>
    %297 = vector.extract_strided_slice %294 {offsets = [0, 128], sizes = [16, 64], strides = [1, 1]} : vector<16x256xf32> to vector<16x64xf32>
    %298 = vector.extract_strided_slice %294 {offsets = [0, 192], sizes = [16, 64], strides = [1, 1]} : vector<16x256xf32> to vector<16x64xf32>
    %299 = arith.mulf %296, %270 : vector<16x64xf32>
    %300 = arith.mulf %295, %297 : vector<16x64xf32>
    %301 = arith.addf %299, %300 : vector<16x64xf32>
    %302 = math.tanh %301 : vector<16x64xf32>
    %303 = arith.mulf %298, %302 : vector<16x64xf32>
    %304 = arith.addf %273, %303 : vector<16x64xf32>
    %c16_118 = arith.constant 16 : index
    %c0_119 = arith.constant 0 : index
    %305 = vector.load %arg10[%c16_118, %c0_119] : memref<48x512xf32, #tpu.memory_space<vmem>>, vector<8x256xf32>
    %306 = vector.extract_strided_slice %303 {offsets = [0, 0], sizes = [8, 64], strides = [1, 1]} : vector<16x64xf32> to vector<8x64xf32>
    %307 = arith.truncf %306 : vector<8x64xf32> to vector<8x64xbf16>
    %cst_120 = arith.constant dense<0.000000e+00> : vector<8x256xf32>
    %308 = tpu.matmul %307, %239, %cst_120 {dimension_numbers = #tpu.dot_dimension_numbers<[1], [0], [0], [1], [0, 0, 1, 1], [], []>} : vector<8x64xbf16>, vector<64x256xbf16>, vector<8x256xf32> -> vector<8x256xf32>
    %309 = arith.addf %305, %308 : vector<8x256xf32>
    %c24_121 = arith.constant 24 : index
    %c256_122 = arith.constant 256 : index
    %310 = vector.load %arg10[%c24_121, %c256_122] : memref<48x512xf32, #tpu.memory_space<vmem>>, vector<8x256xf32>
    %311 = vector.extract_strided_slice %303 {offsets = [8, 0], sizes = [8, 64], strides = [1, 1]} : vector<16x64xf32> to vector<8x64xf32>
    %312 = arith.truncf %311 : vector<8x64xf32> to vector<8x64xbf16>
    %cst_123 = arith.constant dense<0.000000e+00> : vector<8x256xf32>
    %313 = tpu.matmul %312, %240, %cst_123 {dimension_numbers = #tpu.dot_dimension_numbers<[1], [0], [0], [1], [0, 0, 1, 1], [], []>} : vector<8x64xbf16>, vector<64x256xbf16>, vector<8x256xf32> -> vector<8x256xf32>
    %314 = arith.addf %310, %313 : vector<8x256xf32>
    %315 = tpu.concatenate %309, %314 in 0 : vector<8x256xf32>, vector<8x256xf32> -> vector<16x256xf32>
    %316 = arith.negf %315 : vector<16x256xf32>
    %317 = math.exp %316 : vector<16x256xf32>
    %cst_124 = arith.constant 1.000000e+00 : f32
    %318 = vector.broadcast %cst_124 : f32 to vector<16x256xf32>
    %319 = arith.addf %318, %317 : vector<16x256xf32>
    %320 = arith.divf %318, %319 : vector<16x256xf32>
    %cst_125 = arith.constant 2.000000e+00 : f32
    %321 = vector.broadcast %cst_125 : f32 to vector<16x256xf32>
    %322 = arith.mulf %321, %320 : vector<16x256xf32>
    %cst_126 = arith.constant 1.000000e+00 : f32
    %323 = vector.broadcast %cst_126 : f32 to vector<16x256xf32>
    %324 = arith.subf %322, %323 : vector<16x256xf32>
    %325 = arith.select %5, %324, %320 : vector<16x256xi1>, vector<16x256xf32>
    %326 = vector.extract_strided_slice %325 {offsets = [0, 0], sizes = [16, 64], strides = [1, 1]} : vector<16x256xf32> to vector<16x64xf32>
    %327 = vector.extract_strided_slice %325 {offsets = [0, 64], sizes = [16, 64], strides = [1, 1]} : vector<16x256xf32> to vector<16x64xf32>
    %328 = vector.extract_strided_slice %325 {offsets = [0, 128], sizes = [16, 64], strides = [1, 1]} : vector<16x256xf32> to vector<16x64xf32>
    %329 = vector.extract_strided_slice %325 {offsets = [0, 192], sizes = [16, 64], strides = [1, 1]} : vector<16x256xf32> to vector<16x64xf32>
    %330 = arith.mulf %327, %301 : vector<16x64xf32>
    %331 = arith.mulf %326, %328 : vector<16x64xf32>
    %332 = arith.addf %330, %331 : vector<16x64xf32>
    %333 = math.tanh %332 : vector<16x64xf32>
    %334 = arith.mulf %329, %333 : vector<16x64xf32>
    %335 = arith.addf %304, %334 : vector<16x64xf32>
    %c24_127 = arith.constant 24 : index
    %c0_128 = arith.constant 0 : index
    %336 = vector.load %arg10[%c24_127, %c0_128] : memref<48x512xf32, #tpu.memory_space<vmem>>, vector<8x256xf32>
    %337 = vector.extract_strided_slice %334 {offsets = [0, 0], sizes = [8, 64], strides = [1, 1]} : vector<16x64xf32> to vector<8x64xf32>
    %338 = arith.truncf %337 : vector<8x64xf32> to vector<8x64xbf16>
    %cst_129 = arith.constant dense<0.000000e+00> : vector<8x256xf32>
    %339 = tpu.matmul %338, %239, %cst_129 {dimension_numbers = #tpu.dot_dimension_numbers<[1], [0], [0], [1], [0, 0, 1, 1], [], []>} : vector<8x64xbf16>, vector<64x256xbf16>, vector<8x256xf32> -> vector<8x256xf32>
    %340 = arith.addf %336, %339 : vector<8x256xf32>
    %c16_130 = arith.constant 16 : index
    %c256_131 = arith.constant 256 : index
    %341 = vector.load %arg10[%c16_130, %c256_131] : memref<48x512xf32, #tpu.memory_space<vmem>>, vector<8x256xf32>
    %342 = vector.extract_strided_slice %334 {offsets = [8, 0], sizes = [8, 64], strides = [1, 1]} : vector<16x64xf32> to vector<8x64xf32>
    %343 = arith.truncf %342 : vector<8x64xf32> to vector<8x64xbf16>
    %cst_132 = arith.constant dense<0.000000e+00> : vector<8x256xf32>
    %344 = tpu.matmul %343, %240, %cst_132 {dimension_numbers = #tpu.dot_dimension_numbers<[1], [0], [0], [1], [0, 0, 1, 1], [], []>} : vector<8x64xbf16>, vector<64x256xbf16>, vector<8x256xf32> -> vector<8x256xf32>
    %345 = arith.addf %341, %344 : vector<8x256xf32>
    %346 = tpu.concatenate %340, %345 in 0 : vector<8x256xf32>, vector<8x256xf32> -> vector<16x256xf32>
    %347 = arith.negf %346 : vector<16x256xf32>
    %348 = math.exp %347 : vector<16x256xf32>
    %cst_133 = arith.constant 1.000000e+00 : f32
    %349 = vector.broadcast %cst_133 : f32 to vector<16x256xf32>
    %350 = arith.addf %349, %348 : vector<16x256xf32>
    %351 = arith.divf %349, %350 : vector<16x256xf32>
    %cst_134 = arith.constant 2.000000e+00 : f32
    %352 = vector.broadcast %cst_134 : f32 to vector<16x256xf32>
    %353 = arith.mulf %352, %351 : vector<16x256xf32>
    %cst_135 = arith.constant 1.000000e+00 : f32
    %354 = vector.broadcast %cst_135 : f32 to vector<16x256xf32>
    %355 = arith.subf %353, %354 : vector<16x256xf32>
    %356 = arith.select %5, %355, %351 : vector<16x256xi1>, vector<16x256xf32>
    %357 = vector.extract_strided_slice %356 {offsets = [0, 0], sizes = [16, 64], strides = [1, 1]} : vector<16x256xf32> to vector<16x64xf32>
    %358 = vector.extract_strided_slice %356 {offsets = [0, 64], sizes = [16, 64], strides = [1, 1]} : vector<16x256xf32> to vector<16x64xf32>
    %359 = vector.extract_strided_slice %356 {offsets = [0, 128], sizes = [16, 64], strides = [1, 1]} : vector<16x256xf32> to vector<16x64xf32>
    %360 = vector.extract_strided_slice %356 {offsets = [0, 192], sizes = [16, 64], strides = [1, 1]} : vector<16x256xf32> to vector<16x64xf32>
    %361 = arith.mulf %358, %332 : vector<16x64xf32>
    %362 = arith.mulf %357, %359 : vector<16x64xf32>
    %363 = arith.addf %361, %362 : vector<16x64xf32>
    %364 = math.tanh %363 : vector<16x64xf32>
    %365 = arith.mulf %360, %364 : vector<16x64xf32>
    %366 = arith.addf %335, %365 : vector<16x64xf32>
    %c32_136 = arith.constant 32 : index
    %c0_137 = arith.constant 0 : index
    %367 = vector.load %arg10[%c32_136, %c0_137] : memref<48x512xf32, #tpu.memory_space<vmem>>, vector<8x256xf32>
    %368 = vector.extract_strided_slice %365 {offsets = [0, 0], sizes = [8, 64], strides = [1, 1]} : vector<16x64xf32> to vector<8x64xf32>
    %369 = arith.truncf %368 : vector<8x64xf32> to vector<8x64xbf16>
    %cst_138 = arith.constant dense<0.000000e+00> : vector<8x256xf32>
    %370 = tpu.matmul %369, %239, %cst_138 {dimension_numbers = #tpu.dot_dimension_numbers<[1], [0], [0], [1], [0, 0, 1, 1], [], []>} : vector<8x64xbf16>, vector<64x256xbf16>, vector<8x256xf32> -> vector<8x256xf32>
    %371 = arith.addf %367, %370 : vector<8x256xf32>
    %c8_139 = arith.constant 8 : index
    %c256_140 = arith.constant 256 : index
    %372 = vector.load %arg10[%c8_139, %c256_140] : memref<48x512xf32, #tpu.memory_space<vmem>>, vector<8x256xf32>
    %373 = vector.extract_strided_slice %365 {offsets = [8, 0], sizes = [8, 64], strides = [1, 1]} : vector<16x64xf32> to vector<8x64xf32>
    %374 = arith.truncf %373 : vector<8x64xf32> to vector<8x64xbf16>
    %cst_141 = arith.constant dense<0.000000e+00> : vector<8x256xf32>
    %375 = tpu.matmul %374, %240, %cst_141 {dimension_numbers = #tpu.dot_dimension_numbers<[1], [0], [0], [1], [0, 0, 1, 1], [], []>} : vector<8x64xbf16>, vector<64x256xbf16>, vector<8x256xf32> -> vector<8x256xf32>
    %376 = arith.addf %372, %375 : vector<8x256xf32>
    %377 = tpu.concatenate %371, %376 in 0 : vector<8x256xf32>, vector<8x256xf32> -> vector<16x256xf32>
    %378 = arith.negf %377 : vector<16x256xf32>
    %379 = math.exp %378 : vector<16x256xf32>
    %cst_142 = arith.constant 1.000000e+00 : f32
    %380 = vector.broadcast %cst_142 : f32 to vector<16x256xf32>
    %381 = arith.addf %380, %379 : vector<16x256xf32>
    %382 = arith.divf %380, %381 : vector<16x256xf32>
    %cst_143 = arith.constant 2.000000e+00 : f32
    %383 = vector.broadcast %cst_143 : f32 to vector<16x256xf32>
    %384 = arith.mulf %383, %382 : vector<16x256xf32>
    %cst_144 = arith.constant 1.000000e+00 : f32
    %385 = vector.broadcast %cst_144 : f32 to vector<16x256xf32>
    %386 = arith.subf %384, %385 : vector<16x256xf32>
    %387 = arith.select %5, %386, %382 : vector<16x256xi1>, vector<16x256xf32>
    %388 = vector.extract_strided_slice %387 {offsets = [0, 0], sizes = [16, 64], strides = [1, 1]} : vector<16x256xf32> to vector<16x64xf32>
    %389 = vector.extract_strided_slice %387 {offsets = [0, 64], sizes = [16, 64], strides = [1, 1]} : vector<16x256xf32> to vector<16x64xf32>
    %390 = vector.extract_strided_slice %387 {offsets = [0, 128], sizes = [16, 64], strides = [1, 1]} : vector<16x256xf32> to vector<16x64xf32>
    %391 = vector.extract_strided_slice %387 {offsets = [0, 192], sizes = [16, 64], strides = [1, 1]} : vector<16x256xf32> to vector<16x64xf32>
    %392 = arith.mulf %389, %363 : vector<16x64xf32>
    %393 = arith.mulf %388, %390 : vector<16x64xf32>
    %394 = arith.addf %392, %393 : vector<16x64xf32>
    %395 = math.tanh %394 : vector<16x64xf32>
    %396 = arith.mulf %391, %395 : vector<16x64xf32>
    %397 = arith.addf %366, %396 : vector<16x64xf32>
    %c40_145 = arith.constant 40 : index
    %c0_146 = arith.constant 0 : index
    %398 = vector.load %arg10[%c40_145, %c0_146] : memref<48x512xf32, #tpu.memory_space<vmem>>, vector<8x256xf32>
    %399 = vector.extract_strided_slice %396 {offsets = [0, 0], sizes = [8, 64], strides = [1, 1]} : vector<16x64xf32> to vector<8x64xf32>
    %400 = arith.truncf %399 : vector<8x64xf32> to vector<8x64xbf16>
    %cst_147 = arith.constant dense<0.000000e+00> : vector<8x256xf32>
    %401 = tpu.matmul %400, %239, %cst_147 {dimension_numbers = #tpu.dot_dimension_numbers<[1], [0], [0], [1], [0, 0, 1, 1], [], []>} : vector<8x64xbf16>, vector<64x256xbf16>, vector<8x256xf32> -> vector<8x256xf32>
    %402 = arith.addf %398, %401 : vector<8x256xf32>
    %c0_148 = arith.constant 0 : index
    %c256_149 = arith.constant 256 : index
    %403 = vector.load %arg10[%c0_148, %c256_149] : memref<48x512xf32, #tpu.memory_space<vmem>>, vector<8x256xf32>
    %404 = vector.extract_strided_slice %396 {offsets = [8, 0], sizes = [8, 64], strides = [1, 1]} : vector<16x64xf32> to vector<8x64xf32>
    %405 = arith.truncf %404 : vector<8x64xf32> to vector<8x64xbf16>
    %cst_150 = arith.constant dense<0.000000e+00> : vector<8x256xf32>
    %406 = tpu.matmul %405, %240, %cst_150 {dimension_numbers = #tpu.dot_dimension_numbers<[1], [0], [0], [1], [0, 0, 1, 1], [], []>} : vector<8x64xbf16>, vector<64x256xbf16>, vector<8x256xf32> -> vector<8x256xf32>
    %407 = arith.addf %403, %406 : vector<8x256xf32>
    %408 = tpu.concatenate %402, %407 in 0 : vector<8x256xf32>, vector<8x256xf32> -> vector<16x256xf32>
    %409 = arith.negf %408 : vector<16x256xf32>
    %410 = math.exp %409 : vector<16x256xf32>
    %cst_151 = arith.constant 1.000000e+00 : f32
    %411 = vector.broadcast %cst_151 : f32 to vector<16x256xf32>
    %412 = arith.addf %411, %410 : vector<16x256xf32>
    %413 = arith.divf %411, %412 : vector<16x256xf32>
    %cst_152 = arith.constant 2.000000e+00 : f32
    %414 = vector.broadcast %cst_152 : f32 to vector<16x256xf32>
    %415 = arith.mulf %414, %413 : vector<16x256xf32>
    %cst_153 = arith.constant 1.000000e+00 : f32
    %416 = vector.broadcast %cst_153 : f32 to vector<16x256xf32>
    %417 = arith.subf %415, %416 : vector<16x256xf32>
    %418 = arith.select %5, %417, %413 : vector<16x256xi1>, vector<16x256xf32>
    %419 = vector.extract_strided_slice %418 {offsets = [0, 0], sizes = [16, 64], strides = [1, 1]} : vector<16x256xf32> to vector<16x64xf32>
    %420 = vector.extract_strided_slice %418 {offsets = [0, 64], sizes = [16, 64], strides = [1, 1]} : vector<16x256xf32> to vector<16x64xf32>
    %421 = vector.extract_strided_slice %418 {offsets = [0, 128], sizes = [16, 64], strides = [1, 1]} : vector<16x256xf32> to vector<16x64xf32>
    %422 = vector.extract_strided_slice %418 {offsets = [0, 192], sizes = [16, 64], strides = [1, 1]} : vector<16x256xf32> to vector<16x64xf32>
    %423 = arith.mulf %420, %394 : vector<16x64xf32>
    %424 = arith.mulf %419, %421 : vector<16x64xf32>
    %425 = arith.addf %423, %424 : vector<16x64xf32>
    %426 = math.tanh %425 : vector<16x64xf32>
    %427 = arith.mulf %422, %426 : vector<16x64xf32>
    %428 = arith.addf %397, %427 : vector<16x64xf32>
    %c0_154 = arith.constant 0 : index
    %c0_155 = arith.constant 0 : index
    %429 = vector.load %arg7[%c0_154, %c0_155] : memref<128x4xbf16, #tpu.memory_space<vmem>>, vector<128x4xbf16>
    %430 = vector.extract_strided_slice %428 {offsets = [0, 0], sizes = [8, 64], strides = [1, 1]} : vector<16x64xf32> to vector<8x64xf32>
    %431 = vector.extract_strided_slice %429 {offsets = [0, 0], sizes = [64, 4], strides = [1, 1]} : vector<128x4xbf16> to vector<64x4xbf16>
    %432 = arith.truncf %430 : vector<8x64xf32> to vector<8x64xbf16>
    %cst_156 = arith.constant dense<0.000000e+00> : vector<8x4xf32>
    %433 = tpu.matmul %432, %431, %cst_156 {dimension_numbers = #tpu.dot_dimension_numbers<[1], [0], [0], [1], [0, 0, 1, 1], [], []>} : vector<8x64xbf16>, vector<64x4xbf16>, vector<8x4xf32> -> vector<8x4xf32>
    %434 = vector.extract_strided_slice %428 {offsets = [8, 0], sizes = [8, 64], strides = [1, 1]} : vector<16x64xf32> to vector<8x64xf32>
    %435 = vector.extract_strided_slice %429 {offsets = [64, 0], sizes = [64, 4], strides = [1, 1]} : vector<128x4xbf16> to vector<64x4xbf16>
    %436 = arith.truncf %434 : vector<8x64xf32> to vector<8x64xbf16>
    %cst_157 = arith.constant dense<0.000000e+00> : vector<8x4xf32>
    %437 = tpu.matmul %436, %435, %cst_157 {dimension_numbers = #tpu.dot_dimension_numbers<[1], [0], [0], [1], [0, 0, 1, 1], [], []>} : vector<8x64xbf16>, vector<64x4xbf16>, vector<8x4xf32> -> vector<8x4xf32>
    %438 = arith.addf %433, %437 : vector<8x4xf32>
    %c0_158 = arith.constant 0 : index
    %c0_159 = arith.constant 0 : index
    %439 = vector.load %arg8[%c0_158, %c0_159] : memref<1x4xf32, #tpu.memory_space<vmem>>, vector<1x4xf32>
    %cst_160 = arith.constant 6.000000e+00 : f32
    %440 = vector.broadcast %cst_160 : f32 to vector<1x4xf32>
    %441 = arith.mulf %440, %439 : vector<1x4xf32>
    %442 = vector.broadcast %441 : vector<1x4xf32> to vector<8x4xf32>
    %443 = arith.addf %438, %442 : vector<8x4xf32>
    %cst_161 = arith.constant 6.000000e+01 : f32
    %444 = vector.broadcast %cst_161 : f32 to vector<8x4xf32>
    %445 = arith.divf %443, %444 : vector<8x4xf32>
    %c0_162 = arith.constant 0 : index
    %c0_163 = arith.constant 0 : index
    %446 = vector.load %arg9[%c0_162, %c0_163] : memref<8x4xf32, #tpu.memory_space<vmem>>, vector<8x4xf32>
    tpu.vector_store %arg9[%c0_162, %c0_163], %445 {strides = array<i32>} : memref<8x4xf32, #tpu.memory_space<vmem>>, vector<8x4xf32>,
    return
  }
}

</mosaic_0001>

<llo_original>
// kernel: tpu_custom_call.1
$region0: #{tpu_custom_call.1}
  #allocation0 [shape = 'u32[]', space=smem, size = 0x4, offset = 0x4, fixed_abs, tag = 'smem constant byte address 0x4 - core index']
  #allocation1 [shape = 'u32[144,128]{1,0:T(1,128)}', space=vmem, size = 0x12000, scoped, tag = 'internal scratch']
  #allocation2 [shape = 'f32[48,512]{1,0:T(8,128)}', space=vmem, size = 0x18000, scoped, tag = 'scratch operand']
  #allocation3 [shape = 'f32[48,64]{1,0:T(8,128)}', space=vmem, size = 0x6000, scoped, tag = 'scratch operand']
  #allocation4 [shape = 'f32[48,64]{1,0:T(8,128)}', space=vmem, size = 0x6000, scoped, tag = 'scratch operand']
  %s0 = inlined_call_operand.vmem [shape: f32[48,8], index: 0, kind: input, shape index: {}]
  %s1 = inlined_call_operand.hbm [shape: bf16[8,512], index: 1, kind: input, shape index: {}]
  %s2 = inlined_call_operand.vmem [shape: bf16[64,512], index: 2, kind: input, shape index: {}]
  %s3 = inlined_call_operand.vmem [shape: f32[1,512], index: 3, kind: input, shape index: {}]
  %s4 = inlined_call_operand.hbm [shape: bf16[128,512], index: 4, kind: input, shape index: {}]
  %s5 = inlined_call_operand.hbm [shape: bf16[64,512], index: 5, kind: input, shape index: {}]
  %s6 = inlined_call_operand.vmem [shape: f32[1,512], index: 6, kind: input, shape index: {}]
  %s7 = inlined_call_operand.vmem [shape: bf16[128,4], index: 7, kind: input, shape index: {}]
  %s8 = inlined_call_operand.vmem [shape: f32[1,4], index: 8, kind: input, shape index: {}]
  %s9 = inlined_call_operand.vmem [shape: f32[8,4], index: 9, kind: output, shape index: {}]
  %s10 = sld [smem:[#allocation0]]
  $region58: #{tpu_custom_call.1} parent=0
    _
  %s12 = ssub.s32 1, %s10
  %s13 = scalar_select 0, %s12, %s10
  $region1: #{tpu_custom_call.1} parent=0
    #allocation5 [shape = 'u8[8192]{0}', space=vmem, size = 0x2000, scoped, tag = 'input window, operand 1, single buffered']
    #allocation6 [shape = 's32[1]{0}', space=sflag, size = 0x4, scoped, tag = 'scoped memory for tpu_custom_call.1']
    #allocation7 [shape = 'u8[131072]{0}', space=vmem, size = 0x20000, scoped, tag = 'input window, operand 4, single buffered']
    #allocation8 [shape = 's32[1]{0}', space=sflag, size = 0x4, scoped, tag = 'scoped memory for tpu_custom_call.1']
    #allocation9 [shape = 'u8[65536]{0}', space=vmem, size = 0x10000, scoped, tag = 'input window, operand 5, single buffered']
    %14 = vsyncpa [#allocation6], 0
    %15 = vsyncpa [#allocation8], 0
    // Predicated region
    $region2: #{tpu_custom_call.1} parent=1 // pred_check
      _
    $region3: #{tpu_custom_call.1} parent=1 // pred_check_branch
      %17 = sbr.rel (0) target = $region5
    $region4: #{tpu_custom_call.1} parent=1 // pred_region
      _
    $region5: #{tpu_custom_call.1} parent=1 // pred_fallthru
      _
    // Predicated region
    $region6: #{tpu_custom_call.1} parent=1 // pred_check
      _
    $region7: #{tpu_custom_call.1} parent=1 // pred_check_branch
      %19 = sbr.rel (0) target = $region9
    $region8: #{tpu_custom_call.1} parent=1 // pred_region
      %s21 = ssub.s32 256, 256
      %22 = vsyncadd [#allocation6], %s21
      %s24 = sshll.u32 [#allocation5], 4
      %s25 = int_to_ptr.vmem [resolvable:$true] %s24
      %27 = dma.hbm_to_vmem [thread:$0]  %s1, 256, %s25, [#allocation6]
    $region9: #{tpu_custom_call.1} parent=1 // pred_fallthru
      _
    // Predicated region
    $region10: #{tpu_custom_call.1} parent=1 // pred_check
      _
    $region11: #{tpu_custom_call.1} parent=1 // pred_check_branch
      %29 = sbr.rel (0) target = $region13
    $region12: #{tpu_custom_call.1} parent=1 // pred_region
      _
    $region13: #{tpu_custom_call.1} parent=1 // pred_fallthru
      _
    // Predicated region
    $region14: #{tpu_custom_call.1} parent=1 // pred_check
      _
    $region15: #{tpu_custom_call.1} parent=1 // pred_check_branch
      %31 = sbr.rel (0) target = $region17
    $region16: #{tpu_custom_call.1} parent=1 // pred_region
      _
    $region17: #{tpu_custom_call.1} parent=1 // pred_fallthru
      _
    // Predicated region
    $region18: #{tpu_custom_call.1} parent=1 // pred_check
      _
    $region19: #{tpu_custom_call.1} parent=1 // pred_check_branch
      %33 = sbr.rel (0) target = $region21
    $region20: #{tpu_custom_call.1} parent=1 // pred_region
      %s35 = ssub.s32 4096, 4096
      %36 = vsyncadd [#allocation8], %s35
      %s37 = sshll.u32 [#allocation7], 4
      %s38 = int_to_ptr.vmem [resolvable:$true] %s37
      %43 = dma.hbm_to_vmem [thread:$0]  %s4, 4096, %s38, [#allocation8], 256, 256, 16
    $region21: #{tpu_custom_call.1} parent=1 // pred_fallthru
      _
    // Predicated region
    $region22: #{tpu_custom_call.1} parent=1 // pred_check
      _
    $region23: #{tpu_custom_call.1} parent=1 // pred_check_branch
      %45 = sbr.rel (0) target = $region25
    $region24: #{tpu_custom_call.1} parent=1 // pred_region
      %s47 = ssub.s32 2048, 2048
      %48 = vsyncadd [#allocation8], %s47
      %s49 = sshll.u32 [#allocation9], 4
      %s50 = int_to_ptr.vmem [resolvable:$true] %s49
      %55 = dma.hbm_to_vmem [thread:$0]  %s5, 2048, %s50, [#allocation8], 256, 256, 16
    $region25: #{tpu_custom_call.1} parent=1 // pred_fallthru
      _
    // Predicated region
    $region26: #{tpu_custom_call.1} parent=1 // pred_check
      _
    $region27: #{tpu_custom_call.1} parent=1 // pred_check_branch
      %57 = sbr.rel (0) target = $region29
    $region28: #{tpu_custom_call.1} parent=1 // pred_region
      _
    $region29: #{tpu_custom_call.1} parent=1 // pred_fallthru
      _
    // Predicated region
    $region30: #{tpu_custom_call.1} parent=1 // pred_check
      _
    $region31: #{tpu_custom_call.1} parent=1 // pred_check_branch
      %59 = sbr.rel (0) target = $region33
    $region32: #{tpu_custom_call.1} parent=1 // pred_region
      _
    $region33: #{tpu_custom_call.1} parent=1 // pred_fallthru
      _
    // Predicated region
    $region34: #{tpu_custom_call.1} parent=1 // pred_check
      _
    $region35: #{tpu_custom_call.1} parent=1 // pred_check_branch
      %61 = sbr.rel (0) target = $region37
    $region36: #{tpu_custom_call.1} parent=1 // pred_region
      _
    $region37: #{tpu_custom_call.1} parent=1 // pred_fallthru
      _
    // Predicated region
    $region38: #{tpu_custom_call.1} parent=1 // pred_check
      _
    $region39: #{tpu_custom_call.1} parent=1 // pred_check_branch
      %63 = sbr.rel (0) target = $region41
    $region40: #{tpu_custom_call.1} parent=1 // pred_region
      %64 = dma.done [#allocation6], 256
    $region41: #{tpu_custom_call.1} parent=1 // pred_fallthru
      _
    // Predicated region
    $region42: #{tpu_custom_call.1} parent=1 // pred_check
      _
    $region43: #{tpu_custom_call.1} parent=1 // pred_check_branch
      %66 = sbr.rel (0) target = $region45
    $region44: #{tpu_custom_call.1} parent=1 // pred_region
      %67 = dma.done [#allocation8], 4096
    $region45: #{tpu_custom_call.1} parent=1 // pred_fallthru
      _
    // Predicated region
    $region46: #{tpu_custom_call.1} parent=1 // pred_check
      _
    $region47: #{tpu_custom_call.1} parent=1 // pred_check_branch
      %69 = sbr.rel (0) target = $region49
    $region48: #{tpu_custom_call.1} parent=1 // pred_region
      %70 = dma.done [#allocation8], 2048
    $region49: #{tpu_custom_call.1} parent=1 // pred_fallthru
      _
    %v72 = vlaneseq
    %v73 = vand.u32 %v72, 127
    %v74 = vadd.s32 %v73, 128
    %vm75 = vcmp.ge.s32.totalorder %v73, 128
    %vm76 = vcmp.ge.s32.totalorder %v74, 128
    %vm77 = vcmp.lt.s32.totalorder %v73, 192
    %vm78 = vcmp.lt.s32.totalorder %v74, 192
    %vm79 = vmand %vm75, %vm77
    %vm80 = vmand %vm76, %vm78
    %v81 = vld [vmem:[%s0] sm:$0xff]
    %v82 = vld [vmem:[%s0 + $0x8] sm:$0xff]
    %v83 = vld [vmem:[%s0 + $0x10] sm:$0xff]
    %v84 = vld [vmem:[%s0 + $0x18] sm:$0xff]
    %v85 = vld [vmem:[%s0 + $0x20] sm:$0xff]
    %v86 = vld [vmem:[%s0 + $0x28] sm:$0xff]
    %v87 = vld [vmem:[#allocation5] sm:$0xff]
    %v88 = vld [vmem:[#allocation5 + $0x8] sm:$0xff]
    %v89 = vpack.c.bf16 %v82, %v81
    %v90 = vpack.c.bf16 %v84, %v83
    %v91 = vpack.c.bf16 %v86, %v85
    %v92 = vld [vmem:[%s3] sm:$0xf]
    %v94 = vlaneseq
    %v95 = vshrl.u32 %v94, 7
    %v96 = vsub.s32 0, %v95
    %v97 = vrot.slane %v92, %v96
    %v98 = vlaneseq
    %v99 = vshrl.u32 %v98, 7
    %v100 = vsub.s32 1, %v99
    %v101 = vrot.slane %v92, %v100
    %v102 = vlaneseq
    %v103 = vshrl.u32 %v102, 7
    %v104 = vsub.s32 2, %v103
    %v105 = vrot.slane %v92, %v104
    %v106 = vlaneseq
    %v107 = vshrl.u32 %v106, 7
    %v108 = vsub.s32 3, %v107
    %v109 = vrot.slane %v92, %v108
    %v116 = vunpack.c.l.b16 %v87
    %v117 = vunpack.c.h.b16 %v87
    %v118 = vunpack.c.l.b16 %v88
    %v119 = vunpack.c.h.b16 %v88
    %v120 = vpack.c.b16 %v116, %v116
    %v121 = vpack.c.b16 %v117, %v117
    %v122 = vpack.c.b16 %v118, %v118
    %v123 = vpack.c.b16 %v119, %v119
    %vm124 = vcmask 64512
    %v126 = vsel %vm124, %v89, 0
    %v129 = vsel %vm124, %v90, 0
    %v132 = vsel %vm124, %v91, 0
    %vm134 = vcmask 1043456
    %v136 = vsel %vm134, %v120, 0
    %v139 = vsel %vm134, %v121, 0
    %v142 = vsel %vm134, %v122, 0
    %v145 = vsel %vm134, %v123, 0
    %147 = vmatprep.subr.bf16.mxu0 %v139
    %148 = vmatpush1.bf16.msra.mxu0 %v136
    %149 = vmatprep.subr.bf16.mxu0 0
    %150 = vmatpush1.bf16.msra.mxu0 0
    %151 = vmatprep.subr.bf16.mxu0 0
    %152 = vmatpush1.bf16.msra.mxu0 0
    %153 = vmatprep.subr.bf16.mxu0 0
    %154 = vmatpush1.bf16.msra.mxu0 0
    %155 = vmatprep.subr.bf16.mxu0 0
    %156 = vmatpush1.bf16.msra.mxu0 0
    %157 = vmatprep.subr.bf16.mxu0 0
    %158 = vmatpush1.bf16.msra.mxu0 0
    %159 = vmatprep.subr.bf16.mxu0 0
    %160 = vmatpush1.bf16.msra.mxu0 0
    %161 = vmatprep.subr.bf16.mxu0 0
    %162 = vmatpush1.bf16.msra.mxu0 0
    %163 = vmatprep.subr.bf16.mxu0 0
    %164 = vmatpush1.bf16.msra.mxu0 0
    %165 = vmatprep.subr.bf16.mxu0 0
    %166 = vmatpush1.bf16.msra.mxu0 0
    %167 = vmatprep.subr.bf16.mxu0 0
    %168 = vmatpush1.bf16.msra.mxu0 0
    %169 = vmatprep.subr.bf16.mxu0 0
    %170 = vmatpush1.bf16.msra.mxu0 0
    %171 = vmatprep.subr.bf16.mxu0 0
    %172 = vmatpush1.bf16.msra.mxu0 0
    %173 = vmatprep.subr.bf16.mxu0 0
    %174 = vmatpush1.bf16.msra.mxu0 0
    %175 = vmatprep.subr.bf16.mxu0 0
    %176 = vmatpush1.bf16.msra.mxu0 0
    %177 = vmatprep.subr.bf16.mxu0 0
    %178 = vmatpush1.bf16.msra.mxu0 0
    %179 = vmatprep.mubr.bf16.mxu0 0
    %180 = vmatmul.mubr.bf16.gmra.mrb[0].mxu0 %v126
    %v181 = vpop.f32.mrb[0].mxu0
    %v182 = vadd.f32 %v97, %v181
    %v183 = vpop.f32.mrb[0].mxu0
    %v184 = vadd.f32 %v101, %v183
    %v185 = vpop.f32.mrb[0].mxu0
    %v186 = vadd.f32 %v97, %v185
    %v187 = vpop.f32.mrb[0].mxu0
    %v188 = vadd.f32 %v101, %v187
    %189 = vmatprep.mubr.bf16.mxu0 0
    %190 = vmatmul.mubr.bf16.gmra.mrb[0].mxu0 %v129
    %v191 = vpop.f32.mrb[0].mxu0
    %v192 = vadd.f32 %v97, %v191
    %v193 = vpop.f32.mrb[0].mxu0
    %v194 = vadd.f32 %v101, %v193
    %v195 = vpop.f32.mrb[0].mxu0
    %v196 = vadd.f32 %v97, %v195
    %v197 = vpop.f32.mrb[0].mxu0
    %v198 = vadd.f32 %v101, %v197
    %199 = vmatprep.mubr.bf16.mxu0 0
    %200 = vmatmul.mubr.bf16.gmra.mrb[0].mxu0 %v132
    %v201 = vpop.f32.mrb[0].mxu0
    %v202 = vadd.f32 %v97, %v201
    %v203 = vpop.f32.mrb[0].mxu0
    %v204 = vadd.f32 %v101, %v203
    %v205 = vpop.f32.mrb[0].mxu0
    %v206 = vadd.f32 %v97, %v205
    %v207 = vpop.f32.mrb[0].mxu0
    %v208 = vadd.f32 %v101, %v207
    %209 = vdwg.mxu0
    %210 = vmatprep.subr.bf16.mxu0 %v145
    %211 = vmatpush1.bf16.msra.mxu0 %v142
    %212 = vmatprep.subr.bf16.mxu0 0
    %213 = vmatpush1.bf16.msra.mxu0 0
    %214 = vmatprep.subr.bf16.mxu0 0
    %215 = vmatpush1.bf16.msra.mxu0 0
    %216 = vmatprep.subr.bf16.mxu0 0
    %217 = vmatpush1.bf16.msra.mxu0 0
    %218 = vmatprep.subr.bf16.mxu0 0
    %219 = vmatpush1.bf16.msra.mxu0 0
    %220 = vmatprep.subr.bf16.mxu0 0
    %221 = vmatpush1.bf16.msra.mxu0 0
    %222 = vmatprep.subr.bf16.mxu0 0
    %223 = vmatpush1.bf16.msra.mxu0 0
    %224 = vmatprep.subr.bf16.mxu0 0
    %225 = vmatpush1.bf16.msra.mxu0 0
    %226 = vmatprep.subr.bf16.mxu0 0
    %227 = vmatpush1.bf16.msra.mxu0 0
    %228 = vmatprep.subr.bf16.mxu0 0
    %229 = vmatpush1.bf16.msra.mxu0 0
    %230 = vmatprep.subr.bf16.mxu0 0
    %231 = vmatpush1.bf16.msra.mxu0 0
    %232 = vmatprep.subr.bf16.mxu0 0
    %233 = vmatpush1.bf16.msra.mxu0 0
    %234 = vmatprep.subr.bf16.mxu0 0
    %235 = vmatpush1.bf16.msra.mxu0 0
    %236 = vmatprep.subr.bf16.mxu0 0
    %237 = vmatpush1.bf16.msra.mxu0 0
    %238 = vmatprep.subr.bf16.mxu0 0
    %239 = vmatpush1.bf16.msra.mxu0 0
    %240 = vmatprep.subr.bf16.mxu0 0
    %241 = vmatpush1.bf16.msra.mxu0 0
    %242 = vmatprep.mubr.bf16.mxu0 0
    %243 = vmatmul.mubr.bf16.gmra.mrb[0].mxu0 %v126
    %v244 = vpop.f32.mrb[0].mxu0
    %v245 = vadd.f32 %v105, %v244
    %v246 = vpop.f32.mrb[0].mxu0
    %v247 = vadd.f32 %v109, %v246
    %v248 = vpop.f32.mrb[0].mxu0
    %v249 = vadd.f32 %v105, %v248
    %v250 = vpop.f32.mrb[0].mxu0
    %v251 = vadd.f32 %v109, %v250
    %252 = vmatprep.mubr.bf16.mxu0 0
    %253 = vmatmul.mubr.bf16.gmra.mrb[0].mxu0 %v129
    %v254 = vpop.f32.mrb[0].mxu0
    %v255 = vadd.f32 %v105, %v254
    %v256 = vpop.f32.mrb[0].mxu0
    %v257 = vadd.f32 %v109, %v256
    %v258 = vpop.f32.mrb[0].mxu0
    %v259 = vadd.f32 %v105, %v258
    %v260 = vpop.f32.mrb[0].mxu0
    %v261 = vadd.f32 %v109, %v260
    %262 = vmatprep.mubr.bf16.mxu0 0
    %263 = vmatmul.mubr.bf16.gmra.mrb[0].mxu0 %v132
    %v264 = vpop.f32.mrb[0].mxu0
    %v265 = vadd.f32 %v105, %v264
    %v266 = vpop.f32.mrb[0].mxu0
    %v267 = vadd.f32 %v109, %v266
    %v268 = vpop.f32.mrb[0].mxu0
    %v269 = vadd.f32 %v105, %v268
    %v270 = vpop.f32.mrb[0].mxu0
    %v271 = vadd.f32 %v109, %v270
    %272 = vdwg.mxu0
    %273 = vst [vmem:[#allocation2] sm:$0xff] %v182
    %274 = vst [vmem:[#allocation2 + $0x8] sm:$0xff] %v184
    %275 = vst [vmem:[#allocation2 + $0x10] sm:$0xff] %v245
    %276 = vst [vmem:[#allocation2 + $0x18] sm:$0xff] %v247
    %277 = vst [vmem:[#allocation2 + $0x20] sm:$0xff] %v186
    %278 = vst [vmem:[#allocation2 + $0x28] sm:$0xff] %v188
    %279 = vst [vmem:[#allocation2 + $0x30] sm:$0xff] %v249
    %280 = vst [vmem:[#allocation2 + $0x38] sm:$0xff] %v251
    %281 = vst [vmem:[#allocation2 + $0x40] sm:$0xff] %v192
    %282 = vst [vmem:[#allocation2 + $0x48] sm:$0xff] %v194
    %283 = vst [vmem:[#allocation2 + $0x50] sm:$0xff] %v255
    %284 = vst [vmem:[#allocation2 + $0x58] sm:$0xff] %v257
    %285 = vst [vmem:[#allocation2 + $0x60] sm:$0xff] %v196
    %286 = vst [vmem:[#allocation2 + $0x68] sm:$0xff] %v198
    %287 = vst [vmem:[#allocation2 + $0x70] sm:$0xff] %v259
    %288 = vst [vmem:[#allocation2 + $0x78] sm:$0xff] %v261
    %289 = vst [vmem:[#allocation2 + $0x80] sm:$0xff] %v202
    %290 = vst [vmem:[#allocation2 + $0x88] sm:$0xff] %v204
    %291 = vst [vmem:[#allocation2 + $0x90] sm:$0xff] %v265
    %292 = vst [vmem:[#allocation2 + $0x98] sm:$0xff] %v267
    %293 = vst [vmem:[#allocation2 + $0xa0] sm:$0xff] %v206
    %294 = vst [vmem:[#allocation2 + $0xa8] sm:$0xff] %v208
    %295 = vst [vmem:[#allocation2 + $0xb0] sm:$0xff] %v269
    %296 = vst [vmem:[#allocation2 + $0xb8] sm:$0xff] %v271
    %v297 = vld [vmem:[%s2] sm:$0xff]
    %v298 = vld [vmem:[%s2 + $0x8] sm:$0xff]
    %v299 = vld [vmem:[%s2 + $0x10] sm:$0xff]
    %v300 = vld [vmem:[%s2 + $0x18] sm:$0xff]
    %v301 = vld [vmem:[%s2 + $0x20] sm:$0xff]
    %v302 = vld [vmem:[%s2 + $0x28] sm:$0xff]
    %v303 = vld [vmem:[%s2 + $0x30] sm:$0xff]
    %v304 = vld [vmem:[%s2 + $0x38] sm:$0xff]
    %v305 = vld [vmem:[%s2 + $0x40] sm:$0xff]
    %v306 = vld [vmem:[%s2 + $0x48] sm:$0xff]
    %v307 = vld [vmem:[%s2 + $0x50] sm:$0xff]
    %v308 = vld [vmem:[%s2 + $0x58] sm:$0xff]
    %v309 = vld [vmem:[%s2 + $0x60] sm:$0xff]
    %v310 = vld [vmem:[%s2 + $0x68] sm:$0xff]
    %v311 = vld [vmem:[%s2 + $0x70] sm:$0xff]
    %v312 = vld [vmem:[%s2 + $0x78] sm:$0xff]
    %v313 = vld [vmem:[#allocation2] sm:$0xff]
    %v314 = vld [vmem:[#allocation2 + $0x8] sm:$0xff]
    %v323 = vunpack.c.l.b16 %v297
    %v324 = vunpack.c.h.b16 %v297
    %v325 = vunpack.c.l.b16 %v299
    %v326 = vunpack.c.h.b16 %v299
    %v327 = vunpack.c.l.b16 %v301
    %v328 = vunpack.c.h.b16 %v301
    %v329 = vunpack.c.l.b16 %v303
    %v330 = vunpack.c.h.b16 %v303
    %v331 = vunpack.c.l.b16 %v305
    %v332 = vunpack.c.h.b16 %v305
    %v333 = vunpack.c.l.b16 %v307
    %v334 = vunpack.c.h.b16 %v307
    %v335 = vunpack.c.l.b16 %v309
    %v336 = vunpack.c.h.b16 %v309
    %v337 = vunpack.c.l.b16 %v311
    %v338 = vunpack.c.h.b16 %v311
    %v339 = vpack.c.b16 %v325, %v323
    %v340 = vpack.c.b16 %v326, %v324
    %v341 = vpack.c.b16 %v329, %v327
    %v342 = vpack.c.b16 %v330, %v328
    %v343 = vpack.c.b16 %v333, %v331
    %v344 = vpack.c.b16 %v334, %v332
    %v345 = vpack.c.b16 %v337, %v335
    %v346 = vpack.c.b16 %v338, %v336
    %vm355 = vcmask 523264
    %v357 = vsel %vm355, 0, 0
    %359 = vmatprep.subr.bf16.mxu0 %v340
    %360 = vmatpush1.bf16.msra.mxu0 %v339
    %361 = vmatprep.subr.bf16.mxu0 %v342
    %362 = vmatpush1.bf16.msra.mxu0 %v341
    %363 = vmatprep.subr.bf16.mxu0 %v344
    %364 = vmatpush1.bf16.msra.mxu0 %v343
    %365 = vmatprep.subr.bf16.mxu0 %v346
    %366 = vmatpush1.bf16.msra.mxu0 %v345
    %367 = vmatprep.subr.bf16.mxu0 0
    %368 = vmatpush1.bf16.msra.mxu0 0
    %369 = vmatprep.subr.bf16.mxu0 0
    %370 = vmatpush1.bf16.msra.mxu0 0
    %371 = vmatprep.subr.bf16.mxu0 0
    %372 = vmatpush1.bf16.msra.mxu0 0
    %373 = vmatprep.subr.bf16.mxu0 0
    %374 = vmatpush1.bf16.msra.mxu0 0
    %375 = vmatprep.subr.bf16.mxu0 0
    %376 = vmatpush1.bf16.msra.mxu0 0
    %377 = vmatprep.subr.bf16.mxu0 0
    %378 = vmatpush1.bf16.msra.mxu0 0
    %379 = vmatprep.subr.bf16.mxu0 0
    %380 = vmatpush1.bf16.msra.mxu0 0
    %381 = vmatprep.subr.bf16.mxu0 0
    %382 = vmatpush1.bf16.msra.mxu0 0
    %383 = vmatprep.subr.bf16.mxu0 0
    %384 = vmatpush1.bf16.msra.mxu0 0
    %385 = vmatprep.subr.bf16.mxu0 0
    %386 = vmatpush1.bf16.msra.mxu0 0
    %387 = vmatprep.subr.bf16.mxu0 0
    %388 = vmatpush1.bf16.msra.mxu0 0
    %389 = vmatprep.subr.bf16.mxu0 0
    %390 = vmatpush1.bf16.msra.mxu0 0
    %391 = vmatprep.mubr.bf16.mxu0 0
    %392 = vmatmul.mubr.bf16.gmra.mrb[0].mxu0 %v357
    %v393 = vpop.f32.mrb[0].mxu0
    %v394 = vadd.f32 0.0, %v393
    %v395 = vpop.f32.mrb[0].mxu0
    %v396 = vadd.f32 0.0, %v395
    %v397 = vpop.f32.mrb[0].mxu0
    %v398 = vpop.f32.mrb[0].mxu0
    %399 = vdwg.mxu0
    %v400 = vadd.f32 %v313, %v394
    %v401 = vadd.f32 %v314, %v396
    %v402 = vld [vmem:[#allocation2 + $0xb0] sm:$0xff]
    %v403 = vld [vmem:[#allocation2 + $0xb8] sm:$0xff]
    %v412 = vunpack.c.l.b16 %v298
    %v413 = vunpack.c.h.b16 %v298
    %v414 = vunpack.c.l.b16 %v300
    %v415 = vunpack.c.h.b16 %v300
    %v416 = vunpack.c.l.b16 %v302
    %v417 = vunpack.c.h.b16 %v302
    %v418 = vunpack.c.l.b16 %v304
    %v419 = vunpack.c.h.b16 %v304
    %v420 = vunpack.c.l.b16 %v306
    %v421 = vunpack.c.h.b16 %v306
    %v422 = vunpack.c.l.b16 %v308
    %v423 = vunpack.c.h.b16 %v308
    %v424 = vunpack.c.l.b16 %v310
    %v425 = vunpack.c.h.b16 %v310
    %v426 = vunpack.c.l.b16 %v312
    %v427 = vunpack.c.h.b16 %v312
    %v428 = vpack.c.b16 %v414, %v412
    %v429 = vpack.c.b16 %v415, %v413
    %v430 = vpack.c.b16 %v418, %v416
    %v431 = vpack.c.b16 %v419, %v417
    %v432 = vpack.c.b16 %v422, %v420
    %v433 = vpack.c.b16 %v423, %v421
    %v434 = vpack.c.b16 %v426, %v424
    %v435 = vpack.c.b16 %v427, %v425
    %444 = vmatprep.subr.bf16.mxu0 %v429
    %445 = vmatpush1.bf16.msra.mxu0 %v428
    %446 = vmatprep.subr.bf16.mxu0 %v431
    %447 = vmatpush1.bf16.msra.mxu0 %v430
    %448 = vmatprep.subr.bf16.mxu0 %v433
    %449 = vmatpush1.bf16.msra.mxu0 %v432
    %450 = vmatprep.subr.bf16.mxu0 %v435
    %451 = vmatpush1.bf16.msra.mxu0 %v434
    %452 = vmatprep.subr.bf16.mxu0 0
    %453 = vmatpush1.bf16.msra.mxu0 0
    %454 = vmatprep.subr.bf16.mxu0 0
    %455 = vmatpush1.bf16.msra.mxu0 0
    %456 = vmatprep.subr.bf16.mxu0 0
    %457 = vmatpush1.bf16.msra.mxu0 0
    %458 = vmatprep.subr.bf16.mxu0 0
    %459 = vmatpush1.bf16.msra.mxu0 0
    %460 = vmatprep.subr.bf16.mxu0 0
    %461 = vmatpush1.bf16.msra.mxu0 0
    %462 = vmatprep.subr.bf16.mxu0 0
    %463 = vmatpush1.bf16.msra.mxu0 0
    %464 = vmatprep.subr.bf16.mxu0 0
    %465 = vmatpush1.bf16.msra.mxu0 0
    %466 = vmatprep.subr.bf16.mxu0 0
    %467 = vmatpush1.bf16.msra.mxu0 0
    %468 = vmatprep.subr.bf16.mxu0 0
    %469 = vmatpush1.bf16.msra.mxu0 0
    %470 = vmatprep.subr.bf16.mxu0 0
    %471 = vmatpush1.bf16.msra.mxu0 0
    %472 = vmatprep.subr.bf16.mxu0 0
    %473 = vmatpush1.bf16.msra.mxu0 0
    %474 = vmatprep.subr.bf16.mxu0 0
    %475 = vmatpush1.bf16.msra.mxu0 0
    %476 = vmatprep.mubr.bf16.mxu0 0
    %477 = vmatmul.mubr.bf16.gmra.mrb[0].mxu0 %v357
    %v478 = vpop.f32.mrb[0].mxu0
    %v479 = vadd.f32 0.0, %v478
    %v480 = vpop.f32.mrb[0].mxu0
    %v481 = vadd.f32 0.0, %v480
    %v482 = vpop.f32.mrb[0].mxu0
    %v483 = vpop.f32.mrb[0].mxu0
    %484 = vdwg.mxu0
    %v485 = vadd.f32 %v402, %v479
    %v486 = vadd.f32 %v403, %v481
    %v487 = vxor.u32 %v400, 2147483648
    %v488 = vxor.u32 %v401, 2147483648
    %v489 = vxor.u32 %v485, 2147483648
    %v490 = vxor.u32 %v486, 2147483648
    %v491 = vmul.f32 %v487, 1.442695
    %v492 = vpow.pop %v491
    %v493 = vmul.f32 %v488, 1.442695
    %v494 = vpow.pop %v493
    %v495 = vmul.f32 %v489, 1.442695
    %v496 = vpow.pop %v495
    %v497 = vmul.f32 %v490, 1.442695
    %v498 = vpow.pop %v497
    %v499 = vadd.f32 %v492, 1.0
    %v500 = vadd.f32 %v494, 1.0
    %v501 = vadd.f32 %v496, 1.0
    %v502 = vadd.f32 %v498, 1.0
    %v503 = vrcp.pop %v499
    %v504 = vmul.f32 1.0, %v503
    %v505 = vrcp.pop %v500
    %v506 = vmul.f32 1.0, %v505
    %v507 = vrcp.pop %v501
    %v508 = vmul.f32 1.0, %v507
    %v509 = vrcp.pop %v502
    %v510 = vmul.f32 1.0, %v509
    %v511 = vmul.f32 %v504, 2.0
    %v512 = vmul.f32 %v506, 2.0
    %v513 = vmul.f32 %v508, 2.0
    %v514 = vmul.f32 %v510, 2.0
    %v515 = vsub.f32 %v511, 1.0
    %v516 = vsub.f32 %v512, 1.0
    %v517 = vsub.f32 %v513, 1.0
    %v518 = vsub.f32 %v514, 1.0
    %v519 = vsel %vm79, %v515, %v504
    %v520 = vsel %vm80, %v516, %v506
    %v521 = vsel %vm79, %v517, %v508
    %v522 = vsel %vm80, %v518, %v510
    %v523 = vmul.f32 %v519, 0.0
    %v524 = vmul.f32 %v521, 0.0
    %v525 = vmul.f32 %v519, %v520
    %v526 = vmul.f32 %v521, %v522
    %529 = vrot.lane.b32.xlu0 %v525, 64
    %v530 = vpop.permute.xlu0 %529
    %531 = vrot.lane.b32.xlu0 %v526, 64
    %v532 = vpop.permute.xlu0 %531
    %v535 = vadd.f32 %v523, %v530
    %v536 = vadd.f32 %v524, %v532
    %v537 = vtanh.pop %v535
    %v538 = vtanh.pop %v536
    %v539 = vmul.f32 %v520, %v537
    %v540 = vmul.f32 %v522, %v538
    %542 = vrot.lane.b32.xlu0 %v539, 64
    %v543 = vpop.permute.xlu0 %542
    %545 = vst.msk [vmem:[#allocation3] sm:$0xff] %vm355, %v543
    %547 = vrot.lane.b32.xlu0 %v540, 64
    %v548 = vpop.permute.xlu0 %547
    %550 = vst.msk [vmem:[#allocation4 + $0x28] sm:$0xff] %vm355, %v548
    %v551 = vld [vmem:[#allocation2 + $0x20] sm:$0xff]
    %v552 = vld [vmem:[#allocation2 + $0x28] sm:$0xff]
    %v553 = vpack.c.bf16 %v539, %v539
    %555 = vrot.lane.b32.xlu0 %v553, 64
    %v556 = vpop.permute.xlu0 %555
    %v558 = vsel %vm355, %v556, 0
    %560 = vmatprep.subr.bf16.mxu0 %v340
    %561 = vmatpush1.bf16.msra.mxu0 %v339
    %562 = vmatprep.subr.bf16.mxu0 %v342
    %563 = vmatpush1.bf16.msra.mxu0 %v341
    %564 = vmatprep.subr.bf16.mxu0 %v344
    %565 = vmatpush1.bf16.msra.mxu0 %v343
    %566 = vmatprep.subr.bf16.mxu0 %v346
    %567 = vmatpush1.bf16.msra.mxu0 %v345
    %568 = vmatprep.subr.bf16.mxu0 0
    %569 = vmatpush1.bf16.msra.mxu0 0
    %570 = vmatprep.subr.bf16.mxu0 0
    %571 = vmatpush1.bf16.msra.mxu0 0
    %572 = vmatprep.subr.bf16.mxu0 0
    %573 = vmatpush1.bf16.msra.mxu0 0
    %574 = vmatprep.subr.bf16.mxu0 0
    %575 = vmatpush1.bf16.msra.mxu0 0
    %576 = vmatprep.subr.bf16.mxu0 0
    %577 = vmatpush1.bf16.msra.mxu0 0
    %578 = vmatprep.subr.bf16.mxu0 0
    %579 = vmatpush1.bf16.msra.mxu0 0
    %580 = vmatprep.subr.bf16.mxu0 0
    %581 = vmatpush1.bf16.msra.mxu0 0
    %582 = vmatprep.subr.bf16.mxu0 0
    %583 = vmatpush1.bf16.msra.mxu0 0
    %584 = vmatprep.subr.bf16.mxu0 0
    %585 = vmatpush1.bf16.msra.mxu0 0
    %586 = vmatprep.subr.bf16.mxu0 0
    %587 = vmatpush1.bf16.msra.mxu0 0
    %588 = vmatprep.subr.bf16.mxu0 0
    %589 = vmatpush1.bf16.msra.mxu0 0
    %590 = vmatprep.subr.bf16.mxu0 0
    %591 = vmatpush1.bf16.msra.mxu0 0
    %592 = vmatprep.mubr.bf16.mxu0 0
    %593 = vmatmul.mubr.bf16.gmra.mrb[0].mxu0 %v558
    %v594 = vpop.f32.mrb[0].mxu0
    %v595 = vadd.f32 0.0, %v594
    %v596 = vpop.f32.mrb[0].mxu0
    %v597 = vadd.f32 0.0, %v596
    %v598 = vpop.f32.mrb[0].mxu0
    %v599 = vpop.f32.mrb[0].mxu0
    %600 = vdwg.mxu0
    %v601 = vadd.f32 %v551, %v595
    %v602 = vadd.f32 %v552, %v597
    %v603 = vld [vmem:[#allocation2 + $0x90] sm:$0xff]
    %v604 = vld [vmem:[#allocation2 + $0x98] sm:$0xff]
    %v605 = vpack.c.bf16 %v540, %v540
    %607 = vrot.lane.b32.xlu0 %v605, 64
    %v608 = vpop.permute.xlu0 %607
    %v610 = vsel %vm355, %v608, 0
    %612 = vmatprep.subr.bf16.mxu0 %v429
    %613 = vmatpush1.bf16.msra.mxu0 %v428
    %614 = vmatprep.subr.bf16.mxu0 %v431
    %615 = vmatpush1.bf16.msra.mxu0 %v430
    %616 = vmatprep.subr.bf16.mxu0 %v433
    %617 = vmatpush1.bf16.msra.mxu0 %v432
    %618 = vmatprep.subr.bf16.mxu0 %v435
    %619 = vmatpush1.bf16.msra.mxu0 %v434
    %620 = vmatprep.subr.bf16.mxu0 0
    %621 = vmatpush1.bf16.msra.mxu0 0
    %622 = vmatprep.subr.bf16.mxu0 0
    %623 = vmatpush1.bf16.msra.mxu0 0
    %624 = vmatprep.subr.bf16.mxu0 0
    %625 = vmatpush1.bf16.msra.mxu0 0
    %626 = vmatprep.subr.bf16.mxu0 0
    %627 = vmatpush1.bf16.msra.mxu0 0
    %628 = vmatprep.subr.bf16.mxu0 0
    %629 = vmatpush1.bf16.msra.mxu0 0
    %630 = vmatprep.subr.bf16.mxu0 0
    %631 = vmatpush1.bf16.msra.mxu0 0
    %632 = vmatprep.subr.bf16.mxu0 0
    %633 = vmatpush1.bf16.msra.mxu0 0
    %634 = vmatprep.subr.bf16.mxu0 0
    %635 = vmatpush1.bf16.msra.mxu0 0
    %636 = vmatprep.subr.bf16.mxu0 0
    %637 = vmatpush1.bf16.msra.mxu0 0
    %638 = vmatprep.subr.bf16.mxu0 0
    %639 = vmatpush1.bf16.msra.mxu0 0
    %640 = vmatprep.subr.bf16.mxu0 0
    %641 = vmatpush1.bf16.msra.mxu0 0
    %642 = vmatprep.subr.bf16.mxu0 0
    %643 = vmatpush1.bf16.msra.mxu0 0
    %644 = vmatprep.mubr.bf16.mxu0 0
    %645 = vmatmul.mubr.bf16.gmra.mrb[0].mxu0 %v610
    %v646 = vpop.f32.mrb[0].mxu0
    %v647 = vadd.f32 0.0, %v646
    %v648 = vpop.f32.mrb[0].mxu0
    %v649 = vadd.f32 0.0, %v648
    %v650 = vpop.f32.mrb[0].mxu0
    %v651 = vpop.f32.mrb[0].mxu0
    %652 = vdwg.mxu0
    %v653 = vadd.f32 %v603, %v647
    %v654 = vadd.f32 %v604, %v649
    %v655 = vxor.u32 %v601, 2147483648
    %v656 = vxor.u32 %v602, 2147483648
    %v657 = vxor.u32 %v653, 2147483648
    %v658 = vxor.u32 %v654, 2147483648
    %v659 = vmul.f32 %v655, 1.442695
    %v660 = vpow.pop %v659
    %v661 = vmul.f32 %v656, 1.442695
    %v662 = vpow.pop %v661
    %v663 = vmul.f32 %v657, 1.442695
    %v664 = vpow.pop %v663
    %v665 = vmul.f32 %v658, 1.442695
    %v666 = vpow.pop %v665
    %v667 = vadd.f32 %v660, 1.0
    %v668 = vadd.f32 %v662, 1.0
    %v669 = vadd.f32 %v664, 1.0
    %v670 = vadd.f32 %v666, 1.0
    %v671 = vrcp.pop %v667
    %v672 = vmul.f32 1.0, %v671
    %v673 = vrcp.pop %v668
    %v674 = vmul.f32 1.0, %v673
    %v675 = vrcp.pop %v669
    %v676 = vmul.f32 1.0, %v675
    %v677 = vrcp.pop %v670
    %v678 = vmul.f32 1.0, %v677
    %v679 = vmul.f32 %v672, 2.0
    %v680 = vmul.f32 %v674, 2.0
    %v681 = vmul.f32 %v676, 2.0
    %v682 = vmul.f32 %v678, 2.0
    %v683 = vsub.f32 %v679, 1.0
    %v684 = vsub.f32 %v680, 1.0
    %v685 = vsub.f32 %v681, 1.0
    %v686 = vsub.f32 %v682, 1.0
    %v687 = vsel %vm79, %v683, %v672
    %v688 = vsel %vm80, %v684, %v674
    %v689 = vsel %vm79, %v685, %v676
    %v690 = vsel %vm80, %v686, %v678
    %v691 = vmul.f32 %v687, %v535
    %v692 = vmul.f32 %v689, %v536
    %v693 = vmul.f32 %v687, %v688
    %v694 = vmul.f32 %v689, %v690
    %697 = vrot.lane.b32.xlu0 %v693, 64
    %v698 = vpop.permute.xlu0 %697
    %699 = vrot.lane.b32.xlu0 %v694, 64
    %v700 = vpop.permute.xlu0 %699
    %v703 = vadd.f32 %v691, %v698
    %v704 = vadd.f32 %v692, %v700
    %v705 = vtanh.pop %v703
    %v706 = vtanh.pop %v704
    %v707 = vmul.f32 %v688, %v705
    %v708 = vmul.f32 %v690, %v706
    %710 = vrot.lane.b32.xlu0 %v707, 64
    %v711 = vpop.permute.xlu0 %710
    %713 = vst.msk [vmem:[#allocation3 + $0x8] sm:$0xff] %vm355, %v711
    %715 = vrot.lane.b32.xlu0 %v708, 64
    %v716 = vpop.permute.xlu0 %715
    %718 = vst.msk [vmem:[#allocation4 + $0x20] sm:$0xff] %vm355, %v716
    %v719 = vld [vmem:[#allocation2 + $0x40] sm:$0xff]
    %v720 = vld [vmem:[#allocation2 + $0x48] sm:$0xff]
    %v721 = vpack.c.bf16 %v707, %v707
    %723 = vrot.lane.b32.xlu0 %v721, 64
    %v724 = vpop.permute.xlu0 %723
    %v726 = vsel %vm355, %v724, 0
    %728 = vmatprep.subr.bf16.mxu0 %v340
    %729 = vmatpush1.bf16.msra.mxu0 %v339
    %730 = vmatprep.subr.bf16.mxu0 %v342
    %731 = vmatpush1.bf16.msra.mxu0 %v341
    %732 = vmatprep.subr.bf16.mxu0 %v344
    %733 = vmatpush1.bf16.msra.mxu0 %v343
    %734 = vmatprep.subr.bf16.mxu0 %v346
    %735 = vmatpush1.bf16.msra.mxu0 %v345
    %736 = vmatprep.subr.bf16.mxu0 0
    %737 = vmatpush1.bf16.msra.mxu0 0
    %738 = vmatprep.subr.bf16.mxu0 0
    %739 = vmatpush1.bf16.msra.mxu0 0
    %740 = vmatprep.subr.bf16.mxu0 0
    %741 = vmatpush1.bf16.msra.mxu0 0
    %742 = vmatprep.subr.bf16.mxu0 0
    %743 = vmatpush1.bf16.msra.mxu0 0
    %744 = vmatprep.subr.bf16.mxu0 0
    %745 = vmatpush1.bf16.msra.mxu0 0
    %746 = vmatprep.subr.bf16.mxu0 0
    %747 = vmatpush1.bf16.msra.mxu0 0
    %748 = vmatprep.subr.bf16.mxu0 0
    %749 = vmatpush1.bf16.msra.mxu0 0
    %750 = vmatprep.subr.bf16.mxu0 0
    %751 = vmatpush1.bf16.msra.mxu0 0
    %752 = vmatprep.subr.bf16.mxu0 0
    %753 = vmatpush1.bf16.msra.mxu0 0
    %754 = vmatprep.subr.bf16.mxu0 0
    %755 = vmatpush1.bf16.msra.mxu0 0
    %756 = vmatprep.subr.bf16.mxu0 0
    %757 = vmatpush1.bf16.msra.mxu0 0
    %758 = vmatprep.subr.bf16.mxu0 0
    %759 = vmatpush1.bf16.msra.mxu0 0
    %760 = vmatprep.mubr.bf16.mxu0 0
    %761 = vmatmul.mubr.bf16.gmra.mrb[0].mxu0 %v726
    %v762 = vpop.f32.mrb[0].mxu0
    %v763 = vadd.f32 0.0, %v762
    %v764 = vpop.f32.mrb[0].mxu0
    %v765 = vadd.f32 0.0, %v764
    %v766 = vpop.f32.mrb[0].mxu0
    %v767 = vpop.f32.mrb[0].mxu0
    %768 = vdwg.mxu0
    %v769 = vadd.f32 %v719, %v763
    %v770 = vadd.f32 %v720, %v765
    %v771 = vld [vmem:[#allocation2 + $0x70] sm:$0xff]
    %v772 = vld [vmem:[#allocation2 + $0x78] sm:$0xff]
    %v773 = vpack.c.bf16 %v708, %v708
    %775 = vrot.lane.b32.xlu0 %v773, 64
    %v776 = vpop.permute.xlu0 %775
    %v778 = vsel %vm355, %v776, 0
    %780 = vmatprep.subr.bf16.mxu0 %v429
    %781 = vmatpush1.bf16.msra.mxu0 %v428
    %782 = vmatprep.subr.bf16.mxu0 %v431
    %783 = vmatpush1.bf16.msra.mxu0 %v430
    %784 = vmatprep.subr.bf16.mxu0 %v433
    %785 = vmatpush1.bf16.msra.mxu0 %v432
    %786 = vmatprep.subr.bf16.mxu0 %v435
    %787 = vmatpush1.bf16.msra.mxu0 %v434
    %788 = vmatprep.subr.bf16.mxu0 0
    %789 = vmatpush1.bf16.msra.mxu0 0
    %790 = vmatprep.subr.bf16.mxu0 0
    %791 = vmatpush1.bf16.msra.mxu0 0
    %792 = vmatprep.subr.bf16.mxu0 0
    %793 = vmatpush1.bf16.msra.mxu0 0
    %794 = vmatprep.subr.bf16.mxu0 0
    %795 = vmatpush1.bf16.msra.mxu0 0
    %796 = vmatprep.subr.bf16.mxu0 0
    %797 = vmatpush1.bf16.msra.mxu0 0
    %798 = vmatprep.subr.bf16.mxu0 0
    %799 = vmatpush1.bf16.msra.mxu0 0
    %800 = vmatprep.subr.bf16.mxu0 0
    %801 = vmatpush1.bf16.msra.mxu0 0
    %802 = vmatprep.subr.bf16.mxu0 0
    %803 = vmatpush1.bf16.msra.mxu0 0
    %804 = vmatprep.subr.bf16.mxu0 0
    %805 = vmatpush1.bf16.msra.mxu0 0
    %806 = vmatprep.subr.bf16.mxu0 0
    %807 = vmatpush1.bf16.msra.mxu0 0
    %808 = vmatprep.subr.bf16.mxu0 0
    %809 = vmatpush1.bf16.msra.mxu0 0
    %810 = vmatprep.subr.bf16.mxu0 0
    %811 = vmatpush1.bf16.msra.mxu0 0
    %812 = vmatprep.mubr.bf16.mxu0 0
    %813 = vmatmul.mubr.bf16.gmra.mrb[0].mxu0 %v778
    %v814 = vpop.f32.mrb[0].mxu0
    %v815 = vadd.f32 0.0, %v814
    %v816 = vpop.f32.mrb[0].mxu0
    %v817 = vadd.f32 0.0, %v816
    %v818 = vpop.f32.mrb[0].mxu0
    %v819 = vpop.f32.mrb[0].mxu0
    %820 = vdwg.mxu0
    %v821 = vadd.f32 %v771, %v815
    %v822 = vadd.f32 %v772, %v817
    %v823 = vxor.u32 %v769, 2147483648
    %v824 = vxor.u32 %v770, 2147483648
    %v825 = vxor.u32 %v821, 2147483648
    %v826 = vxor.u32 %v822, 2147483648
    %v827 = vmul.f32 %v823, 1.442695
    %v828 = vpow.pop %v827
    %v829 = vmul.f32 %v824, 1.442695
    %v830 = vpow.pop %v829
    %v831 = vmul.f32 %v825, 1.442695
    %v832 = vpow.pop %v831
    %v833 = vmul.f32 %v826, 1.442695
    %v834 = vpow.pop %v833
    %v835 = vadd.f32 %v828, 1.0
    %v836 = vadd.f32 %v830, 1.0
    %v837 = vadd.f32 %v832, 1.0
    %v838 = vadd.f32 %v834, 1.0
    %v839 = vrcp.pop %v835
    %v840 = vmul.f32 1.0, %v839
    %v841 = vrcp.pop %v836
    %v842 = vmul.f32 1.0, %v841
    %v843 = vrcp.pop %v837
    %v844 = vmul.f32 1.0, %v843
    %v845 = vrcp.pop %v838
    %v846 = vmul.f32 1.0, %v845
    %v847 = vmul.f32 %v840, 2.0
    %v848 = vmul.f32 %v842, 2.0
    %v849 = vmul.f32 %v844, 2.0
    %v850 = vmul.f32 %v846, 2.0
    %v851 = vsub.f32 %v847, 1.0
    %v852 = vsub.f32 %v848, 1.0
    %v853 = vsub.f32 %v849, 1.0
    %v854 = vsub.f32 %v850, 1.0
    %v855 = vsel %vm79, %v851, %v840
    %v856 = vsel %vm80, %v852, %v842
    %v857 = vsel %vm79, %v853, %v844
    %v858 = vsel %vm80, %v854, %v846
    %v859 = vmul.f32 %v855, %v703
    %v860 = vmul.f32 %v857, %v704
    %v861 = vmul.f32 %v855, %v856
    %v862 = vmul.f32 %v857, %v858
    %865 = vrot.lane.b32.xlu0 %v861, 64
    %v866 = vpop.permute.xlu0 %865
    %867 = vrot.lane.b32.xlu0 %v862, 64
    %v868 = vpop.permute.xlu0 %867
    %v871 = vadd.f32 %v859, %v866
    %v872 = vadd.f32 %v860, %v868
    %v873 = vtanh.pop %v871
    %v874 = vtanh.pop %v872
    %v875 = vmul.f32 %v856, %v873
    %v876 = vmul.f32 %v858, %v874
    %878 = vrot.lane.b32.xlu0 %v875, 64
    %v879 = vpop.permute.xlu0 %878
    %881 = vst.msk [vmem:[#allocation3 + $0x10] sm:$0xff] %vm355, %v879
    %883 = vrot.lane.b32.xlu0 %v876, 64
    %v884 = vpop.permute.xlu0 %883
    %886 = vst.msk [vmem:[#allocation4 + $0x18] sm:$0xff] %vm355, %v884
    %v887 = vld [vmem:[#allocation2 + $0x60] sm:$0xff]
    %v888 = vld [vmem:[#allocation2 + $0x68] sm:$0xff]
    %v889 = vpack.c.bf16 %v875, %v875
    %891 = vrot.lane.b32.xlu0 %v889, 64
    %v892 = vpop.permute.xlu0 %891
    %v894 = vsel %vm355, %v892, 0
    %896 = vmatprep.subr.bf16.mxu0 %v340
    %897 = vmatpush1.bf16.msra.mxu0 %v339
    %898 = vmatprep.subr.bf16.mxu0 %v342
    %899 = vmatpush1.bf16.msra.mxu0 %v341
    %900 = vmatprep.subr.bf16.mxu0 %v344
    %901 = vmatpush1.bf16.msra.mxu0 %v343
    %902 = vmatprep.subr.bf16.mxu0 %v346
    %903 = vmatpush1.bf16.msra.mxu0 %v345
    %904 = vmatprep.subr.bf16.mxu0 0
    %905 = vmatpush1.bf16.msra.mxu0 0
    %906 = vmatprep.subr.bf16.mxu0 0
    %907 = vmatpush1.bf16.msra.mxu0 0
    %908 = vmatprep.subr.bf16.mxu0 0
    %909 = vmatpush1.bf16.msra.mxu0 0
    %910 = vmatprep.subr.bf16.mxu0 0
    %911 = vmatpush1.bf16.msra.mxu0 0
    %912 = vmatprep.subr.bf16.mxu0 0
    %913 = vmatpush1.bf16.msra.mxu0 0
    %914 = vmatprep.subr.bf16.mxu0 0
    %915 = vmatpush1.bf16.msra.mxu0 0
    %916 = vmatprep.subr.bf16.mxu0 0
    %917 = vmatpush1.bf16.msra.mxu0 0
    %918 = vmatprep.subr.bf16.mxu0 0
    %919 = vmatpush1.bf16.msra.mxu0 0
    %920 = vmatprep.subr.bf16.mxu0 0
    %921 = vmatpush1.bf16.msra.mxu0 0
    %922 = vmatprep.subr.bf16.mxu0 0
    %923 = vmatpush1.bf16.msra.mxu0 0
    %924 = vmatprep.subr.bf16.mxu0 0
    %925 = vmatpush1.bf16.msra.mxu0 0
    %926 = vmatprep.subr.bf16.mxu0 0
    %927 = vmatpush1.bf16.msra.mxu0 0
    %928 = vmatprep.mubr.bf16.mxu0 0
    %929 = vmatmul.mubr.bf16.gmra.mrb[0].mxu0 %v894
    %v930 = vpop.f32.mrb[0].mxu0
    %v931 = vadd.f32 0.0, %v930
    %v932 = vpop.f32.mrb[0].mxu0
    %v933 = vadd.f32 0.0, %v932
    %v934 = vpop.f32.mrb[0].mxu0
    %v935 = vpop.f32.mrb[0].mxu0
    %936 = vdwg.mxu0
    %v937 = vadd.f32 %v887, %v931
    %v938 = vadd.f32 %v888, %v933
    %v939 = vld [vmem:[#allocation2 + $0x50] sm:$0xff]
    %v940 = vld [vmem:[#allocation2 + $0x58] sm:$0xff]
    %v941 = vpack.c.bf16 %v876, %v876
    %943 = vrot.lane.b32.xlu0 %v941, 64
    %v944 = vpop.permute.xlu0 %943
    %v946 = vsel %vm355, %v944, 0
    %948 = vmatprep.subr.bf16.mxu0 %v429
    %949 = vmatpush1.bf16.msra.mxu0 %v428
    %950 = vmatprep.subr.bf16.mxu0 %v431
    %951 = vmatpush1.bf16.msra.mxu0 %v430
    %952 = vmatprep.subr.bf16.mxu0 %v433
    %953 = vmatpush1.bf16.msra.mxu0 %v432
    %954 = vmatprep.subr.bf16.mxu0 %v435
    %955 = vmatpush1.bf16.msra.mxu0 %v434
    %956 = vmatprep.subr.bf16.mxu0 0
    %957 = vmatpush1.bf16.msra.mxu0 0
    %958 = vmatprep.subr.bf16.mxu0 0
    %959 = vmatpush1.bf16.msra.mxu0 0
    %960 = vmatprep.subr.bf16.mxu0 0
    %961 = vmatpush1.bf16.msra.mxu0 0
    %962 = vmatprep.subr.bf16.mxu0 0
    %963 = vmatpush1.bf16.msra.mxu0 0
    %964 = vmatprep.subr.bf16.mxu0 0
    %965 = vmatpush1.bf16.msra.mxu0 0
    %966 = vmatprep.subr.bf16.mxu0 0
    %967 = vmatpush1.bf16.msra.mxu0 0
    %968 = vmatprep.subr.bf16.mxu0 0
    %969 = vmatpush1.bf16.msra.mxu0 0
    %970 = vmatprep.subr.bf16.mxu0 0
    %971 = vmatpush1.bf16.msra.mxu0 0
    %972 = vmatprep.subr.bf16.mxu0 0
    %973 = vmatpush1.bf16.msra.mxu0 0
    %974 = vmatprep.subr.bf16.mxu0 0
    %975 = vmatpush1.bf16.msra.mxu0 0
    %976 = vmatprep.subr.bf16.mxu0 0
    %977 = vmatpush1.bf16.msra.mxu0 0
    %978 = vmatprep.subr.bf16.mxu0 0
    %979 = vmatpush1.bf16.msra.mxu0 0
    %980 = vmatprep.mubr.bf16.mxu0 0
    %981 = vmatmul.mubr.bf16.gmra.mrb[0].mxu0 %v946
    %v982 = vpop.f32.mrb[0].mxu0
    %v983 = vadd.f32 0.0, %v982
    %v984 = vpop.f32.mrb[0].mxu0
    %v985 = vadd.f32 0.0, %v984
    %v986 = vpop.f32.mrb[0].mxu0
    %v987 = vpop.f32.mrb[0].mxu0
    %988 = vdwg.mxu0
    %v989 = vadd.f32 %v939, %v983
    %v990 = vadd.f32 %v940, %v985
    %v991 = vxor.u32 %v937, 2147483648
    %v992 = vxor.u32 %v938, 2147483648
    %v993 = vxor.u32 %v989, 2147483648
    %v994 = vxor.u32 %v990, 2147483648
    %v995 = vmul.f32 %v991, 1.442695
    %v996 = vpow.pop %v995
    %v997 = vmul.f32 %v992, 1.442695
    %v998 = vpow.pop %v997
    %v999 = vmul.f32 %v993, 1.442695
    %v1000 = vpow.pop %v999
    %v1001 = vmul.f32 %v994, 1.442695
    %v1002 = vpow.pop %v1001
    %v1003 = vadd.f32 %v996, 1.0
    %v1004 = vadd.f32 %v998, 1.0
    %v1005 = vadd.f32 %v1000, 1.0
    %v1006 = vadd.f32 %v1002, 1.0
    %v1007 = vrcp.pop %v1003
    %v1008 = vmul.f32 1.0, %v1007
    %v1009 = vrcp.pop %v1004
    %v1010 = vmul.f32 1.0, %v1009
    %v1011 = vrcp.pop %v1005
    %v1012 = vmul.f32 1.0, %v1011
    %v1013 = vrcp.pop %v1006
    %v1014 = vmul.f32 1.0, %v1013
    %v1015 = vmul.f32 %v1008, 2.0
    %v1016 = vmul.f32 %v1010, 2.0
    %v1017 = vmul.f32 %v1012, 2.0
    %v1018 = vmul.f32 %v1014, 2.0
    %v1019 = vsub.f32 %v1015, 1.0
    %v1020 = vsub.f32 %v1016, 1.0
    %v1021 = vsub.f32 %v1017, 1.0
    %v1022 = vsub.f32 %v1018, 1.0
    %v1023 = vsel %vm79, %v1019, %v1008
    %v1024 = vsel %vm80, %v1020, %v1010
    %v1025 = vsel %vm79, %v1021, %v1012
    %v1026 = vsel %vm80, %v1022, %v1014
    %v1027 = vmul.f32 %v1023, %v871
    %v1028 = vmul.f32 %v1025, %v872
    %v1029 = vmul.f32 %v1023, %v1024
    %v1030 = vmul.f32 %v1025, %v1026
    %1033 = vrot.lane.b32.xlu0 %v1029, 64
    %v1034 = vpop.permute.xlu0 %1033
    %1035 = vrot.lane.b32.xlu0 %v1030, 64
    %v1036 = vpop.permute.xlu0 %1035
    %v1039 = vadd.f32 %v1027, %v1034
    %v1040 = vadd.f32 %v1028, %v1036
    %v1041 = vtanh.pop %v1039
    %v1042 = vtanh.pop %v1040
    %v1043 = vmul.f32 %v1024, %v1041
    %v1044 = vmul.f32 %v1026, %v1042
    %1046 = vrot.lane.b32.xlu0 %v1043, 64
    %v1047 = vpop.permute.xlu0 %1046
    %1049 = vst.msk [vmem:[#allocation3 + $0x18] sm:$0xff] %vm355, %v1047
    %1051 = vrot.lane.b32.xlu0 %v1044, 64
    %v1052 = vpop.permute.xlu0 %1051
    %1054 = vst.msk [vmem:[#allocation4 + $0x10] sm:$0xff] %vm355, %v1052
    %v1055 = vld [vmem:[#allocation2 + $0x80] sm:$0xff]
    %v1056 = vld [vmem:[#allocation2 + $0x88] sm:$0xff]
    %v1057 = vpack.c.bf16 %v1043, %v1043
    %1059 = vrot.lane.b32.xlu0 %v1057, 64
    %v1060 = vpop.permute.xlu0 %1059
    %v1062 = vsel %vm355, %v1060, 0
    %1064 = vmatprep.subr.bf16.mxu0 %v340
    %1065 = vmatpush1.bf16.msra.mxu0 %v339
    %1066 = vmatprep.subr.bf16.mxu0 %v342
    %1067 = vmatpush1.bf16.msra.mxu0 %v341
    %1068 = vmatprep.subr.bf16.mxu0 %v344
    %1069 = vmatpush1.bf16.msra.mxu0 %v343
    %1070 = vmatprep.subr.bf16.mxu0 %v346
    %1071 = vmatpush1.bf16.msra.mxu0 %v345
    %1072 = vmatprep.subr.bf16.mxu0 0
    %1073 = vmatpush1.bf16.msra.mxu0 0
    %1074 = vmatprep.subr.bf16.mxu0 0
    %1075 = vmatpush1.bf16.msra.mxu0 0
    %1076 = vmatprep.subr.bf16.mxu0 0
    %1077 = vmatpush1.bf16.msra.mxu0 0
    %1078 = vmatprep.subr.bf16.mxu0 0
    %1079 = vmatpush1.bf16.msra.mxu0 0
    %1080 = vmatprep.subr.bf16.mxu0 0
    %1081 = vmatpush1.bf16.msra.mxu0 0
    %1082 = vmatprep.subr.bf16.mxu0 0
    %1083 = vmatpush1.bf16.msra.mxu0 0
    %1084 = vmatprep.subr.bf16.mxu0 0
    %1085 = vmatpush1.bf16.msra.mxu0 0
    %1086 = vmatprep.subr.bf16.mxu0 0
    %1087 = vmatpush1.bf16.msra.mxu0 0
    %1088 = vmatprep.subr.bf16.mxu0 0
    %1089 = vmatpush1.bf16.msra.mxu0 0
    %1090 = vmatprep.subr.bf16.mxu0 0
    %1091 = vmatpush1.bf16.msra.mxu0 0
    %1092 = vmatprep.subr.bf16.mxu0 0
    %1093 = vmatpush1.bf16.msra.mxu0 0
    %1094 = vmatprep.subr.bf16.mxu0 0
    %1095 = vmatpush1.bf16.msra.mxu0 0
    %1096 = vmatprep.mubr.bf16.mxu0 0
    %1097 = vmatmul.mubr.bf16.gmra.mrb[0].mxu0 %v1062
    %v1098 = vpop.f32.mrb[0].mxu0
    %v1099 = vadd.f32 0.0, %v1098
    %v1100 = vpop.f32.mrb[0].mxu0
    %v1101 = vadd.f32 0.0, %v1100
    %v1102 = vpop.f32.mrb[0].mxu0
    %v1103 = vpop.f32.mrb[0].mxu0
    %1104 = vdwg.mxu0
    %v1105 = vadd.f32 %v1055, %v1099
    %v1106 = vadd.f32 %v1056, %v1101
    %v1107 = vld [vmem:[#allocation2 + $0x30] sm:$0xff]
    %v1108 = vld [vmem:[#allocation2 + $0x38] sm:$0xff]
    %v1109 = vpack.c.bf16 %v1044, %v1044
    %1111 = vrot.lane.b32.xlu0 %v1109, 64
    %v1112 = vpop.permute.xlu0 %1111
    %v1114 = vsel %vm355, %v1112, 0
    %1116 = vmatprep.subr.bf16.mxu0 %v429
    %1117 = vmatpush1.bf16.msra.mxu0 %v428
    %1118 = vmatprep.subr.bf16.mxu0 %v431
    %1119 = vmatpush1.bf16.msra.mxu0 %v430
    %1120 = vmatprep.subr.bf16.mxu0 %v433
    %1121 = vmatpush1.bf16.msra.mxu0 %v432
    %1122 = vmatprep.subr.bf16.mxu0 %v435
    %1123 = vmatpush1.bf16.msra.mxu0 %v434
    %1124 = vmatprep.subr.bf16.mxu0 0
    %1125 = vmatpush1.bf16.msra.mxu0 0
    %1126 = vmatprep.subr.bf16.mxu0 0
    %1127 = vmatpush1.bf16.msra.mxu0 0
    %1128 = vmatprep.subr.bf16.mxu0 0
    %1129 = vmatpush1.bf16.msra.mxu0 0
    %1130 = vmatprep.subr.bf16.mxu0 0
    %1131 = vmatpush1.bf16.msra.mxu0 0
    %1132 = vmatprep.subr.bf16.mxu0 0
    %1133 = vmatpush1.bf16.msra.mxu0 0
    %1134 = vmatprep.subr.bf16.mxu0 0
    %1135 = vmatpush1.bf16.msra.mxu0 0
    %1136 = vmatprep.subr.bf16.mxu0 0
    %1137 = vmatpush1.bf16.msra.mxu0 0
    %1138 = vmatprep.subr.bf16.mxu0 0
    %1139 = vmatpush1.bf16.msra.mxu0 0
    %1140 = vmatprep.subr.bf16.mxu0 0
    %1141 = vmatpush1.bf16.msra.mxu0 0
    %1142 = vmatprep.subr.bf16.mxu0 0
    %1143 = vmatpush1.bf16.msra.mxu0 0
    %1144 = vmatprep.subr.bf16.mxu0 0
    %1145 = vmatpush1.bf16.msra.mxu0 0
    %1146 = vmatprep.subr.bf16.mxu0 0
    %1147 = vmatpush1.bf16.msra.mxu0 0
    %1148 = vmatprep.mubr.bf16.mxu0 0
    %1149 = vmatmul.mubr.bf16.gmra.mrb[0].mxu0 %v1114
    %v1150 = vpop.f32.mrb[0].mxu0
    %v1151 = vadd.f32 0.0, %v1150
    %v1152 = vpop.f32.mrb[0].mxu0
    %v1153 = vadd.f32 0.0, %v1152
    %v1154 = vpop.f32.mrb[0].mxu0
    %v1155 = vpop.f32.mrb[0].mxu0
    %1156 = vdwg.mxu0
    %v1157 = vadd.f32 %v1107, %v1151
    %v1158 = vadd.f32 %v1108, %v1153
    %v1159 = vxor.u32 %v1105, 2147483648
    %v1160 = vxor.u32 %v1106, 2147483648
    %v1161 = vxor.u32 %v1157, 2147483648
    %v1162 = vxor.u32 %v1158, 2147483648
    %v1163 = vmul.f32 %v1159, 1.442695
    %v1164 = vpow.pop %v1163
    %v1165 = vmul.f32 %v1160, 1.442695
    %v1166 = vpow.pop %v1165
    %v1167 = vmul.f32 %v1161, 1.442695
    %v1168 = vpow.pop %v1167
    %v1169 = vmul.f32 %v1162, 1.442695
    %v1170 = vpow.pop %v1169
    %v1171 = vadd.f32 %v1164, 1.0
    %v1172 = vadd.f32 %v1166, 1.0
    %v1173 = vadd.f32 %v1168, 1.0
    %v1174 = vadd.f32 %v1170, 1.0
    %v1175 = vrcp.pop %v1171
    %v1176 = vmul.f32 1.0, %v1175
    %v1177 = vrcp.pop %v1172
    %v1178 = vmul.f32 1.0, %v1177
    %v1179 = vrcp.pop %v1173
    %v1180 = vmul.f32 1.0, %v1179
    %v1181 = vrcp.pop %v1174
    %v1182 = vmul.f32 1.0, %v1181
    %v1183 = vmul.f32 %v1176, 2.0
    %v1184 = vmul.f32 %v1178, 2.0
    %v1185 = vmul.f32 %v1180, 2.0
    %v1186 = vmul.f32 %v1182, 2.0
    %v1187 = vsub.f32 %v1183, 1.0
    %v1188 = vsub.f32 %v1184, 1.0
    %v1189 = vsub.f32 %v1185, 1.0
    %v1190 = vsub.f32 %v1186, 1.0
    %v1191 = vsel %vm79, %v1187, %v1176
    %v1192 = vsel %vm80, %v1188, %v1178
    %v1193 = vsel %vm79, %v1189, %v1180
    %v1194 = vsel %vm80, %v1190, %v1182
    %v1195 = vmul.f32 %v1191, %v1039
    %v1196 = vmul.f32 %v1193, %v1040
    %v1197 = vmul.f32 %v1191, %v1192
    %v1198 = vmul.f32 %v1193, %v1194
    %1201 = vrot.lane.b32.xlu0 %v1197, 64
    %v1202 = vpop.permute.xlu0 %1201
    %1203 = vrot.lane.b32.xlu0 %v1198, 64
    %v1204 = vpop.permute.xlu0 %1203
    %v1207 = vadd.f32 %v1195, %v1202
    %v1208 = vadd.f32 %v1196, %v1204
    %v1209 = vtanh.pop %v1207
    %v1210 = vtanh.pop %v1208
    %v1211 = vmul.f32 %v1192, %v1209
    %v1212 = vmul.f32 %v1194, %v1210
    %1214 = vrot.lane.b32.xlu0 %v1211, 64
    %v1215 = vpop.permute.xlu0 %1214
    %1217 = vst.msk [vmem:[#allocation3 + $0x20] sm:$0xff] %vm355, %v1215
    %1219 = vrot.lane.b32.xlu0 %v1212, 64
    %v1220 = vpop.permute.xlu0 %1219
    %1222 = vst.msk [vmem:[#allocation4 + $0x8] sm:$0xff] %vm355, %v1220
    %v1223 = vld [vmem:[#allocation2 + $0xa0] sm:$0xff]
    %v1224 = vld [vmem:[#allocation2 + $0xa8] sm:$0xff]
    %v1225 = vpack.c.bf16 %v1211, %v1211
    %1227 = vrot.lane.b32.xlu0 %v1225, 64
    %v1228 = vpop.permute.xlu0 %1227
    %v1230 = vsel %vm355, %v1228, 0
    %1232 = vmatprep.subr.bf16.mxu0 %v340
    %1233 = vmatpush1.bf16.msra.mxu0 %v339
    %1234 = vmatprep.subr.bf16.mxu0 %v342
    %1235 = vmatpush1.bf16.msra.mxu0 %v341
    %1236 = vmatprep.subr.bf16.mxu0 %v344
    %1237 = vmatpush1.bf16.msra.mxu0 %v343
    %1238 = vmatprep.subr.bf16.mxu0 %v346
    %1239 = vmatpush1.bf16.msra.mxu0 %v345
    %1240 = vmatprep.subr.bf16.mxu0 0
    %1241 = vmatpush1.bf16.msra.mxu0 0
    %1242 = vmatprep.subr.bf16.mxu0 0
    %1243 = vmatpush1.bf16.msra.mxu0 0
    %1244 = vmatprep.subr.bf16.mxu0 0
    %1245 = vmatpush1.bf16.msra.mxu0 0
    %1246 = vmatprep.subr.bf16.mxu0 0
    %1247 = vmatpush1.bf16.msra.mxu0 0
    %1248 = vmatprep.subr.bf16.mxu0 0
    %1249 = vmatpush1.bf16.msra.mxu0 0
    %1250 = vmatprep.subr.bf16.mxu0 0
    %1251 = vmatpush1.bf16.msra.mxu0 0
    %1252 = vmatprep.subr.bf16.mxu0 0
    %1253 = vmatpush1.bf16.msra.mxu0 0
    %1254 = vmatprep.subr.bf16.mxu0 0
    %1255 = vmatpush1.bf16.msra.mxu0 0
    %1256 = vmatprep.subr.bf16.mxu0 0
    %1257 = vmatpush1.bf16.msra.mxu0 0
    %1258 = vmatprep.subr.bf16.mxu0 0
    %1259 = vmatpush1.bf16.msra.mxu0 0
    %1260 = vmatprep.subr.bf16.mxu0 0
    %1261 = vmatpush1.bf16.msra.mxu0 0
    %1262 = vmatprep.subr.bf16.mxu0 0
    %1263 = vmatpush1.bf16.msra.mxu0 0
    %1264 = vmatprep.mubr.bf16.mxu0 0
    %1265 = vmatmul.mubr.bf16.gmra.mrb[0].mxu0 %v1230
    %v1266 = vpop.f32.mrb[0].mxu0
    %v1267 = vadd.f32 0.0, %v1266
    %v1268 = vpop.f32.mrb[0].mxu0
    %v1269 = vadd.f32 0.0, %v1268
    %v1270 = vpop.f32.mrb[0].mxu0
    %v1271 = vpop.f32.mrb[0].mxu0
    %1272 = vdwg.mxu0
    %v1273 = vadd.f32 %v1223, %v1267
    %v1274 = vadd.f32 %v1224, %v1269
    %v1275 = vld [vmem:[#allocation2 + $0x10] sm:$0xff]
    %v1276 = vld [vmem:[#allocation2 + $0x18] sm:$0xff]
    %v1277 = vpack.c.bf16 %v1212, %v1212
    %1279 = vrot.lane.b32.xlu0 %v1277, 64
    %v1280 = vpop.permute.xlu0 %1279
    %v1282 = vsel %vm355, %v1280, 0
    %1284 = vmatprep.subr.bf16.mxu0 %v429
    %1285 = vmatpush1.bf16.msra.mxu0 %v428
    %1286 = vmatprep.subr.bf16.mxu0 %v431
    %1287 = vmatpush1.bf16.msra.mxu0 %v430
    %1288 = vmatprep.subr.bf16.mxu0 %v433
    %1289 = vmatpush1.bf16.msra.mxu0 %v432
    %1290 = vmatprep.subr.bf16.mxu0 %v435
    %1291 = vmatpush1.bf16.msra.mxu0 %v434
    %1292 = vmatprep.subr.bf16.mxu0 0
    %1293 = vmatpush1.bf16.msra.mxu0 0
    %1294 = vmatprep.subr.bf16.mxu0 0
    %1295 = vmatpush1.bf16.msra.mxu0 0
    %1296 = vmatprep.subr.bf16.mxu0 0
    %1297 = vmatpush1.bf16.msra.mxu0 0
    %1298 = vmatprep.subr.bf16.mxu0 0
    %1299 = vmatpush1.bf16.msra.mxu0 0
    %1300 = vmatprep.subr.bf16.mxu0 0
    %1301 = vmatpush1.bf16.msra.mxu0 0
    %1302 = vmatprep.subr.bf16.mxu0 0
    %1303 = vmatpush1.bf16.msra.mxu0 0
    %1304 = vmatprep.subr.bf16.mxu0 0
    %1305 = vmatpush1.bf16.msra.mxu0 0
    %1306 = vmatprep.subr.bf16.mxu0 0
    %1307 = vmatpush1.bf16.msra.mxu0 0
    %1308 = vmatprep.subr.bf16.mxu0 0
    %1309 = vmatpush1.bf16.msra.mxu0 0
    %1310 = vmatprep.subr.bf16.mxu0 0
    %1311 = vmatpush1.bf16.msra.mxu0 0
    %1312 = vmatprep.subr.bf16.mxu0 0
    %1313 = vmatpush1.bf16.msra.mxu0 0
    %1314 = vmatprep.subr.bf16.mxu0 0
    %1315 = vmatpush1.bf16.msra.mxu0 0
    %1316 = vmatprep.mubr.bf16.mxu0 0
    %1317 = vmatmul.mubr.bf16.gmra.mrb[0].mxu0 %v1282
    %v1318 = vpop.f32.mrb[0].mxu0
    %v1319 = vadd.f32 0.0, %v1318
    %v1320 = vpop.f32.mrb[0].mxu0
    %v1321 = vadd.f32 0.0, %v1320
    %v1322 = vpop.f32.mrb[0].mxu0
    %v1323 = vpop.f32.mrb[0].mxu0
    %1324 = vdwg.mxu0
    %v1325 = vadd.f32 %v1275, %v1319
    %v1326 = vadd.f32 %v1276, %v1321
    %v1327 = vxor.u32 %v1273, 2147483648
    %v1328 = vxor.u32 %v1274, 2147483648
    %v1329 = vxor.u32 %v1325, 2147483648
    %v1330 = vxor.u32 %v1326, 2147483648
    %v1331 = vmul.f32 %v1327, 1.442695
    %v1332 = vpow.pop %v1331
    %v1333 = vmul.f32 %v1328, 1.442695
    %v1334 = vpow.pop %v1333
    %v1335 = vmul.f32 %v1329, 1.442695
    %v1336 = vpow.pop %v1335
    %v1337 = vmul.f32 %v1330, 1.442695
    %v1338 = vpow.pop %v1337
    %v1339 = vadd.f32 %v1332, 1.0
    %v1340 = vadd.f32 %v1334, 1.0
    %v1341 = vadd.f32 %v1336, 1.0
    %v1342 = vadd.f32 %v1338, 1.0
    %v1343 = vrcp.pop %v1339
    %v1344 = vmul.f32 1.0, %v1343
    %v1345 = vrcp.pop %v1340
    %v1346 = vmul.f32 1.0, %v1345
    %v1347 = vrcp.pop %v1341
    %v1348 = vmul.f32 1.0, %v1347
    %v1349 = vrcp.pop %v1342
    %v1350 = vmul.f32 1.0, %v1349
    %v1351 = vmul.f32 %v1344, 2.0
    %v1352 = vmul.f32 %v1346, 2.0
    %v1353 = vmul.f32 %v1348, 2.0
    %v1354 = vmul.f32 %v1350, 2.0
    %v1355 = vsub.f32 %v1351, 1.0
    %v1356 = vsub.f32 %v1352, 1.0
    %v1357 = vsub.f32 %v1353, 1.0
    %v1358 = vsub.f32 %v1354, 1.0
    %v1359 = vsel %vm79, %v1355, %v1344
    %v1360 = vsel %vm80, %v1356, %v1346
    %v1361 = vsel %vm79, %v1357, %v1348
    %v1362 = vsel %vm80, %v1358, %v1350
    %v1363 = vmul.f32 %v1359, %v1207
    %v1364 = vmul.f32 %v1361, %v1208
    %v1365 = vmul.f32 %v1359, %v1360
    %v1366 = vmul.f32 %v1361, %v1362
    %1369 = vrot.lane.b32.xlu0 %v1365, 64
    %v1370 = vpop.permute.xlu0 %1369
    %1371 = vrot.lane.b32.xlu0 %v1366, 64
    %v1372 = vpop.permute.xlu0 %1371
    %v1375 = vadd.f32 %v1363, %v1370
    %v1376 = vadd.f32 %v1364, %v1372
    %v1377 = vtanh.pop %v1375
    %v1378 = vtanh.pop %v1376
    %v1379 = vmul.f32 %v1360, %v1377
    %v1380 = vmul.f32 %v1362, %v1378
    %1382 = vrot.lane.b32.xlu0 %v1379, 64
    %v1383 = vpop.permute.xlu0 %1382
    %1385 = vst.msk [vmem:[#allocation3 + $0x28] sm:$0xff] %vm355, %v1383
    %1387 = vrot.lane.b32.xlu0 %v1380, 64
    %v1388 = vpop.permute.xlu0 %1387
    %1390 = vst.msk [vmem:[#allocation4] sm:$0xff] %vm355, %v1388
    %v1391 = vld [vmem:[#allocation7] sm:$0xff]
    %v1392 = vld [vmem:[#allocation7 + $0x8] sm:$0xff]
    %v1393 = vld [vmem:[#allocation7 + $0x10] sm:$0xff]
    %v1394 = vld [vmem:[#allocation7 + $0x18] sm:$0xff]
    %v1395 = vld [vmem:[#allocation7 + $0x20] sm:$0xff]
    %v1396 = vld [vmem:[#allocation7 + $0x28] sm:$0xff]
    %v1397 = vld [vmem:[#allocation7 + $0x30] sm:$0xff]
    %v1398 = vld [vmem:[#allocation7 + $0x38] sm:$0xff]
    %v1399 = vld [vmem:[#allocation7 + $0x40] sm:$0xff]
    %v1400 = vld [vmem:[#allocation7 + $0x48] sm:$0xff]
    %v1401 = vld [vmem:[#allocation7 + $0x50] sm:$0xff]
    %v1402 = vld [vmem:[#allocation7 + $0x58] sm:$0xff]
    %v1403 = vld [vmem:[#allocation7 + $0x60] sm:$0xff]
    %v1404 = vld [vmem:[#allocation7 + $0x68] sm:$0xff]
    %v1405 = vld [vmem:[#allocation7 + $0x70] sm:$0xff]
    %v1406 = vld [vmem:[#allocation7 + $0x78] sm:$0xff]
    %v1407 = vld [vmem:[#allocation7 + $0x80] sm:$0xff]
    %v1408 = vld [vmem:[#allocation7 + $0x88] sm:$0xff]
    %v1409 = vld [vmem:[#allocation7 + $0x90] sm:$0xff]
    %v1410 = vld [vmem:[#allocation7 + $0x98] sm:$0xff]
    %v1411 = vld [vmem:[#allocation7 + $0xa0] sm:$0xff]
    %v1412 = vld [vmem:[#allocation7 + $0xa8] sm:$0xff]
    %v1413 = vld [vmem:[#allocation7 + $0xb0] sm:$0xff]
    %v1414 = vld [vmem:[#allocation7 + $0xb8] sm:$0xff]
    %v1415 = vld [vmem:[#allocation7 + $0xc0] sm:$0xff]
    %v1416 = vld [vmem:[#allocation7 + $0xc8] sm:$0xff]
    %v1417 = vld [vmem:[#allocation7 + $0xd0] sm:$0xff]
    %v1418 = vld [vmem:[#allocation7 + $0xd8] sm:$0xff]
    %v1419 = vld [vmem:[#allocation7 + $0xe0] sm:$0xff]
    %v1420 = vld [vmem:[#allocation7 + $0xe8] sm:$0xff]
    %v1421 = vld [vmem:[#allocation7 + $0xf0] sm:$0xff]
    %v1422 = vld [vmem:[#allocation7 + $0xf8] sm:$0xff]
    %v1423 = vld [vmem:[#allocation3] sm:$0xff]
    %v1424 = vld [vmem:[#allocation3 + $0x8] sm:$0xff]
    %v1425 = vld [vmem:[#allocation3 + $0x10] sm:$0xff]
    %v1426 = vld [vmem:[#allocation3 + $0x18] sm:$0xff]
    %v1427 = vld [vmem:[#allocation3 + $0x20] sm:$0xff]
    %v1428 = vld [vmem:[#allocation3 + $0x28] sm:$0xff]
    %v1429 = vpack.c.bf16 %v1424, %v1423
    %v1430 = vpack.c.bf16 %v1426, %v1425
    %v1431 = vpack.c.bf16 %v1428, %v1427
    %v1432 = vld [vmem:[#allocation4] sm:$0xff]
    %v1433 = vld [vmem:[#allocation4 + $0x8] sm:$0xff]
    %v1434 = vld [vmem:[#allocation4 + $0x10] sm:$0xff]
    %v1435 = vld [vmem:[#allocation4 + $0x18] sm:$0xff]
    %v1436 = vld [vmem:[#allocation4 + $0x20] sm:$0xff]
    %v1437 = vld [vmem:[#allocation4 + $0x28] sm:$0xff]
    %v1438 = vpack.c.bf16 %v1433, %v1432
    %v1439 = vpack.c.bf16 %v1435, %v1434
    %v1440 = vpack.c.bf16 %v1437, %v1436
    %v1457 = vunpack.c.l.b16 %v1407
    %v1458 = vunpack.c.h.b16 %v1407
    %v1459 = vunpack.c.l.b16 %v1408
    %v1460 = vunpack.c.h.b16 %v1408
    %v1461 = vunpack.c.l.b16 %v1409
    %v1462 = vunpack.c.h.b16 %v1409
    %v1463 = vunpack.c.l.b16 %v1410
    %v1464 = vunpack.c.h.b16 %v1410
    %v1465 = vunpack.c.l.b16 %v1411
    %v1466 = vunpack.c.h.b16 %v1411
    %v1467 = vunpack.c.l.b16 %v1412
    %v1468 = vunpack.c.h.b16 %v1412
    %v1469 = vunpack.c.l.b16 %v1413
    %v1470 = vunpack.c.h.b16 %v1413
    %v1471 = vunpack.c.l.b16 %v1414
    %v1472 = vunpack.c.h.b16 %v1414
    %v1473 = vunpack.c.l.b16 %v1415
    %v1474 = vunpack.c.h.b16 %v1415
    %v1475 = vunpack.c.l.b16 %v1416
    %v1476 = vunpack.c.h.b16 %v1416
    %v1477 = vunpack.c.l.b16 %v1417
    %v1478 = vunpack.c.h.b16 %v1417
    %v1479 = vunpack.c.l.b16 %v1418
    %v1480 = vunpack.c.h.b16 %v1418
    %v1481 = vunpack.c.l.b16 %v1419
    %v1482 = vunpack.c.h.b16 %v1419
    %v1483 = vunpack.c.l.b16 %v1420
    %v1484 = vunpack.c.h.b16 %v1420
    %v1485 = vunpack.c.l.b16 %v1421
    %v1486 = vunpack.c.h.b16 %v1421
    %v1487 = vunpack.c.l.b16 %v1422
    %v1488 = vunpack.c.h.b16 %v1422
    %v1489 = vpack.c.b16 %v1461, %v1457
    %v1490 = vpack.c.b16 %v1462, %v1458
    %v1491 = vpack.c.b16 %v1463, %v1459
    %v1492 = vpack.c.b16 %v1464, %v1460
    %v1493 = vpack.c.b16 %v1469, %v1465
    %v1494 = vpack.c.b16 %v1470, %v1466
    %v1495 = vpack.c.b16 %v1471, %v1467
    %v1496 = vpack.c.b16 %v1472, %v1468
    %v1497 = vpack.c.b16 %v1477, %v1473
    %v1498 = vpack.c.b16 %v1478, %v1474
    %v1499 = vpack.c.b16 %v1479, %v1475
    %v1500 = vpack.c.b16 %v1480, %v1476
    %v1501 = vpack.c.b16 %v1485, %v1481
    %v1502 = vpack.c.b16 %v1486, %v1482
    %v1503 = vpack.c.b16 %v1487, %v1483
    %v1504 = vpack.c.b16 %v1488, %v1484
    %v1522 = vsel %vm355, %v1438, 0
    %v1525 = vsel %vm355, %v1439, 0
    %v1528 = vsel %vm355, %v1440, 0
    %1530 = vmatprep.subr.bf16.mxu0 %v1490
    %1531 = vmatpush1.bf16.msra.mxu0 %v1489
    %1532 = vmatprep.subr.bf16.mxu0 %v1494
    %1533 = vmatpush1.bf16.msra.mxu0 %v1493
    %1534 = vmatprep.subr.bf16.mxu0 %v1498
    %1535 = vmatpush1.bf16.msra.mxu0 %v1497
    %1536 = vmatprep.subr.bf16.mxu0 %v1502
    %1537 = vmatpush1.bf16.msra.mxu0 %v1501
    %1538 = vmatprep.subr.bf16.mxu0 0
    %1539 = vmatpush1.bf16.msra.mxu0 0
    %1540 = vmatprep.subr.bf16.mxu0 0
    %1541 = vmatpush1.bf16.msra.mxu0 0
    %1542 = vmatprep.subr.bf16.mxu0 0
    %1543 = vmatpush1.bf16.msra.mxu0 0
    %1544 = vmatprep.subr.bf16.mxu0 0
    %1545 = vmatpush1.bf16.msra.mxu0 0
    %1546 = vmatprep.subr.bf16.mxu0 0
    %1547 = vmatpush1.bf16.msra.mxu0 0
    %1548 = vmatprep.subr.bf16.mxu0 0
    %1549 = vmatpush1.bf16.msra.mxu0 0
    %1550 = vmatprep.subr.bf16.mxu0 0
    %1551 = vmatpush1.bf16.msra.mxu0 0
    %1552 = vmatprep.subr.bf16.mxu0 0
    %1553 = vmatpush1.bf16.msra.mxu0 0
    %1554 = vmatprep.subr.bf16.mxu0 0
    %1555 = vmatpush1.bf16.msra.mxu0 0
    %1556 = vmatprep.subr.bf16.mxu0 0
    %1557 = vmatpush1.bf16.msra.mxu0 0
    %1558 = vmatprep.subr.bf16.mxu0 0
    %1559 = vmatpush1.bf16.msra.mxu0 0
    %1560 = vmatprep.subr.bf16.mxu0 0
    %1561 = vmatpush1.bf16.msra.mxu0 0
    %1562 = vmatprep.mubr.bf16.mxu0 0
    %1563 = vmatmul.mubr.bf16.gmra.mrb[0].mxu0 %v1522
    %v1564 = vpop.f32.mrb[0].mxu0
    %v1565 = vadd.f32 0.0, %v1564
    %v1566 = vpop.f32.mrb[0].mxu0
    %v1567 = vadd.f32 0.0, %v1566
    %v1568 = vpop.f32.mrb[0].mxu0
    %v1569 = vadd.f32 0.0, %v1568
    %v1570 = vpop.f32.mrb[0].mxu0
    %v1571 = vadd.f32 0.0, %v1570
    %1572 = vmatprep.mubr.bf16.mxu0 0
    %1573 = vmatmul.mubr.bf16.gmra.mrb[0].mxu0 %v1525
    %v1574 = vpop.f32.mrb[0].mxu0
    %v1575 = vadd.f32 0.0, %v1574
    %v1576 = vpop.f32.mrb[0].mxu0
    %v1577 = vadd.f32 0.0, %v1576
    %v1578 = vpop.f32.mrb[0].mxu0
    %v1579 = vadd.f32 0.0, %v1578
    %v1580 = vpop.f32.mrb[0].mxu0
    %v1581 = vadd.f32 0.0, %v1580
    %1582 = vmatprep.mubr.bf16.mxu0 0
    %1583 = vmatmul.mubr.bf16.gmra.mrb[0].mxu0 %v1528
    %v1584 = vpop.f32.mrb[0].mxu0
    %v1585 = vadd.f32 0.0, %v1584
    %v1586 = vpop.f32.mrb[0].mxu0
    %v1587 = vadd.f32 0.0, %v1586
    %v1588 = vpop.f32.mrb[0].mxu0
    %v1589 = vadd.f32 0.0, %v1588
    %v1590 = vpop.f32.mrb[0].mxu0
    %v1591 = vadd.f32 0.0, %v1590
    %1592 = vdwg.mxu0
    %1593 = vmatprep.subr.bf16.mxu0 %v1492
    %1594 = vmatpush1.bf16.msra.mxu0 %v1491
    %1595 = vmatprep.subr.bf16.mxu0 %v1496
    %1596 = vmatpush1.bf16.msra.mxu0 %v1495
    %1597 = vmatprep.subr.bf16.mxu0 %v1500
    %1598 = vmatpush1.bf16.msra.mxu0 %v1499
    %1599 = vmatprep.subr.bf16.mxu0 %v1504
    %1600 = vmatpush1.bf16.msra.mxu0 %v1503
    %1601 = vmatprep.subr.bf16.mxu0 0
    %1602 = vmatpush1.bf16.msra.mxu0 0
    %1603 = vmatprep.subr.bf16.mxu0 0
    %1604 = vmatpush1.bf16.msra.mxu0 0
    %1605 = vmatprep.subr.bf16.mxu0 0
    %1606 = vmatpush1.bf16.msra.mxu0 0
    %1607 = vmatprep.subr.bf16.mxu0 0
    %1608 = vmatpush1.bf16.msra.mxu0 0
    %1609 = vmatprep.subr.bf16.mxu0 0
    %1610 = vmatpush1.bf16.msra.mxu0 0
    %1611 = vmatprep.subr.bf16.mxu0 0
    %1612 = vmatpush1.bf16.msra.mxu0 0
    %1613 = vmatprep.subr.bf16.mxu0 0
    %1614 = vmatpush1.bf16.msra.mxu0 0
    %1615 = vmatprep.subr.bf16.mxu0 0
    %1616 = vmatpush1.bf16.msra.mxu0 0
    %1617 = vmatprep.subr.bf16.mxu0 0
    %1618 = vmatpush1.bf16.msra.mxu0 0
    %1619 = vmatprep.subr.bf16.mxu0 0
    %1620 = vmatpush1.bf16.msra.mxu0 0
    %1621 = vmatprep.subr.bf16.mxu0 0
    %1622 = vmatpush1.bf16.msra.mxu0 0
    %1623 = vmatprep.subr.bf16.mxu0 0
    %1624 = vmatpush1.bf16.msra.mxu0 0
    %1625 = vmatprep.mubr.bf16.mxu0 0
    %1626 = vmatmul.mubr.bf16.gmra.mrb[0].mxu0 %v1522
    %v1627 = vpop.f32.mrb[0].mxu0
    %v1628 = vadd.f32 0.0, %v1627
    %v1629 = vpop.f32.mrb[0].mxu0
    %v1630 = vadd.f32 0.0, %v1629
    %v1631 = vpop.f32.mrb[0].mxu0
    %v1632 = vadd.f32 0.0, %v1631
    %v1633 = vpop.f32.mrb[0].mxu0
    %v1634 = vadd.f32 0.0, %v1633
    %1635 = vmatprep.mubr.bf16.mxu0 0
    %1636 = vmatmul.mubr.bf16.gmra.mrb[0].mxu0 %v1525
    %v1637 = vpop.f32.mrb[0].mxu0
    %v1638 = vadd.f32 0.0, %v1637
    %v1639 = vpop.f32.mrb[0].mxu0
    %v1640 = vadd.f32 0.0, %v1639
    %v1641 = vpop.f32.mrb[0].mxu0
    %v1642 = vadd.f32 0.0, %v1641
    %v1643 = vpop.f32.mrb[0].mxu0
    %v1644 = vadd.f32 0.0, %v1643
    %1645 = vmatprep.mubr.bf16.mxu0 0
    %1646 = vmatmul.mubr.bf16.gmra.mrb[0].mxu0 %v1528
    %v1647 = vpop.f32.mrb[0].mxu0
    %v1648 = vadd.f32 0.0, %v1647
    %v1649 = vpop.f32.mrb[0].mxu0
    %v1650 = vadd.f32 0.0, %v1649
    %v1651 = vpop.f32.mrb[0].mxu0
    %v1652 = vadd.f32 0.0, %v1651
    %v1653 = vpop.f32.mrb[0].mxu0
    %v1654 = vadd.f32 0.0, %v1653
    %1655 = vdwg.mxu0
    %v1672 = vunpack.c.l.b16 %v1391
    %v1673 = vunpack.c.h.b16 %v1391
    %v1674 = vunpack.c.l.b16 %v1392
    %v1675 = vunpack.c.h.b16 %v1392
    %v1676 = vunpack.c.l.b16 %v1393
    %v1677 = vunpack.c.h.b16 %v1393
    %v1678 = vunpack.c.l.b16 %v1394
    %v1679 = vunpack.c.h.b16 %v1394
    %v1680 = vunpack.c.l.b16 %v1395
    %v1681 = vunpack.c.h.b16 %v1395
    %v1682 = vunpack.c.l.b16 %v1396
    %v1683 = vunpack.c.h.b16 %v1396
    %v1684 = vunpack.c.l.b16 %v1397
    %v1685 = vunpack.c.h.b16 %v1397
    %v1686 = vunpack.c.l.b16 %v1398
    %v1687 = vunpack.c.h.b16 %v1398
    %v1688 = vunpack.c.l.b16 %v1399
    %v1689 = vunpack.c.h.b16 %v1399
    %v1690 = vunpack.c.l.b16 %v1400
    %v1691 = vunpack.c.h.b16 %v1400
    %v1692 = vunpack.c.l.b16 %v1401
    %v1693 = vunpack.c.h.b16 %v1401
    %v1694 = vunpack.c.l.b16 %v1402
    %v1695 = vunpack.c.h.b16 %v1402
    %v1696 = vunpack.c.l.b16 %v1403
    %v1697 = vunpack.c.h.b16 %v1403
    %v1698 = vunpack.c.l.b16 %v1404
    %v1699 = vunpack.c.h.b16 %v1404
    %v1700 = vunpack.c.l.b16 %v1405
    %v1701 = vunpack.c.h.b16 %v1405
    %v1702 = vunpack.c.l.b16 %v1406
    %v1703 = vunpack.c.h.b16 %v1406
    %v1704 = vpack.c.b16 %v1676, %v1672
    %v1705 = vpack.c.b16 %v1677, %v1673
    %v1706 = vpack.c.b16 %v1678, %v1674
    %v1707 = vpack.c.b16 %v1679, %v1675
    %v1708 = vpack.c.b16 %v1684, %v1680
    %v1709 = vpack.c.b16 %v1685, %v1681
    %v1710 = vpack.c.b16 %v1686, %v1682
    %v1711 = vpack.c.b16 %v1687, %v1683
    %v1712 = vpack.c.b16 %v1692, %v1688
    %v1713 = vpack.c.b16 %v1693, %v1689
    %v1714 = vpack.c.b16 %v1694, %v1690
    %v1715 = vpack.c.b16 %v1695, %v1691
    %v1716 = vpack.c.b16 %v1700, %v1696
    %v1717 = vpack.c.b16 %v1701, %v1697
    %v1718 = vpack.c.b16 %v1702, %v1698
    %v1719 = vpack.c.b16 %v1703, %v1699
    %v1737 = vsel %vm355, %v1429, 0
    %v1740 = vsel %vm355, %v1430, 0
    %v1743 = vsel %vm355, %v1431, 0
    %1745 = vmatprep.subr.bf16.mxu0 %v1705
    %1746 = vmatpush1.bf16.msra.mxu0 %v1704
    %1747 = vmatprep.subr.bf16.mxu0 %v1709
    %1748 = vmatpush1.bf16.msra.mxu0 %v1708
    %1749 = vmatprep.subr.bf16.mxu0 %v1713
    %1750 = vmatpush1.bf16.msra.mxu0 %v1712
    %1751 = vmatprep.subr.bf16.mxu0 %v1717
    %1752 = vmatpush1.bf16.msra.mxu0 %v1716
    %1753 = vmatprep.subr.bf16.mxu0 0
    %1754 = vmatpush1.bf16.msra.mxu0 0
    %1755 = vmatprep.subr.bf16.mxu0 0
    %1756 = vmatpush1.bf16.msra.mxu0 0
    %1757 = vmatprep.subr.bf16.mxu0 0
    %1758 = vmatpush1.bf16.msra.mxu0 0
    %1759 = vmatprep.subr.bf16.mxu0 0
    %1760 = vmatpush1.bf16.msra.mxu0 0
    %1761 = vmatprep.subr.bf16.mxu0 0
    %1762 = vmatpush1.bf16.msra.mxu0 0
    %1763 = vmatprep.subr.bf16.mxu0 0
    %1764 = vmatpush1.bf16.msra.mxu0 0
    %1765 = vmatprep.subr.bf16.mxu0 0
    %1766 = vmatpush1.bf16.msra.mxu0 0
    %1767 = vmatprep.subr.bf16.mxu0 0
    %1768 = vmatpush1.bf16.msra.mxu0 0
    %1769 = vmatprep.subr.bf16.mxu0 0
    %1770 = vmatpush1.bf16.msra.mxu0 0
    %1771 = vmatprep.subr.bf16.mxu0 0
    %1772 = vmatpush1.bf16.msra.mxu0 0
    %1773 = vmatprep.subr.bf16.mxu0 0
    %1774 = vmatpush1.bf16.msra.mxu0 0
    %1775 = vmatprep.subr.bf16.mxu0 0
    %1776 = vmatpush1.bf16.msra.mxu0 0
    %1777 = vmatprep.mubr.bf16.mxu0 0
    %1778 = vmatmul.mubr.bf16.gmra.mrb[0].mxu0 %v1737
    %v1779 = vpop.f32.mrb[0].mxu0
    %v1780 = vadd.f32 %v1565, %v1779
    %v1781 = vpop.f32.mrb[0].mxu0
    %v1782 = vadd.f32 %v1567, %v1781
    %v1783 = vpop.f32.mrb[0].mxu0
    %v1784 = vadd.f32 %v1569, %v1783
    %v1785 = vpop.f32.mrb[0].mxu0
    %v1786 = vadd.f32 %v1571, %v1785
    %1787 = vmatprep.mubr.bf16.mxu0 0
    %1788 = vmatmul.mubr.bf16.gmra.mrb[0].mxu0 %v1740
    %v1789 = vpop.f32.mrb[0].mxu0
    %v1790 = vadd.f32 %v1575, %v1789
    %v1791 = vpop.f32.mrb[0].mxu0
    %v1792 = vadd.f32 %v1577, %v1791
    %v1793 = vpop.f32.mrb[0].mxu0
    %v1794 = vadd.f32 %v1579, %v1793
    %v1795 = vpop.f32.mrb[0].mxu0
    %v1796 = vadd.f32 %v1581, %v1795
    %1797 = vmatprep.mubr.bf16.mxu0 0
    %1798 = vmatmul.mubr.bf16.gmra.mrb[0].mxu0 %v1743
    %v1799 = vpop.f32.mrb[0].mxu0
    %v1800 = vadd.f32 %v1585, %v1799
    %v1801 = vpop.f32.mrb[0].mxu0
    %v1802 = vadd.f32 %v1587, %v1801
    %v1803 = vpop.f32.mrb[0].mxu0
    %v1804 = vadd.f32 %v1589, %v1803
    %v1805 = vpop.f32.mrb[0].mxu0
    %v1806 = vadd.f32 %v1591, %v1805
    %1807 = vdwg.mxu0
    %1808 = vmatprep.subr.bf16.mxu0 %v1707
    %1809 = vmatpush1.bf16.msra.mxu0 %v1706
    %1810 = vmatprep.subr.bf16.mxu0 %v1711
    %1811 = vmatpush1.bf16.msra.mxu0 %v1710
    %1812 = vmatprep.subr.bf16.mxu0 %v1715
    %1813 = vmatpush1.bf16.msra.mxu0 %v1714
    %1814 = vmatprep.subr.bf16.mxu0 %v1719
    %1815 = vmatpush1.bf16.msra.mxu0 %v1718
    %1816 = vmatprep.subr.bf16.mxu0 0
    %1817 = vmatpush1.bf16.msra.mxu0 0
    %1818 = vmatprep.subr.bf16.mxu0 0
    %1819 = vmatpush1.bf16.msra.mxu0 0
    %1820 = vmatprep.subr.bf16.mxu0 0
    %1821 = vmatpush1.bf16.msra.mxu0 0
    %1822 = vmatprep.subr.bf16.mxu0 0
    %1823 = vmatpush1.bf16.msra.mxu0 0
    %1824 = vmatprep.subr.bf16.mxu0 0
    %1825 = vmatpush1.bf16.msra.mxu0 0
    %1826 = vmatprep.subr.bf16.mxu0 0
    %1827 = vmatpush1.bf16.msra.mxu0 0
    %1828 = vmatprep.subr.bf16.mxu0 0
    %1829 = vmatpush1.bf16.msra.mxu0 0
    %1830 = vmatprep.subr.bf16.mxu0 0
    %1831 = vmatpush1.bf16.msra.mxu0 0
    %1832 = vmatprep.subr.bf16.mxu0 0
    %1833 = vmatpush1.bf16.msra.mxu0 0
    %1834 = vmatprep.subr.bf16.mxu0 0
    %1835 = vmatpush1.bf16.msra.mxu0 0
    %1836 = vmatprep.subr.bf16.mxu0 0
    %1837 = vmatpush1.bf16.msra.mxu0 0
    %1838 = vmatprep.subr.bf16.mxu0 0
    %1839 = vmatpush1.bf16.msra.mxu0 0
    %1840 = vmatprep.mubr.bf16.mxu0 0
    %1841 = vmatmul.mubr.bf16.gmra.mrb[0].mxu0 %v1737
    %v1842 = vpop.f32.mrb[0].mxu0
    %v1843 = vadd.f32 %v1628, %v1842
    %v1844 = vpop.f32.mrb[0].mxu0
    %v1845 = vadd.f32 %v1630, %v1844
    %v1846 = vpop.f32.mrb[0].mxu0
    %v1847 = vadd.f32 %v1632, %v1846
    %v1848 = vpop.f32.mrb[0].mxu0
    %v1849 = vadd.f32 %v1634, %v1848
    %1850 = vmatprep.mubr.bf16.mxu0 0
    %1851 = vmatmul.mubr.bf16.gmra.mrb[0].mxu0 %v1740
    %v1852 = vpop.f32.mrb[0].mxu0
    %v1853 = vadd.f32 %v1638, %v1852
    %v1854 = vpop.f32.mrb[0].mxu0
    %v1855 = vadd.f32 %v1640, %v1854
    %v1856 = vpop.f32.mrb[0].mxu0
    %v1857 = vadd.f32 %v1642, %v1856
    %v1858 = vpop.f32.mrb[0].mxu0
    %v1859 = vadd.f32 %v1644, %v1858
    %1860 = vmatprep.mubr.bf16.mxu0 0
    %1861 = vmatmul.mubr.bf16.gmra.mrb[0].mxu0 %v1743
    %v1862 = vpop.f32.mrb[0].mxu0
    %v1863 = vadd.f32 %v1648, %v1862
    %v1864 = vpop.f32.mrb[0].mxu0
    %v1865 = vadd.f32 %v1650, %v1864
    %v1866 = vpop.f32.mrb[0].mxu0
    %v1867 = vadd.f32 %v1652, %v1866
    %v1868 = vpop.f32.mrb[0].mxu0
    %v1869 = vadd.f32 %v1654, %v1868
    %1870 = vdwg.mxu0
    %v1871 = vld [vmem:[%s6] sm:$0xf]
    %v1873 = vlaneseq
    %v1874 = vshrl.u32 %v1873, 7
    %v1875 = vsub.s32 0, %v1874
    %v1876 = vrot.slane %v1871, %v1875
    %v1877 = vlaneseq
    %v1878 = vshrl.u32 %v1877, 7
    %v1879 = vsub.s32 1, %v1878
    %v1880 = vrot.slane %v1871, %v1879
    %v1881 = vlaneseq
    %v1882 = vshrl.u32 %v1881, 7
    %v1883 = vsub.s32 2, %v1882
    %v1884 = vrot.slane %v1871, %v1883
    %v1885 = vlaneseq
    %v1886 = vshrl.u32 %v1885, 7
    %v1887 = vsub.s32 3, %v1886
    %v1888 = vrot.slane %v1871, %v1887
    %v1893 = vadd.f32 %v1780, %v1876
    %v1894 = vadd.f32 %v1782, %v1880
    %v1895 = vadd.f32 %v1843, %v1884
    %v1896 = vadd.f32 %v1845, %v1888
    %v1897 = vadd.f32 %v1784, %v1876
    %v1898 = vadd.f32 %v1786, %v1880
    %v1899 = vadd.f32 %v1847, %v1884
    %v1900 = vadd.f32 %v1849, %v1888
    %v1901 = vadd.f32 %v1790, %v1876
    %v1902 = vadd.f32 %v1792, %v1880
    %v1903 = vadd.f32 %v1853, %v1884
    %v1904 = vadd.f32 %v1855, %v1888
    %v1905 = vadd.f32 %v1794, %v1876
    %v1906 = vadd.f32 %v1796, %v1880
    %v1907 = vadd.f32 %v1857, %v1884
    %v1908 = vadd.f32 %v1859, %v1888
    %v1909 = vadd.f32 %v1800, %v1876
    %v1910 = vadd.f32 %v1802, %v1880
    %v1911 = vadd.f32 %v1863, %v1884
    %v1912 = vadd.f32 %v1865, %v1888
    %v1913 = vadd.f32 %v1804, %v1876
    %v1914 = vadd.f32 %v1806, %v1880
    %v1915 = vadd.f32 %v1867, %v1884
    %v1916 = vadd.f32 %v1869, %v1888
    %1917 = vst [vmem:[#allocation2] sm:$0xff] %v1893
    %1918 = vst [vmem:[#allocation2 + $0x8] sm:$0xff] %v1894
    %1919 = vst [vmem:[#allocation2 + $0x10] sm:$0xff] %v1895
    %1920 = vst [vmem:[#allocation2 + $0x18] sm:$0xff] %v1896
    %1921 = vst [vmem:[#allocation2 + $0x20] sm:$0xff] %v1897
    %1922 = vst [vmem:[#allocation2 + $0x28] sm:$0xff] %v1898
    %1923 = vst [vmem:[#allocation2 + $0x30] sm:$0xff] %v1899
    %1924 = vst [vmem:[#allocation2 + $0x38] sm:$0xff] %v1900
    %1925 = vst [vmem:[#allocation2 + $0x40] sm:$0xff] %v1901
    %1926 = vst [vmem:[#allocation2 + $0x48] sm:$0xff] %v1902
    %1927 = vst [vmem:[#allocation2 + $0x50] sm:$0xff] %v1903
    %1928 = vst [vmem:[#allocation2 + $0x58] sm:$0xff] %v1904
    %1929 = vst [vmem:[#allocation2 + $0x60] sm:$0xff] %v1905
    %1930 = vst [vmem:[#allocation2 + $0x68] sm:$0xff] %v1906
    %1931 = vst [vmem:[#allocation2 + $0x70] sm:$0xff] %v1907
    %1932 = vst [vmem:[#allocation2 + $0x78] sm:$0xff] %v1908
    %1933 = vst [vmem:[#allocation2 + $0x80] sm:$0xff] %v1909
    %1934 = vst [vmem:[#allocation2 + $0x88] sm:$0xff] %v1910
    %1935 = vst [vmem:[#allocation2 + $0x90] sm:$0xff] %v1911
    %1936 = vst [vmem:[#allocation2 + $0x98] sm:$0xff] %v1912
    %1937 = vst [vmem:[#allocation2 + $0xa0] sm:$0xff] %v1913
    %1938 = vst [vmem:[#allocation2 + $0xa8] sm:$0xff] %v1914
    %1939 = vst [vmem:[#allocation2 + $0xb0] sm:$0xff] %v1915
    %1940 = vst [vmem:[#allocation2 + $0xb8] sm:$0xff] %v1916
    %v1941 = vld [vmem:[#allocation9] sm:$0xff]
    %v1942 = vld [vmem:[#allocation9 + $0x8] sm:$0xff]
    %v1943 = vld [vmem:[#allocation9 + $0x10] sm:$0xff]
    %v1944 = vld [vmem:[#allocation9 + $0x18] sm:$0xff]
    %v1945 = vld [vmem:[#allocation9 + $0x20] sm:$0xff]
    %v1946 = vld [vmem:[#allocation9 + $0x28] sm:$0xff]
    %v1947 = vld [vmem:[#allocation9 + $0x30] sm:$0xff]
    %v1948 = vld [vmem:[#allocation9 + $0x38] sm:$0xff]
    %v1949 = vld [vmem:[#allocation9 + $0x40] sm:$0xff]
    %v1950 = vld [vmem:[#allocation9 + $0x48] sm:$0xff]
    %v1951 = vld [vmem:[#allocation9 + $0x50] sm:$0xff]
    %v1952 = vld [vmem:[#allocation9 + $0x58] sm:$0xff]
    %v1953 = vld [vmem:[#allocation9 + $0x60] sm:$0xff]
    %v1954 = vld [vmem:[#allocation9 + $0x68] sm:$0xff]
    %v1955 = vld [vmem:[#allocation9 + $0x70] sm:$0xff]
    %v1956 = vld [vmem:[#allocation9 + $0x78] sm:$0xff]
    %v1957 = vld [vmem:[#allocation2] sm:$0xff]
    %v1958 = vld [vmem:[#allocation2 + $0x8] sm:$0xff]
    %v1967 = vunpack.c.l.b16 %v1941
    %v1968 = vunpack.c.h.b16 %v1941
    %v1969 = vunpack.c.l.b16 %v1943
    %v1970 = vunpack.c.h.b16 %v1943
    %v1971 = vunpack.c.l.b16 %v1945
    %v1972 = vunpack.c.h.b16 %v1945
    %v1973 = vunpack.c.l.b16 %v1947
    %v1974 = vunpack.c.h.b16 %v1947
    %v1975 = vunpack.c.l.b16 %v1949
    %v1976 = vunpack.c.h.b16 %v1949
    %v1977 = vunpack.c.l.b16 %v1951
    %v1978 = vunpack.c.h.b16 %v1951
    %v1979 = vunpack.c.l.b16 %v1953
    %v1980 = vunpack.c.h.b16 %v1953
    %v1981 = vunpack.c.l.b16 %v1955
    %v1982 = vunpack.c.h.b16 %v1955
    %v1983 = vpack.c.b16 %v1969, %v1967
    %v1984 = vpack.c.b16 %v1970, %v1968
    %v1985 = vpack.c.b16 %v1973, %v1971
    %v1986 = vpack.c.b16 %v1974, %v1972
    %v1987 = vpack.c.b16 %v1977, %v1975
    %v1988 = vpack.c.b16 %v1978, %v1976
    %v1989 = vpack.c.b16 %v1981, %v1979
    %v1990 = vpack.c.b16 %v1982, %v1980
    %1999 = vmatprep.subr.bf16.mxu0 %v1984
    %2000 = vmatpush1.bf16.msra.mxu0 %v1983
    %2001 = vmatprep.subr.bf16.mxu0 %v1986
    %2002 = vmatpush1.bf16.msra.mxu0 %v1985
    %2003 = vmatprep.subr.bf16.mxu0 %v1988
    %2004 = vmatpush1.bf16.msra.mxu0 %v1987
    %2005 = vmatprep.subr.bf16.mxu0 %v1990
    %2006 = vmatpush1.bf16.msra.mxu0 %v1989
    %2007 = vmatprep.subr.bf16.mxu0 0
    %2008 = vmatpush1.bf16.msra.mxu0 0
    %2009 = vmatprep.subr.bf16.mxu0 0
    %2010 = vmatpush1.bf16.msra.mxu0 0
    %2011 = vmatprep.subr.bf16.mxu0 0
    %2012 = vmatpush1.bf16.msra.mxu0 0
    %2013 = vmatprep.subr.bf16.mxu0 0
    %2014 = vmatpush1.bf16.msra.mxu0 0
    %2015 = vmatprep.subr.bf16.mxu0 0
    %2016 = vmatpush1.bf16.msra.mxu0 0
    %2017 = vmatprep.subr.bf16.mxu0 0
    %2018 = vmatpush1.bf16.msra.mxu0 0
    %2019 = vmatprep.subr.bf16.mxu0 0
    %2020 = vmatpush1.bf16.msra.mxu0 0
    %2021 = vmatprep.subr.bf16.mxu0 0
    %2022 = vmatpush1.bf16.msra.mxu0 0
    %2023 = vmatprep.subr.bf16.mxu0 0
    %2024 = vmatpush1.bf16.msra.mxu0 0
    %2025 = vmatprep.subr.bf16.mxu0 0
    %2026 = vmatpush1.bf16.msra.mxu0 0
    %2027 = vmatprep.subr.bf16.mxu0 0
    %2028 = vmatpush1.bf16.msra.mxu0 0
    %2029 = vmatprep.subr.bf16.mxu0 0
    %2030 = vmatpush1.bf16.msra.mxu0 0
    %2031 = vmatprep.mubr.bf16.mxu0 0
    %2032 = vmatmul.mubr.bf16.gmra.mrb[0].mxu0 %v357
    %v2033 = vpop.f32.mrb[0].mxu0
    %v2034 = vadd.f32 0.0, %v2033
    %v2035 = vpop.f32.mrb[0].mxu0
    %v2036 = vadd.f32 0.0, %v2035
    %v2037 = vpop.f32.mrb[0].mxu0
    %v2038 = vpop.f32.mrb[0].mxu0
    %2039 = vdwg.mxu0
    %v2040 = vadd.f32 %v1957, %v2034
    %v2041 = vadd.f32 %v1958, %v2036
    %v2042 = vld [vmem:[#allocation2 + $0xb0] sm:$0xff]
    %v2043 = vld [vmem:[#allocation2 + $0xb8] sm:$0xff]
    %v2052 = vunpack.c.l.b16 %v1942
    %v2053 = vunpack.c.h.b16 %v1942
    %v2054 = vunpack.c.l.b16 %v1944
    %v2055 = vunpack.c.h.b16 %v1944
    %v2056 = vunpack.c.l.b16 %v1946
    %v2057 = vunpack.c.h.b16 %v1946
    %v2058 = vunpack.c.l.b16 %v1948
    %v2059 = vunpack.c.h.b16 %v1948
    %v2060 = vunpack.c.l.b16 %v1950
    %v2061 = vunpack.c.h.b16 %v1950
    %v2062 = vunpack.c.l.b16 %v1952
    %v2063 = vunpack.c.h.b16 %v1952
    %v2064 = vunpack.c.l.b16 %v1954
    %v2065 = vunpack.c.h.b16 %v1954
    %v2066 = vunpack.c.l.b16 %v1956
    %v2067 = vunpack.c.h.b16 %v1956
    %v2068 = vpack.c.b16 %v2054, %v2052
    %v2069 = vpack.c.b16 %v2055, %v2053
    %v2070 = vpack.c.b16 %v2058, %v2056
    %v2071 = vpack.c.b16 %v2059, %v2057
    %v2072 = vpack.c.b16 %v2062, %v2060
    %v2073 = vpack.c.b16 %v2063, %v2061
    %v2074 = vpack.c.b16 %v2066, %v2064
    %v2075 = vpack.c.b16 %v2067, %v2065
    %2084 = vmatprep.subr.bf16.mxu0 %v2069
    %2085 = vmatpush1.bf16.msra.mxu0 %v2068
    %2086 = vmatprep.subr.bf16.mxu0 %v2071
    %2087 = vmatpush1.bf16.msra.mxu0 %v2070
    %2088 = vmatprep.subr.bf16.mxu0 %v2073
    %2089 = vmatpush1.bf16.msra.mxu0 %v2072
    %2090 = vmatprep.subr.bf16.mxu0 %v2075
    %2091 = vmatpush1.bf16.msra.mxu0 %v2074
    %2092 = vmatprep.subr.bf16.mxu0 0
    %2093 = vmatpush1.bf16.msra.mxu0 0
    %2094 = vmatprep.subr.bf16.mxu0 0
    %2095 = vmatpush1.bf16.msra.mxu0 0
    %2096 = vmatprep.subr.bf16.mxu0 0
    %2097 = vmatpush1.bf16.msra.mxu0 0
    %2098 = vmatprep.subr.bf16.mxu0 0
    %2099 = vmatpush1.bf16.msra.mxu0 0
    %2100 = vmatprep.subr.bf16.mxu0 0
    %2101 = vmatpush1.bf16.msra.mxu0 0
    %2102 = vmatprep.subr.bf16.mxu0 0
    %2103 = vmatpush1.bf16.msra.mxu0 0
    %2104 = vmatprep.subr.bf16.mxu0 0
    %2105 = vmatpush1.bf16.msra.mxu0 0
    %2106 = vmatprep.subr.bf16.mxu0 0
    %2107 = vmatpush1.bf16.msra.mxu0 0
    %2108 = vmatprep.subr.bf16.mxu0 0
    %2109 = vmatpush1.bf16.msra.mxu0 0
    %2110 = vmatprep.subr.bf16.mxu0 0
    %2111 = vmatpush1.bf16.msra.mxu0 0
    %2112 = vmatprep.subr.bf16.mxu0 0
    %2113 = vmatpush1.bf16.msra.mxu0 0
    %2114 = vmatprep.subr.bf16.mxu0 0
    %2115 = vmatpush1.bf16.msra.mxu0 0
    %2116 = vmatprep.mubr.bf16.mxu0 0
    %2117 = vmatmul.mubr.bf16.gmra.mrb[0].mxu0 %v357
    %v2118 = vpop.f32.mrb[0].mxu0
    %v2119 = vadd.f32 0.0, %v2118
    %v2120 = vpop.f32.mrb[0].mxu0
    %v2121 = vadd.f32 0.0, %v2120
    %v2122 = vpop.f32.mrb[0].mxu0
    %v2123 = vpop.f32.mrb[0].mxu0
    %2124 = vdwg.mxu0
    %v2125 = vadd.f32 %v2042, %v2119
    %v2126 = vadd.f32 %v2043, %v2121
    %v2127 = vxor.u32 %v2040, 2147483648
    %v2128 = vxor.u32 %v2041, 2147483648
    %v2129 = vxor.u32 %v2125, 2147483648
    %v2130 = vxor.u32 %v2126, 2147483648
    %v2131 = vmul.f32 %v2127, 1.442695
    %v2132 = vpow.pop %v2131
    %v2133 = vmul.f32 %v2128, 1.442695
    %v2134 = vpow.pop %v2133
    %v2135 = vmul.f32 %v2129, 1.442695
    %v2136 = vpow.pop %v2135
    %v2137 = vmul.f32 %v2130, 1.442695
    %v2138 = vpow.pop %v2137
    %v2139 = vadd.f32 %v2132, 1.0
    %v2140 = vadd.f32 %v2134, 1.0
    %v2141 = vadd.f32 %v2136, 1.0
    %v2142 = vadd.f32 %v2138, 1.0
    %v2143 = vrcp.pop %v2139
    %v2144 = vmul.f32 1.0, %v2143
    %v2145 = vrcp.pop %v2140
    %v2146 = vmul.f32 1.0, %v2145
    %v2147 = vrcp.pop %v2141
    %v2148 = vmul.f32 1.0, %v2147
    %v2149 = vrcp.pop %v2142
    %v2150 = vmul.f32 1.0, %v2149
    %v2151 = vmul.f32 %v2144, 2.0
    %v2152 = vmul.f32 %v2146, 2.0
    %v2153 = vmul.f32 %v2148, 2.0
    %v2154 = vmul.f32 %v2150, 2.0
    %v2155 = vsub.f32 %v2151, 1.0
    %v2156 = vsub.f32 %v2152, 1.0
    %v2157 = vsub.f32 %v2153, 1.0
    %v2158 = vsub.f32 %v2154, 1.0
    %v2159 = vsel %vm79, %v2155, %v2144
    %v2160 = vsel %vm80, %v2156, %v2146
    %v2161 = vsel %vm79, %v2157, %v2148
    %v2162 = vsel %vm80, %v2158, %v2150
    %v2163 = vmul.f32 %v2159, 0.0
    %v2164 = vmul.f32 %v2161, 0.0
    %v2165 = vmul.f32 %v2159, %v2160
    %v2166 = vmul.f32 %v2161, %v2162
    %2169 = vrot.lane.b32.xlu0 %v2165, 64
    %v2170 = vpop.permute.xlu0 %2169
    %2171 = vrot.lane.b32.xlu0 %v2166, 64
    %v2172 = vpop.permute.xlu0 %2171
    %v2175 = vadd.f32 %v2163, %v2170
    %v2176 = vadd.f32 %v2164, %v2172
    %v2177 = vtanh.pop %v2175
    %v2178 = vtanh.pop %v2176
    %v2179 = vmul.f32 %v2160, %v2177
    %v2180 = vmul.f32 %v2162, %v2178
    %v2181 = vadd.f32 %v2179, 0.0
    %v2182 = vadd.f32 %v2180, 0.0
    %v2183 = vld [vmem:[#allocation2 + $0x20] sm:$0xff]
    %v2184 = vld [vmem:[#allocation2 + $0x28] sm:$0xff]
    %v2185 = vpack.c.bf16 %v2179, %v2179
    %2187 = vrot.lane.b32.xlu0 %v2185, 64
    %v2188 = vpop.permute.xlu0 %2187
    %v2190 = vsel %vm355, %v2188, 0
    %2192 = vmatprep.subr.bf16.mxu0 %v1984
    %2193 = vmatpush1.bf16.msra.mxu0 %v1983
    %2194 = vmatprep.subr.bf16.mxu0 %v1986
    %2195 = vmatpush1.bf16.msra.mxu0 %v1985
    %2196 = vmatprep.subr.bf16.mxu0 %v1988
    %2197 = vmatpush1.bf16.msra.mxu0 %v1987
    %2198 = vmatprep.subr.bf16.mxu0 %v1990
    %2199 = vmatpush1.bf16.msra.mxu0 %v1989
    %2200 = vmatprep.subr.bf16.mxu0 0
    %2201 = vmatpush1.bf16.msra.mxu0 0
    %2202 = vmatprep.subr.bf16.mxu0 0
    %2203 = vmatpush1.bf16.msra.mxu0 0
    %2204 = vmatprep.subr.bf16.mxu0 0
    %2205 = vmatpush1.bf16.msra.mxu0 0
    %2206 = vmatprep.subr.bf16.mxu0 0
    %2207 = vmatpush1.bf16.msra.mxu0 0
    %2208 = vmatprep.subr.bf16.mxu0 0
    %2209 = vmatpush1.bf16.msra.mxu0 0
    %2210 = vmatprep.subr.bf16.mxu0 0
    %2211 = vmatpush1.bf16.msra.mxu0 0
    %2212 = vmatprep.subr.bf16.mxu0 0
    %2213 = vmatpush1.bf16.msra.mxu0 0
    %2214 = vmatprep.subr.bf16.mxu0 0
    %2215 = vmatpush1.bf16.msra.mxu0 0
    %2216 = vmatprep.subr.bf16.mxu0 0
    %2217 = vmatpush1.bf16.msra.mxu0 0
    %2218 = vmatprep.subr.bf16.mxu0 0
    %2219 = vmatpush1.bf16.msra.mxu0 0
    %2220 = vmatprep.subr.bf16.mxu0 0
    %2221 = vmatpush1.bf16.msra.mxu0 0
    %2222 = vmatprep.subr.bf16.mxu0 0
    %2223 = vmatpush1.bf16.msra.mxu0 0
    %2224 = vmatprep.mubr.bf16.mxu0 0
    %2225 = vmatmul.mubr.bf16.gmra.mrb[0].mxu0 %v2190
    %v2226 = vpop.f32.mrb[0].mxu0
    %v2227 = vadd.f32 0.0, %v2226
    %v2228 = vpop.f32.mrb[0].mxu0
    %v2229 = vadd.f32 0.0, %v2228
    %v2230 = vpop.f32.mrb[0].mxu0
    %v2231 = vpop.f32.mrb[0].mxu0
    %2232 = vdwg.mxu0
    %v2233 = vadd.f32 %v2183, %v2227
    %v2234 = vadd.f32 %v2184, %v2229
    %v2235 = vld [vmem:[#allocation2 + $0x90] sm:$0xff]
    %v2236 = vld [vmem:[#allocation2 + $0x98] sm:$0xff]
    %v2237 = vpack.c.bf16 %v2180, %v2180
    %2239 = vrot.lane.b32.xlu0 %v2237, 64
    %v2240 = vpop.permute.xlu0 %2239
    %v2242 = vsel %vm355, %v2240, 0
    %2244 = vmatprep.subr.bf16.mxu0 %v2069
    %2245 = vmatpush1.bf16.msra.mxu0 %v2068
    %2246 = vmatprep.subr.bf16.mxu0 %v2071
    %2247 = vmatpush1.bf16.msra.mxu0 %v2070
    %2248 = vmatprep.subr.bf16.mxu0 %v2073
    %2249 = vmatpush1.bf16.msra.mxu0 %v2072
    %2250 = vmatprep.subr.bf16.mxu0 %v2075
    %2251 = vmatpush1.bf16.msra.mxu0 %v2074
    %2252 = vmatprep.subr.bf16.mxu0 0
    %2253 = vmatpush1.bf16.msra.mxu0 0
    %2254 = vmatprep.subr.bf16.mxu0 0
    %2255 = vmatpush1.bf16.msra.mxu0 0
    %2256 = vmatprep.subr.bf16.mxu0 0
    %2257 = vmatpush1.bf16.msra.mxu0 0
    %2258 = vmatprep.subr.bf16.mxu0 0
    %2259 = vmatpush1.bf16.msra.mxu0 0
    %2260 = vmatprep.subr.bf16.mxu0 0
    %2261 = vmatpush1.bf16.msra.mxu0 0
    %2262 = vmatprep.subr.bf16.mxu0 0
    %2263 = vmatpush1.bf16.msra.mxu0 0
    %2264 = vmatprep.subr.bf16.mxu0 0
    %2265 = vmatpush1.bf16.msra.mxu0 0
    %2266 = vmatprep.subr.bf16.mxu0 0
    %2267 = vmatpush1.bf16.msra.mxu0 0
    %2268 = vmatprep.subr.bf16.mxu0 0
    %2269 = vmatpush1.bf16.msra.mxu0 0
    %2270 = vmatprep.subr.bf16.mxu0 0
    %2271 = vmatpush1.bf16.msra.mxu0 0
    %2272 = vmatprep.subr.bf16.mxu0 0
    %2273 = vmatpush1.bf16.msra.mxu0 0
    %2274 = vmatprep.subr.bf16.mxu0 0
    %2275 = vmatpush1.bf16.msra.mxu0 0
    %2276 = vmatprep.mubr.bf16.mxu0 0
    %2277 = vmatmul.mubr.bf16.gmra.mrb[0].mxu0 %v2242
    %v2278 = vpop.f32.mrb[0].mxu0
    %v2279 = vadd.f32 0.0, %v2278
    %v2280 = vpop.f32.mrb[0].mxu0
    %v2281 = vadd.f32 0.0, %v2280
    %v2282 = vpop.f32.mrb[0].mxu0
    %v2283 = vpop.f32.mrb[0].mxu0
    %2284 = vdwg.mxu0
    %v2285 = vadd.f32 %v2235, %v2279
    %v2286 = vadd.f32 %v2236, %v2281
    %v2287 = vxor.u32 %v2233, 2147483648
    %v2288 = vxor.u32 %v2234, 2147483648
    %v2289 = vxor.u32 %v2285, 2147483648
    %v2290 = vxor.u32 %v2286, 2147483648
    %v2291 = vmul.f32 %v2287, 1.442695
    %v2292 = vpow.pop %v2291
    %v2293 = vmul.f32 %v2288, 1.442695
    %v2294 = vpow.pop %v2293
    %v2295 = vmul.f32 %v2289, 1.442695
    %v2296 = vpow.pop %v2295
    %v2297 = vmul.f32 %v2290, 1.442695
    %v2298 = vpow.pop %v2297
    %v2299 = vadd.f32 %v2292, 1.0
    %v2300 = vadd.f32 %v2294, 1.0
    %v2301 = vadd.f32 %v2296, 1.0
    %v2302 = vadd.f32 %v2298, 1.0
    %v2303 = vrcp.pop %v2299
    %v2304 = vmul.f32 1.0, %v2303
    %v2305 = vrcp.pop %v2300
    %v2306 = vmul.f32 1.0, %v2305
    %v2307 = vrcp.pop %v2301
    %v2308 = vmul.f32 1.0, %v2307
    %v2309 = vrcp.pop %v2302
    %v2310 = vmul.f32 1.0, %v2309
    %v2311 = vmul.f32 %v2304, 2.0
    %v2312 = vmul.f32 %v2306, 2.0
    %v2313 = vmul.f32 %v2308, 2.0
    %v2314 = vmul.f32 %v2310, 2.0
    %v2315 = vsub.f32 %v2311, 1.0
    %v2316 = vsub.f32 %v2312, 1.0
    %v2317 = vsub.f32 %v2313, 1.0
    %v2318 = vsub.f32 %v2314, 1.0
    %v2319 = vsel %vm79, %v2315, %v2304
    %v2320 = vsel %vm80, %v2316, %v2306
    %v2321 = vsel %vm79, %v2317, %v2308
    %v2322 = vsel %vm80, %v2318, %v2310
    %v2323 = vmul.f32 %v2319, %v2175
    %v2324 = vmul.f32 %v2321, %v2176
    %v2325 = vmul.f32 %v2319, %v2320
    %v2326 = vmul.f32 %v2321, %v2322
    %2329 = vrot.lane.b32.xlu0 %v2325, 64
    %v2330 = vpop.permute.xlu0 %2329
    %2331 = vrot.lane.b32.xlu0 %v2326, 64
    %v2332 = vpop.permute.xlu0 %2331
    %v2335 = vadd.f32 %v2323, %v2330
    %v2336 = vadd.f32 %v2324, %v2332
    %v2337 = vtanh.pop %v2335
    %v2338 = vtanh.pop %v2336
    %v2339 = vmul.f32 %v2320, %v2337
    %v2340 = vmul.f32 %v2322, %v2338
    %v2341 = vadd.f32 %v2181, %v2339
    %v2342 = vadd.f32 %v2182, %v2340
    %v2343 = vld [vmem:[#allocation2 + $0x40] sm:$0xff]
    %v2344 = vld [vmem:[#allocation2 + $0x48] sm:$0xff]
    %v2345 = vpack.c.bf16 %v2339, %v2339
    %2347 = vrot.lane.b32.xlu0 %v2345, 64
    %v2348 = vpop.permute.xlu0 %2347
    %v2350 = vsel %vm355, %v2348, 0
    %2352 = vmatprep.subr.bf16.mxu0 %v1984
    %2353 = vmatpush1.bf16.msra.mxu0 %v1983
    %2354 = vmatprep.subr.bf16.mxu0 %v1986
    %2355 = vmatpush1.bf16.msra.mxu0 %v1985
    %2356 = vmatprep.subr.bf16.mxu0 %v1988
    %2357 = vmatpush1.bf16.msra.mxu0 %v1987
    %2358 = vmatprep.subr.bf16.mxu0 %v1990
    %2359 = vmatpush1.bf16.msra.mxu0 %v1989
    %2360 = vmatprep.subr.bf16.mxu0 0
    %2361 = vmatpush1.bf16.msra.mxu0 0
    %2362 = vmatprep.subr.bf16.mxu0 0
    %2363 = vmatpush1.bf16.msra.mxu0 0
    %2364 = vmatprep.subr.bf16.mxu0 0
    %2365 = vmatpush1.bf16.msra.mxu0 0
    %2366 = vmatprep.subr.bf16.mxu0 0
    %2367 = vmatpush1.bf16.msra.mxu0 0
    %2368 = vmatprep.subr.bf16.mxu0 0
    %2369 = vmatpush1.bf16.msra.mxu0 0
    %2370 = vmatprep.subr.bf16.mxu0 0
    %2371 = vmatpush1.bf16.msra.mxu0 0
    %2372 = vmatprep.subr.bf16.mxu0 0
    %2373 = vmatpush1.bf16.msra.mxu0 0
    %2374 = vmatprep.subr.bf16.mxu0 0
    %2375 = vmatpush1.bf16.msra.mxu0 0
    %2376 = vmatprep.subr.bf16.mxu0 0
    %2377 = vmatpush1.bf16.msra.mxu0 0
    %2378 = vmatprep.subr.bf16.mxu0 0
    %2379 = vmatpush1.bf16.msra.mxu0 0
    %2380 = vmatprep.subr.bf16.mxu0 0
    %2381 = vmatpush1.bf16.msra.mxu0 0
    %2382 = vmatprep.subr.bf16.mxu0 0
    %2383 = vmatpush1.bf16.msra.mxu0 0
    %2384 = vmatprep.mubr.bf16.mxu0 0
    %2385 = vmatmul.mubr.bf16.gmra.mrb[0].mxu0 %v2350
    %v2386 = vpop.f32.mrb[0].mxu0
    %v2387 = vadd.f32 0.0, %v2386
    %v2388 = vpop.f32.mrb[0].mxu0
    %v2389 = vadd.f32 0.0, %v2388
    %v2390 = vpop.f32.mrb[0].mxu0
    %v2391 = vpop.f32.mrb[0].mxu0
    %2392 = vdwg.mxu0
    %v2393 = vadd.f32 %v2343, %v2387
    %v2394 = vadd.f32 %v2344, %v2389
    %v2395 = vld [vmem:[#allocation2 + $0x70] sm:$0xff]
    %v2396 = vld [vmem:[#allocation2 + $0x78] sm:$0xff]
    %v2397 = vpack.c.bf16 %v2340, %v2340
    %2399 = vrot.lane.b32.xlu0 %v2397, 64
    %v2400 = vpop.permute.xlu0 %2399
    %v2402 = vsel %vm355, %v2400, 0
    %2404 = vmatprep.subr.bf16.mxu0 %v2069
    %2405 = vmatpush1.bf16.msra.mxu0 %v2068
    %2406 = vmatprep.subr.bf16.mxu0 %v2071
    %2407 = vmatpush1.bf16.msra.mxu0 %v2070
    %2408 = vmatprep.subr.bf16.mxu0 %v2073
    %2409 = vmatpush1.bf16.msra.mxu0 %v2072
    %2410 = vmatprep.subr.bf16.mxu0 %v2075
    %2411 = vmatpush1.bf16.msra.mxu0 %v2074
    %2412 = vmatprep.subr.bf16.mxu0 0
    %2413 = vmatpush1.bf16.msra.mxu0 0
    %2414 = vmatprep.subr.bf16.mxu0 0
    %2415 = vmatpush1.bf16.msra.mxu0 0
    %2416 = vmatprep.subr.bf16.mxu0 0
    %2417 = vmatpush1.bf16.msra.mxu0 0
    %2418 = vmatprep.subr.bf16.mxu0 0
    %2419 = vmatpush1.bf16.msra.mxu0 0
    %2420 = vmatprep.subr.bf16.mxu0 0
    %2421 = vmatpush1.bf16.msra.mxu0 0
    %2422 = vmatprep.subr.bf16.mxu0 0
    %2423 = vmatpush1.bf16.msra.mxu0 0
    %2424 = vmatprep.subr.bf16.mxu0 0
    %2425 = vmatpush1.bf16.msra.mxu0 0
    %2426 = vmatprep.subr.bf16.mxu0 0
    %2427 = vmatpush1.bf16.msra.mxu0 0
    %2428 = vmatprep.subr.bf16.mxu0 0
    %2429 = vmatpush1.bf16.msra.mxu0 0
    %2430 = vmatprep.subr.bf16.mxu0 0
    %2431 = vmatpush1.bf16.msra.mxu0 0
    %2432 = vmatprep.subr.bf16.mxu0 0
    %2433 = vmatpush1.bf16.msra.mxu0 0
    %2434 = vmatprep.subr.bf16.mxu0 0
    %2435 = vmatpush1.bf16.msra.mxu0 0
    %2436 = vmatprep.mubr.bf16.mxu0 0
    %2437 = vmatmul.mubr.bf16.gmra.mrb[0].mxu0 %v2402
    %v2438 = vpop.f32.mrb[0].mxu0
    %v2439 = vadd.f32 0.0, %v2438
    %v2440 = vpop.f32.mrb[0].mxu0
    %v2441 = vadd.f32 0.0, %v2440
    %v2442 = vpop.f32.mrb[0].mxu0
    %v2443 = vpop.f32.mrb[0].mxu0
    %2444 = vdwg.mxu0
    %v2445 = vadd.f32 %v2395, %v2439
    %v2446 = vadd.f32 %v2396, %v2441
    %v2447 = vxor.u32 %v2393, 2147483648
    %v2448 = vxor.u32 %v2394, 2147483648
    %v2449 = vxor.u32 %v2445, 2147483648
    %v2450 = vxor.u32 %v2446, 2147483648
    %v2451 = vmul.f32 %v2447, 1.442695
    %v2452 = vpow.pop %v2451
    %v2453 = vmul.f32 %v2448, 1.442695
    %v2454 = vpow.pop %v2453
    %v2455 = vmul.f32 %v2449, 1.442695
    %v2456 = vpow.pop %v2455
    %v2457 = vmul.f32 %v2450, 1.442695
    %v2458 = vpow.pop %v2457
    %v2459 = vadd.f32 %v2452, 1.0
    %v2460 = vadd.f32 %v2454, 1.0
    %v2461 = vadd.f32 %v2456, 1.0
    %v2462 = vadd.f32 %v2458, 1.0
    %v2463 = vrcp.pop %v2459
    %v2464 = vmul.f32 1.0, %v2463
    %v2465 = vrcp.pop %v2460
    %v2466 = vmul.f32 1.0, %v2465
    %v2467 = vrcp.pop %v2461
    %v2468 = vmul.f32 1.0, %v2467
    %v2469 = vrcp.pop %v2462
    %v2470 = vmul.f32 1.0, %v2469
    %v2471 = vmul.f32 %v2464, 2.0
    %v2472 = vmul.f32 %v2466, 2.0
    %v2473 = vmul.f32 %v2468, 2.0
    %v2474 = vmul.f32 %v2470, 2.0
    %v2475 = vsub.f32 %v2471, 1.0
    %v2476 = vsub.f32 %v2472, 1.0
    %v2477 = vsub.f32 %v2473, 1.0
    %v2478 = vsub.f32 %v2474, 1.0
    %v2479 = vsel %vm79, %v2475, %v2464
    %v2480 = vsel %vm80, %v2476, %v2466
    %v2481 = vsel %vm79, %v2477, %v2468
    %v2482 = vsel %vm80, %v2478, %v2470
    %v2483 = vmul.f32 %v2479, %v2335
    %v2484 = vmul.f32 %v2481, %v2336
    %v2485 = vmul.f32 %v2479, %v2480
    %v2486 = vmul.f32 %v2481, %v2482
    %2489 = vrot.lane.b32.xlu0 %v2485, 64
    %v2490 = vpop.permute.xlu0 %2489
    %2491 = vrot.lane.b32.xlu0 %v2486, 64
    %v2492 = vpop.permute.xlu0 %2491
    %v2495 = vadd.f32 %v2483, %v2490
    %v2496 = vadd.f32 %v2484, %v2492
    %v2497 = vtanh.pop %v2495
    %v2498 = vtanh.pop %v2496
    %v2499 = vmul.f32 %v2480, %v2497
    %v2500 = vmul.f32 %v2482, %v2498
    %v2501 = vadd.f32 %v2341, %v2499
    %v2502 = vadd.f32 %v2342, %v2500
    %v2503 = vld [vmem:[#allocation2 + $0x60] sm:$0xff]
    %v2504 = vld [vmem:[#allocation2 + $0x68] sm:$0xff]
    %v2505 = vpack.c.bf16 %v2499, %v2499
    %2507 = vrot.lane.b32.xlu0 %v2505, 64
    %v2508 = vpop.permute.xlu0 %2507
    %v2510 = vsel %vm355, %v2508, 0
    %2512 = vmatprep.subr.bf16.mxu0 %v1984
    %2513 = vmatpush1.bf16.msra.mxu0 %v1983
    %2514 = vmatprep.subr.bf16.mxu0 %v1986
    %2515 = vmatpush1.bf16.msra.mxu0 %v1985
    %2516 = vmatprep.subr.bf16.mxu0 %v1988
    %2517 = vmatpush1.bf16.msra.mxu0 %v1987
    %2518 = vmatprep.subr.bf16.mxu0 %v1990
    %2519 = vmatpush1.bf16.msra.mxu0 %v1989
    %2520 = vmatprep.subr.bf16.mxu0 0
    %2521 = vmatpush1.bf16.msra.mxu0 0
    %2522 = vmatprep.subr.bf16.mxu0 0
    %2523 = vmatpush1.bf16.msra.mxu0 0
    %2524 = vmatprep.subr.bf16.mxu0 0
    %2525 = vmatpush1.bf16.msra.mxu0 0
    %2526 = vmatprep.subr.bf16.mxu0 0
    %2527 = vmatpush1.bf16.msra.mxu0 0
    %2528 = vmatprep.subr.bf16.mxu0 0
    %2529 = vmatpush1.bf16.msra.mxu0 0
    %2530 = vmatprep.subr.bf16.mxu0 0
    %2531 = vmatpush1.bf16.msra.mxu0 0
    %2532 = vmatprep.subr.bf16.mxu0 0
    %2533 = vmatpush1.bf16.msra.mxu0 0
    %2534 = vmatprep.subr.bf16.mxu0 0
    %2535 = vmatpush1.bf16.msra.mxu0 0
    %2536 = vmatprep.subr.bf16.mxu0 0
    %2537 = vmatpush1.bf16.msra.mxu0 0
    %2538 = vmatprep.subr.bf16.mxu0 0
    %2539 = vmatpush1.bf16.msra.mxu0 0
    %2540 = vmatprep.subr.bf16.mxu0 0
    %2541 = vmatpush1.bf16.msra.mxu0 0
    %2542 = vmatprep.subr.bf16.mxu0 0
    %2543 = vmatpush1.bf16.msra.mxu0 0
    %2544 = vmatprep.mubr.bf16.mxu0 0
    %2545 = vmatmul.mubr.bf16.gmra.mrb[0].mxu0 %v2510
    %v2546 = vpop.f32.mrb[0].mxu0
    %v2547 = vadd.f32 0.0, %v2546
    %v2548 = vpop.f32.mrb[0].mxu0
    %v2549 = vadd.f32 0.0, %v2548
    %v2550 = vpop.f32.mrb[0].mxu0
    %v2551 = vpop.f32.mrb[0].mxu0
    %2552 = vdwg.mxu0
    %v2553 = vadd.f32 %v2503, %v2547
    %v2554 = vadd.f32 %v2504, %v2549
    %v2555 = vld [vmem:[#allocation2 + $0x50] sm:$0xff]
    %v2556 = vld [vmem:[#allocation2 + $0x58] sm:$0xff]
    %v2557 = vpack.c.bf16 %v2500, %v2500
    %2559 = vrot.lane.b32.xlu0 %v2557, 64
    %v2560 = vpop.permute.xlu0 %2559
    %v2562 = vsel %vm355, %v2560, 0
    %2564 = vmatprep.subr.bf16.mxu0 %v2069
    %2565 = vmatpush1.bf16.msra.mxu0 %v2068
    %2566 = vmatprep.subr.bf16.mxu0 %v2071
    %2567 = vmatpush1.bf16.msra.mxu0 %v2070
    %2568 = vmatprep.subr.bf16.mxu0 %v2073
    %2569 = vmatpush1.bf16.msra.mxu0 %v2072
    %2570 = vmatprep.subr.bf16.mxu0 %v2075
    %2571 = vmatpush1.bf16.msra.mxu0 %v2074
    %2572 = vmatprep.subr.bf16.mxu0 0
    %2573 = vmatpush1.bf16.msra.mxu0 0
    %2574 = vmatprep.subr.bf16.mxu0 0
    %2575 = vmatpush1.bf16.msra.mxu0 0
    %2576 = vmatprep.subr.bf16.mxu0 0
    %2577 = vmatpush1.bf16.msra.mxu0 0
    %2578 = vmatprep.subr.bf16.mxu0 0
    %2579 = vmatpush1.bf16.msra.mxu0 0
    %2580 = vmatprep.subr.bf16.mxu0 0
    %2581 = vmatpush1.bf16.msra.mxu0 0
    %2582 = vmatprep.subr.bf16.mxu0 0
    %2583 = vmatpush1.bf16.msra.mxu0 0
    %2584 = vmatprep.subr.bf16.mxu0 0
    %2585 = vmatpush1.bf16.msra.mxu0 0
    %2586 = vmatprep.subr.bf16.mxu0 0
    %2587 = vmatpush1.bf16.msra.mxu0 0
    %2588 = vmatprep.subr.bf16.mxu0 0
    %2589 = vmatpush1.bf16.msra.mxu0 0
    %2590 = vmatprep.subr.bf16.mxu0 0
    %2591 = vmatpush1.bf16.msra.mxu0 0
    %2592 = vmatprep.subr.bf16.mxu0 0
    %2593 = vmatpush1.bf16.msra.mxu0 0
    %2594 = vmatprep.subr.bf16.mxu0 0
    %2595 = vmatpush1.bf16.msra.mxu0 0
    %2596 = vmatprep.mubr.bf16.mxu0 0
    %2597 = vmatmul.mubr.bf16.gmra.mrb[0].mxu0 %v2562
    %v2598 = vpop.f32.mrb[0].mxu0
    %v2599 = vadd.f32 0.0, %v2598
    %v2600 = vpop.f32.mrb[0].mxu0
    %v2601 = vadd.f32 0.0, %v2600
    %v2602 = vpop.f32.mrb[0].mxu0
    %v2603 = vpop.f32.mrb[0].mxu0
    %2604 = vdwg.mxu0
    %v2605 = vadd.f32 %v2555, %v2599
    %v2606 = vadd.f32 %v2556, %v2601
    %v2607 = vxor.u32 %v2553, 2147483648
    %v2608 = vxor.u32 %v2554, 2147483648
    %v2609 = vxor.u32 %v2605, 2147483648
    %v2610 = vxor.u32 %v2606, 2147483648
    %v2611 = vmul.f32 %v2607, 1.442695
    %v2612 = vpow.pop %v2611
    %v2613 = vmul.f32 %v2608, 1.442695
    %v2614 = vpow.pop %v2613
    %v2615 = vmul.f32 %v2609, 1.442695
    %v2616 = vpow.pop %v2615
    %v2617 = vmul.f32 %v2610, 1.442695
    %v2618 = vpow.pop %v2617
    %v2619 = vadd.f32 %v2612, 1.0
    %v2620 = vadd.f32 %v2614, 1.0
    %v2621 = vadd.f32 %v2616, 1.0
    %v2622 = vadd.f32 %v2618, 1.0
    %v2623 = vrcp.pop %v2619
    %v2624 = vmul.f32 1.0, %v2623
    %v2625 = vrcp.pop %v2620
    %v2626 = vmul.f32 1.0, %v2625
    %v2627 = vrcp.pop %v2621
    %v2628 = vmul.f32 1.0, %v2627
    %v2629 = vrcp.pop %v2622
    %v2630 = vmul.f32 1.0, %v2629
    %v2631 = vmul.f32 %v2624, 2.0
    %v2632 = vmul.f32 %v2626, 2.0
    %v2633 = vmul.f32 %v2628, 2.0
    %v2634 = vmul.f32 %v2630, 2.0
    %v2635 = vsub.f32 %v2631, 1.0
    %v2636 = vsub.f32 %v2632, 1.0
    %v2637 = vsub.f32 %v2633, 1.0
    %v2638 = vsub.f32 %v2634, 1.0
    %v2639 = vsel %vm79, %v2635, %v2624
    %v2640 = vsel %vm80, %v2636, %v2626
    %v2641 = vsel %vm79, %v2637, %v2628
    %v2642 = vsel %vm80, %v2638, %v2630
    %v2643 = vmul.f32 %v2639, %v2495
    %v2644 = vmul.f32 %v2641, %v2496
    %v2645 = vmul.f32 %v2639, %v2640
    %v2646 = vmul.f32 %v2641, %v2642
    %2649 = vrot.lane.b32.xlu0 %v2645, 64
    %v2650 = vpop.permute.xlu0 %2649
    %2651 = vrot.lane.b32.xlu0 %v2646, 64
    %v2652 = vpop.permute.xlu0 %2651
    %v2655 = vadd.f32 %v2643, %v2650
    %v2656 = vadd.f32 %v2644, %v2652
    %v2657 = vtanh.pop %v2655
    %v2658 = vtanh.pop %v2656
    %v2659 = vmul.f32 %v2640, %v2657
    %v2660 = vmul.f32 %v2642, %v2658
    %v2661 = vadd.f32 %v2501, %v2659
    %v2662 = vadd.f32 %v2502, %v2660
    %v2663 = vld [vmem:[#allocation2 + $0x80] sm:$0xff]
    %v2664 = vld [vmem:[#allocation2 + $0x88] sm:$0xff]
    %v2665 = vpack.c.bf16 %v2659, %v2659
    %2667 = vrot.lane.b32.xlu0 %v2665, 64
    %v2668 = vpop.permute.xlu0 %2667
    %v2670 = vsel %vm355, %v2668, 0
    %2672 = vmatprep.subr.bf16.mxu0 %v1984
    %2673 = vmatpush1.bf16.msra.mxu0 %v1983
    %2674 = vmatprep.subr.bf16.mxu0 %v1986
    %2675 = vmatpush1.bf16.msra.mxu0 %v1985
    %2676 = vmatprep.subr.bf16.mxu0 %v1988
    %2677 = vmatpush1.bf16.msra.mxu0 %v1987
    %2678 = vmatprep.subr.bf16.mxu0 %v1990
    %2679 = vmatpush1.bf16.msra.mxu0 %v1989
    %2680 = vmatprep.subr.bf16.mxu0 0
    %2681 = vmatpush1.bf16.msra.mxu0 0
    %2682 = vmatprep.subr.bf16.mxu0 0
    %2683 = vmatpush1.bf16.msra.mxu0 0
    %2684 = vmatprep.subr.bf16.mxu0 0
    %2685 = vmatpush1.bf16.msra.mxu0 0
    %2686 = vmatprep.subr.bf16.mxu0 0
    %2687 = vmatpush1.bf16.msra.mxu0 0
    %2688 = vmatprep.subr.bf16.mxu0 0
    %2689 = vmatpush1.bf16.msra.mxu0 0
    %2690 = vmatprep.subr.bf16.mxu0 0
    %2691 = vmatpush1.bf16.msra.mxu0 0
    %2692 = vmatprep.subr.bf16.mxu0 0
    %2693 = vmatpush1.bf16.msra.mxu0 0
    %2694 = vmatprep.subr.bf16.mxu0 0
    %2695 = vmatpush1.bf16.msra.mxu0 0
    %2696 = vmatprep.subr.bf16.mxu0 0
    %2697 = vmatpush1.bf16.msra.mxu0 0
    %2698 = vmatprep.subr.bf16.mxu0 0
    %2699 = vmatpush1.bf16.msra.mxu0 0
    %2700 = vmatprep.subr.bf16.mxu0 0
    %2701 = vmatpush1.bf16.msra.mxu0 0
    %2702 = vmatprep.subr.bf16.mxu0 0
    %2703 = vmatpush1.bf16.msra.mxu0 0
    %2704 = vmatprep.mubr.bf16.mxu0 0
    %2705 = vmatmul.mubr.bf16.gmra.mrb[0].mxu0 %v2670
    %v2706 = vpop.f32.mrb[0].mxu0
    %v2707 = vadd.f32 0.0, %v2706
    %v2708 = vpop.f32.mrb[0].mxu0
    %v2709 = vadd.f32 0.0, %v2708
    %v2710 = vpop.f32.mrb[0].mxu0
    %v2711 = vpop.f32.mrb[0].mxu0
    %2712 = vdwg.mxu0
    %v2713 = vadd.f32 %v2663, %v2707
    %v2714 = vadd.f32 %v2664, %v2709
    %v2715 = vld [vmem:[#allocation2 + $0x30] sm:$0xff]
    %v2716 = vld [vmem:[#allocation2 + $0x38] sm:$0xff]
    %v2717 = vpack.c.bf16 %v2660, %v2660
    %2719 = vrot.lane.b32.xlu0 %v2717, 64
    %v2720 = vpop.permute.xlu0 %2719
    %v2722 = vsel %vm355, %v2720, 0
    %2724 = vmatprep.subr.bf16.mxu0 %v2069
    %2725 = vmatpush1.bf16.msra.mxu0 %v2068
    %2726 = vmatprep.subr.bf16.mxu0 %v2071
    %2727 = vmatpush1.bf16.msra.mxu0 %v2070
    %2728 = vmatprep.subr.bf16.mxu0 %v2073
    %2729 = vmatpush1.bf16.msra.mxu0 %v2072
    %2730 = vmatprep.subr.bf16.mxu0 %v2075
    %2731 = vmatpush1.bf16.msra.mxu0 %v2074
    %2732 = vmatprep.subr.bf16.mxu0 0
    %2733 = vmatpush1.bf16.msra.mxu0 0
    %2734 = vmatprep.subr.bf16.mxu0 0
    %2735 = vmatpush1.bf16.msra.mxu0 0
    %2736 = vmatprep.subr.bf16.mxu0 0
    %2737 = vmatpush1.bf16.msra.mxu0 0
    %2738 = vmatprep.subr.bf16.mxu0 0
    %2739 = vmatpush1.bf16.msra.mxu0 0
    %2740 = vmatprep.subr.bf16.mxu0 0
    %2741 = vmatpush1.bf16.msra.mxu0 0
    %2742 = vmatprep.subr.bf16.mxu0 0
    %2743 = vmatpush1.bf16.msra.mxu0 0
    %2744 = vmatprep.subr.bf16.mxu0 0
    %2745 = vmatpush1.bf16.msra.mxu0 0
    %2746 = vmatprep.subr.bf16.mxu0 0
    %2747 = vmatpush1.bf16.msra.mxu0 0
    %2748 = vmatprep.subr.bf16.mxu0 0
    %2749 = vmatpush1.bf16.msra.mxu0 0
    %2750 = vmatprep.subr.bf16.mxu0 0
    %2751 = vmatpush1.bf16.msra.mxu0 0
    %2752 = vmatprep.subr.bf16.mxu0 0
    %2753 = vmatpush1.bf16.msra.mxu0 0
    %2754 = vmatprep.subr.bf16.mxu0 0
    %2755 = vmatpush1.bf16.msra.mxu0 0
    %2756 = vmatprep.mubr.bf16.mxu0 0
    %2757 = vmatmul.mubr.bf16.gmra.mrb[0].mxu0 %v2722
    %v2758 = vpop.f32.mrb[0].mxu0
    %v2759 = vadd.f32 0.0, %v2758
    %v2760 = vpop.f32.mrb[0].mxu0
    %v2761 = vadd.f32 0.0, %v2760
    %v2762 = vpop.f32.mrb[0].mxu0
    %v2763 = vpop.f32.mrb[0].mxu0
    %2764 = vdwg.mxu0
    %v2765 = vadd.f32 %v2715, %v2759
    %v2766 = vadd.f32 %v2716, %v2761
    %v2767 = vxor.u32 %v2713, 2147483648
    %v2768 = vxor.u32 %v2714, 2147483648
    %v2769 = vxor.u32 %v2765, 2147483648
    %v2770 = vxor.u32 %v2766, 2147483648
    %v2771 = vmul.f32 %v2767, 1.442695
    %v2772 = vpow.pop %v2771
    %v2773 = vmul.f32 %v2768, 1.442695
    %v2774 = vpow.pop %v2773
    %v2775 = vmul.f32 %v2769, 1.442695
    %v2776 = vpow.pop %v2775
    %v2777 = vmul.f32 %v2770, 1.442695
    %v2778 = vpow.pop %v2777
    %v2779 = vadd.f32 %v2772, 1.0
    %v2780 = vadd.f32 %v2774, 1.0
    %v2781 = vadd.f32 %v2776, 1.0
    %v2782 = vadd.f32 %v2778, 1.0
    %v2783 = vrcp.pop %v2779
    %v2784 = vmul.f32 1.0, %v2783
    %v2785 = vrcp.pop %v2780
    %v2786 = vmul.f32 1.0, %v2785
    %v2787 = vrcp.pop %v2781
    %v2788 = vmul.f32 1.0, %v2787
    %v2789 = vrcp.pop %v2782
    %v2790 = vmul.f32 1.0, %v2789
    %v2791 = vmul.f32 %v2784, 2.0
    %v2792 = vmul.f32 %v2786, 2.0
    %v2793 = vmul.f32 %v2788, 2.0
    %v2794 = vmul.f32 %v2790, 2.0
    %v2795 = vsub.f32 %v2791, 1.0
    %v2796 = vsub.f32 %v2792, 1.0
    %v2797 = vsub.f32 %v2793, 1.0
    %v2798 = vsub.f32 %v2794, 1.0
    %v2799 = vsel %vm79, %v2795, %v2784
    %v2800 = vsel %vm80, %v2796, %v2786
    %v2801 = vsel %vm79, %v2797, %v2788
    %v2802 = vsel %vm80, %v2798, %v2790
    %v2803 = vmul.f32 %v2799, %v2655
    %v2804 = vmul.f32 %v2801, %v2656
    %v2805 = vmul.f32 %v2799, %v2800
    %v2806 = vmul.f32 %v2801, %v2802
    %2809 = vrot.lane.b32.xlu0 %v2805, 64
    %v2810 = vpop.permute.xlu0 %2809
    %2811 = vrot.lane.b32.xlu0 %v2806, 64
    %v2812 = vpop.permute.xlu0 %2811
    %v2815 = vadd.f32 %v2803, %v2810
    %v2816 = vadd.f32 %v2804, %v2812
    %v2817 = vtanh.pop %v2815
    %v2818 = vtanh.pop %v2816
    %v2819 = vmul.f32 %v2800, %v2817
    %v2820 = vmul.f32 %v2802, %v2818
    %v2821 = vadd.f32 %v2661, %v2819
    %v2822 = vadd.f32 %v2662, %v2820
    %v2823 = vld [vmem:[#allocation2 + $0xa0] sm:$0xff]
    %v2824 = vld [vmem:[#allocation2 + $0xa8] sm:$0xff]
    %v2825 = vpack.c.bf16 %v2819, %v2819
    %2827 = vrot.lane.b32.xlu0 %v2825, 64
    %v2828 = vpop.permute.xlu0 %2827
    %v2830 = vsel %vm355, %v2828, 0
    %2832 = vmatprep.subr.bf16.mxu0 %v1984
    %2833 = vmatpush1.bf16.msra.mxu0 %v1983
    %2834 = vmatprep.subr.bf16.mxu0 %v1986
    %2835 = vmatpush1.bf16.msra.mxu0 %v1985
    %2836 = vmatprep.subr.bf16.mxu0 %v1988
    %2837 = vmatpush1.bf16.msra.mxu0 %v1987
    %2838 = vmatprep.subr.bf16.mxu0 %v1990
    %2839 = vmatpush1.bf16.msra.mxu0 %v1989
    %2840 = vmatprep.subr.bf16.mxu0 0
    %2841 = vmatpush1.bf16.msra.mxu0 0
    %2842 = vmatprep.subr.bf16.mxu0 0
    %2843 = vmatpush1.bf16.msra.mxu0 0
    %2844 = vmatprep.subr.bf16.mxu0 0
    %2845 = vmatpush1.bf16.msra.mxu0 0
    %2846 = vmatprep.subr.bf16.mxu0 0
    %2847 = vmatpush1.bf16.msra.mxu0 0
    %2848 = vmatprep.subr.bf16.mxu0 0
    %2849 = vmatpush1.bf16.msra.mxu0 0
    %2850 = vmatprep.subr.bf16.mxu0 0
    %2851 = vmatpush1.bf16.msra.mxu0 0
    %2852 = vmatprep.subr.bf16.mxu0 0
    %2853 = vmatpush1.bf16.msra.mxu0 0
    %2854 = vmatprep.subr.bf16.mxu0 0
    %2855 = vmatpush1.bf16.msra.mxu0 0
    %2856 = vmatprep.subr.bf16.mxu0 0
    %2857 = vmatpush1.bf16.msra.mxu0 0
    %2858 = vmatprep.subr.bf16.mxu0 0
    %2859 = vmatpush1.bf16.msra.mxu0 0
    %2860 = vmatprep.subr.bf16.mxu0 0
    %2861 = vmatpush1.bf16.msra.mxu0 0
    %2862 = vmatprep.subr.bf16.mxu0 0
    %2863 = vmatpush1.bf16.msra.mxu0 0
    %2864 = vmatprep.mubr.bf16.mxu0 0
    %2865 = vmatmul.mubr.bf16.gmra.mrb[0].mxu0 %v2830
    %v2866 = vpop.f32.mrb[0].mxu0
    %v2867 = vadd.f32 0.0, %v2866
    %v2868 = vpop.f32.mrb[0].mxu0
    %v2869 = vadd.f32 0.0, %v2868
    %v2870 = vpop.f32.mrb[0].mxu0
    %v2871 = vpop.f32.mrb[0].mxu0
    %2872 = vdwg.mxu0
    %v2873 = vadd.f32 %v2823, %v2867
    %v2874 = vadd.f32 %v2824, %v2869
    %v2875 = vld [vmem:[#allocation2 + $0x10] sm:$0xff]
    %v2876 = vld [vmem:[#allocation2 + $0x18] sm:$0xff]
    %v2877 = vpack.c.bf16 %v2820, %v2820
    %2879 = vrot.lane.b32.xlu0 %v2877, 64
    %v2880 = vpop.permute.xlu0 %2879
    %v2882 = vsel %vm355, %v2880, 0
    %2884 = vmatprep.subr.bf16.mxu0 %v2069
    %2885 = vmatpush1.bf16.msra.mxu0 %v2068
    %2886 = vmatprep.subr.bf16.mxu0 %v2071
    %2887 = vmatpush1.bf16.msra.mxu0 %v2070
    %2888 = vmatprep.subr.bf16.mxu0 %v2073
    %2889 = vmatpush1.bf16.msra.mxu0 %v2072
    %2890 = vmatprep.subr.bf16.mxu0 %v2075
    %2891 = vmatpush1.bf16.msra.mxu0 %v2074
    %2892 = vmatprep.subr.bf16.mxu0 0
    %2893 = vmatpush1.bf16.msra.mxu0 0
    %2894 = vmatprep.subr.bf16.mxu0 0
    %2895 = vmatpush1.bf16.msra.mxu0 0
    %2896 = vmatprep.subr.bf16.mxu0 0
    %2897 = vmatpush1.bf16.msra.mxu0 0
    %2898 = vmatprep.subr.bf16.mxu0 0
    %2899 = vmatpush1.bf16.msra.mxu0 0
    %2900 = vmatprep.subr.bf16.mxu0 0
    %2901 = vmatpush1.bf16.msra.mxu0 0
    %2902 = vmatprep.subr.bf16.mxu0 0
    %2903 = vmatpush1.bf16.msra.mxu0 0
    %2904 = vmatprep.subr.bf16.mxu0 0
    %2905 = vmatpush1.bf16.msra.mxu0 0
    %2906 = vmatprep.subr.bf16.mxu0 0
    %2907 = vmatpush1.bf16.msra.mxu0 0
    %2908 = vmatprep.subr.bf16.mxu0 0
    %2909 = vmatpush1.bf16.msra.mxu0 0
    %2910 = vmatprep.subr.bf16.mxu0 0
    %2911 = vmatpush1.bf16.msra.mxu0 0
    %2912 = vmatprep.subr.bf16.mxu0 0
    %2913 = vmatpush1.bf16.msra.mxu0 0
    %2914 = vmatprep.subr.bf16.mxu0 0
    %2915 = vmatpush1.bf16.msra.mxu0 0
    %2916 = vmatprep.mubr.bf16.mxu0 0
    %2917 = vmatmul.mubr.bf16.gmra.mrb[0].mxu0 %v2882
    %v2918 = vpop.f32.mrb[0].mxu0
    %v2919 = vadd.f32 0.0, %v2918
    %v2920 = vpop.f32.mrb[0].mxu0
    %v2921 = vadd.f32 0.0, %v2920
    %v2922 = vpop.f32.mrb[0].mxu0
    %v2923 = vpop.f32.mrb[0].mxu0
    %2924 = vdwg.mxu0
    %v2925 = vadd.f32 %v2875, %v2919
    %v2926 = vadd.f32 %v2876, %v2921
    %v2927 = vxor.u32 %v2873, 2147483648
    %v2928 = vxor.u32 %v2874, 2147483648
    %v2929 = vxor.u32 %v2925, 2147483648
    %v2930 = vxor.u32 %v2926, 2147483648
    %v2931 = vmul.f32 %v2927, 1.442695
    %v2932 = vpow.pop %v2931
    %v2933 = vmul.f32 %v2928, 1.442695
    %v2934 = vpow.pop %v2933
    %v2935 = vmul.f32 %v2929, 1.442695
    %v2936 = vpow.pop %v2935
    %v2937 = vmul.f32 %v2930, 1.442695
    %v2938 = vpow.pop %v2937
    %v2939 = vadd.f32 %v2932, 1.0
    %v2940 = vadd.f32 %v2934, 1.0
    %v2941 = vadd.f32 %v2936, 1.0
    %v2942 = vadd.f32 %v2938, 1.0
    %v2943 = vrcp.pop %v2939
    %v2944 = vmul.f32 1.0, %v2943
    %v2945 = vrcp.pop %v2940
    %v2946 = vmul.f32 1.0, %v2945
    %v2947 = vrcp.pop %v2941
    %v2948 = vmul.f32 1.0, %v2947
    %v2949 = vrcp.pop %v2942
    %v2950 = vmul.f32 1.0, %v2949
    %v2951 = vmul.f32 %v2944, 2.0
    %v2952 = vmul.f32 %v2946, 2.0
    %v2953 = vmul.f32 %v2948, 2.0
    %v2954 = vmul.f32 %v2950, 2.0
    %v2955 = vsub.f32 %v2951, 1.0
    %v2956 = vsub.f32 %v2952, 1.0
    %v2957 = vsub.f32 %v2953, 1.0
    %v2958 = vsub.f32 %v2954, 1.0
    %v2959 = vsel %vm79, %v2955, %v2944
    %v2960 = vsel %vm80, %v2956, %v2946
    %v2961 = vsel %vm79, %v2957, %v2948
    %v2962 = vsel %vm80, %v2958, %v2950
    %v2963 = vmul.f32 %v2959, %v2815
    %v2964 = vmul.f32 %v2961, %v2816
    %v2965 = vmul.f32 %v2959, %v2960
    %v2966 = vmul.f32 %v2961, %v2962
    %2969 = vrot.lane.b32.xlu0 %v2965, 64
    %v2970 = vpop.permute.xlu0 %2969
    %2971 = vrot.lane.b32.xlu0 %v2966, 64
    %v2972 = vpop.permute.xlu0 %2971
    %v2975 = vadd.f32 %v2963, %v2970
    %v2976 = vadd.f32 %v2964, %v2972
    %v2977 = vtanh.pop %v2975
    %v2978 = vtanh.pop %v2976
    %v2979 = vmul.f32 %v2960, %v2977
    %v2980 = vmul.f32 %v2962, %v2978
    %v2981 = vadd.f32 %v2821, %v2979
    %v2982 = vadd.f32 %v2822, %v2980
    %v2983 = vld [vmem:[%s7] sm:$0xf]
    %v2984 = vld [vmem:[%s7 + $0x4] sm:$0xf]
    %v2985 = vld [vmem:[%s7 + $0x8] sm:$0xf]
    %v2986 = vld [vmem:[%s7 + $0xc] sm:$0xf]
    %v2987 = vld [vmem:[%s7 + $0x10] sm:$0xf]
    %v2988 = vld [vmem:[%s7 + $0x14] sm:$0xf]
    %v2989 = vld [vmem:[%s7 + $0x18] sm:$0xf]
    %v2990 = vld [vmem:[%s7 + $0x1c] sm:$0xf]
    %v2991 = vld [vmem:[%s7 + $0x20] sm:$0xf]
    %v2992 = vld [vmem:[%s7 + $0x24] sm:$0xf]
    %v2993 = vld [vmem:[%s7 + $0x28] sm:$0xf]
    %v2994 = vld [vmem:[%s7 + $0x2c] sm:$0xf]
    %v2995 = vld [vmem:[%s7 + $0x30] sm:$0xf]
    %v2996 = vld [vmem:[%s7 + $0x34] sm:$0xf]
    %v2997 = vld [vmem:[%s7 + $0x38] sm:$0xf]
    %v2998 = vld [vmem:[%s7 + $0x3c] sm:$0xf]
    %v2999 = vpack.c.bf16 %v2981, %v2981
    %v3000 = vpack.c.bf16 %v2982, %v2982
    %3002 = vrot.lane.b32.xlu0 %v3000, 64
    %v3003 = vpop.permute.xlu0 %3002
    %v3012 = vunpack.c.l.b16 %v2991
    %v3013 = vunpack.c.l.b16 %v2992
    %v3014 = vunpack.c.l.b16 %v2993
    %v3015 = vunpack.c.l.b16 %v2994
    %v3016 = vunpack.c.l.b16 %v2995
    %v3017 = vunpack.c.l.b16 %v2996
    %v3018 = vunpack.c.l.b16 %v2997
    %v3019 = vunpack.c.l.b16 %v2998
    %v3020 = vpack.c.b16 %v3013, %v3012
    %v3021 = vpack.c.b16 %v3015, %v3014
    %v3022 = vpack.c.b16 %v3017, %v3016
    %v3023 = vpack.c.b16 %v3019, %v3018
    %v3029 = vsel %vm355, %v3003, 0
    %3031 = vmatprep.subr.bf16.mxu0 0
    %3032 = vmatpush1.bf16.msra.mxu0 %v3020
    %3033 = vmatprep.subr.bf16.mxu0 0
    %3034 = vmatpush1.bf16.msra.mxu0 %v3021
    %3035 = vmatprep.subr.bf16.mxu0 0
    %3036 = vmatpush1.bf16.msra.mxu0 %v3022
    %3037 = vmatprep.subr.bf16.mxu0 0
    %3038 = vmatpush1.bf16.msra.mxu0 %v3023
    %3039 = vmatprep.subr.bf16.mxu0 0
    %3040 = vmatpush1.bf16.msra.mxu0 0
    %3041 = vmatprep.subr.bf16.mxu0 0
    %3042 = vmatpush1.bf16.msra.mxu0 0
    %3043 = vmatprep.subr.bf16.mxu0 0
    %3044 = vmatpush1.bf16.msra.mxu0 0
    %3045 = vmatprep.subr.bf16.mxu0 0
    %3046 = vmatpush1.bf16.msra.mxu0 0
    %3047 = vmatprep.subr.bf16.mxu0 0
    %3048 = vmatpush1.bf16.msra.mxu0 0
    %3049 = vmatprep.subr.bf16.mxu0 0
    %3050 = vmatpush1.bf16.msra.mxu0 0
    %3051 = vmatprep.subr.bf16.mxu0 0
    %3052 = vmatpush1.bf16.msra.mxu0 0
    %3053 = vmatprep.subr.bf16.mxu0 0
    %3054 = vmatpush1.bf16.msra.mxu0 0
    %3055 = vmatprep.subr.bf16.mxu0 0
    %3056 = vmatpush1.bf16.msra.mxu0 0
    %3057 = vmatprep.subr.bf16.mxu0 0
    %3058 = vmatpush1.bf16.msra.mxu0 0
    %3059 = vmatprep.subr.bf16.mxu0 0
    %3060 = vmatpush1.bf16.msra.mxu0 0
    %3061 = vmatprep.subr.bf16.mxu0 0
    %3062 = vmatpush1.bf16.msra.mxu0 0
    %3063 = vmatprep.mubr.bf16.mxu0 0
    %3064 = vmatmul.mubr.bf16.gmra.mrb[0].mxu0 %v3029
    %v3065 = vpop.f32.mrb[0].mxu0
    %v3066 = vadd.f32 0.0, %v3065
    %v3067 = vpop.f32.mrb[0].mxu0
    %v3068 = vpop.f32.mrb[0].mxu0
    %v3069 = vpop.f32.mrb[0].mxu0
    %3070 = vdwg.mxu0
    %3072 = vrot.lane.b32.xlu0 %v2999, 64
    %v3073 = vpop.permute.xlu0 %3072
    %v3082 = vunpack.c.l.b16 %v2983
    %v3083 = vunpack.c.l.b16 %v2984
    %v3084 = vunpack.c.l.b16 %v2985
    %v3085 = vunpack.c.l.b16 %v2986
    %v3086 = vunpack.c.l.b16 %v2987
    %v3087 = vunpack.c.l.b16 %v2988
    %v3088 = vunpack.c.l.b16 %v2989
    %v3089 = vunpack.c.l.b16 %v2990
    %v3090 = vpack.c.b16 %v3083, %v3082
    %v3091 = vpack.c.b16 %v3085, %v3084
    %v3092 = vpack.c.b16 %v3087, %v3086
    %v3093 = vpack.c.b16 %v3089, %v3088
    %v3099 = vsel %vm355, %v3073, 0
    %3101 = vmatprep.subr.bf16.mxu0 0
    %3102 = vmatpush1.bf16.msra.mxu0 %v3090
    %3103 = vmatprep.subr.bf16.mxu0 0
    %3104 = vmatpush1.bf16.msra.mxu0 %v3091
    %3105 = vmatprep.subr.bf16.mxu0 0
    %3106 = vmatpush1.bf16.msra.mxu0 %v3092
    %3107 = vmatprep.subr.bf16.mxu0 0
    %3108 = vmatpush1.bf16.msra.mxu0 %v3093
    %3109 = vmatprep.subr.bf16.mxu0 0
    %3110 = vmatpush1.bf16.msra.mxu0 0
    %3111 = vmatprep.subr.bf16.mxu0 0
    %3112 = vmatpush1.bf16.msra.mxu0 0
    %3113 = vmatprep.subr.bf16.mxu0 0
    %3114 = vmatpush1.bf16.msra.mxu0 0
    %3115 = vmatprep.subr.bf16.mxu0 0
    %3116 = vmatpush1.bf16.msra.mxu0 0
    %3117 = vmatprep.subr.bf16.mxu0 0
    %3118 = vmatpush1.bf16.msra.mxu0 0
    %3119 = vmatprep.subr.bf16.mxu0 0
    %3120 = vmatpush1.bf16.msra.mxu0 0
    %3121 = vmatprep.subr.bf16.mxu0 0
    %3122 = vmatpush1.bf16.msra.mxu0 0
    %3123 = vmatprep.subr.bf16.mxu0 0
    %3124 = vmatpush1.bf16.msra.mxu0 0
    %3125 = vmatprep.subr.bf16.mxu0 0
    %3126 = vmatpush1.bf16.msra.mxu0 0
    %3127 = vmatprep.subr.bf16.mxu0 0
    %3128 = vmatpush1.bf16.msra.mxu0 0
    %3129 = vmatprep.subr.bf16.mxu0 0
    %3130 = vmatpush1.bf16.msra.mxu0 0
    %3131 = vmatprep.subr.bf16.mxu0 0
    %3132 = vmatpush1.bf16.msra.mxu0 0
    %3133 = vmatprep.mubr.bf16.mxu0 0
    %3134 = vmatmul.mubr.bf16.gmra.mrb[0].mxu0 %v3099
    %v3135 = vpop.f32.mrb[0].mxu0
    %v3136 = vadd.f32 %v3066, %v3135
    %v3137 = vpop.f32.mrb[0].mxu0
    %v3138 = vpop.f32.mrb[0].mxu0
    %v3139 = vpop.f32.mrb[0].mxu0
    %3140 = vdwg.mxu0
    %v3141 = vld [vmem:[%s8] sm:$0x1]
    %v3142 = vmul.f32 %v3141, 6.0
    %v3144 = vlaneseq
    %v3145 = vshrl.u32 %v3144, 7
    %v3146 = vsub.s32 0, %v3145
    %v3147 = vrot.slane %v3142, %v3146
    %v3149 = vadd.f32 %v3136, %v3147
    %v3150 = vrcp.pop 60.0
    %v3151 = vmul.f32 %v3149, %v3150
    %vm3152 = vcmask 31744
    %3153 = vst.msk [vmem:[%s9] sm:$0xff] %vm3152, %v3151
    // Predicated region
    $region50: #{tpu_custom_call.1} parent=1 // pred_check
      _
    $region51: #{tpu_custom_call.1} parent=1 // pred_check_branch
      %3155 = sbr.rel (0) target = $region53
    $region52: #{tpu_custom_call.1} parent=1 // pred_region
      _
    $region53: #{tpu_custom_call.1} parent=1 // pred_fallthru
      _
    // Predicated region
    $region54: #{tpu_custom_call.1} parent=1 // pred_check
      _
    $region55: #{tpu_custom_call.1} parent=1 // pred_check_branch
      %3157 = sbr.rel (0) target = $region57
    $region56: #{tpu_custom_call.1} parent=1 // pred_region
      _
    $region57: #{tpu_custom_call.1} parent=1 // pred_fallthru
      _
    %3158 = vsyncpa [#allocation6], 1
    %3159 = vsyncpa [#allocation8], 1

</llo_original>
